<compile_context>
chip_gen: v6e
topology: v6e:2x2x1
jax: 0.10.0
libtpu: 0.0.40
codegen_flags: <defaults>
</compile_context>

<pallas_src>
import functools

import jax
import jax.numpy as jnp
from jax.experimental import pallas as pl
from jax.experimental.pallas import tpu as pltpu

EPS = 1e-5                       # nn.BatchNorm2d default eps
VMEM_LIMIT = 32 * 1024 * 1024    # safe on v5e / v6e / v7x
MM_TILE = 512                    # target rows per matmul tile


def _round_up(x, m):
    return (x + m - 1) // m * m


def _choose_tile(m, target=MM_TILE):
    """Row tile for phase-1 matmuls (rows get zero-padded up to a multiple)."""
    if m >= target:
        return target
    return max(8, _round_up(m, 8))


def _choose_div_tile(rows, target=MM_TILE):
    """Largest row tile <= target that divides `rows` exactly."""
    if rows <= target:
        return rows
    for t in range(target, 7, -8):
        if rows % t == 0:
            return t
    return 8


# ----------------------------- kernels --------------------------------------


def _mm_stats_kernel(a_ref, w_ref, y_ref, st_ref):
    """y = a @ w (bf16 in, f32 acc). Emits per-tile column sum / sum-of-squares
    (rows 0 / 1 of an 8-row stats block) for the two-phase BatchNorm."""
    y = jnp.dot(a_ref[0], w_ref[0], preferred_element_type=jnp.float32)
    y_ref[0] = y
    st_ref[0, 0:1, :] = jnp.sum(y, axis=0, keepdims=True)
    st_ref[0, 1:2, :] = jnp.sum(y * y, axis=0, keepdims=True)
    st_ref[0, 2:8, :] = jnp.zeros((6, y.shape[1]), jnp.float32)


def _mm_bias_tanh_kernel(a_ref, w_ref, b_ref, o_ref):
    """Final layer: y = a @ w + b, tanh(y)*0.5 + 0.5 (lane-padded C_out)."""
    y = jnp.dot(a_ref[0], w_ref[0], preferred_element_type=jnp.float32)
    y = y + b_ref[...]
    o_ref[0] = jnp.tanh(y) * 0.5 + 0.5


def _scale_shift_relu_kernel(y_ref, a_ref, c_ref, o_ref):
    """BatchNorm (folded to scale/shift) + ReLU, cast to bf16 for next matmul."""
    y = y_ref[...]
    o_ref[...] = jnp.maximum(y * a_ref[...] + c_ref[...], 0.0).astype(o_ref.dtype)


# --------------------------- pallas wrappers ---------------------------------


def _matmul_stats(pat, wts, tm):
    """pat: (P, M_pad, Kd) bf16, wts: (P, Kd, C) bf16 ->
    y (P, M_pad, C) f32, stats (P, 8*n_tiles, C) f32 (colsum row 0, colsumsq row 1)."""
    p, m_pad, kd = pat.shape
    c = wts.shape[-1]
    n_mt = m_pad // tm
    y, st = pl.pallas_call(
        _mm_stats_kernel,
        grid=(p, n_mt),
        in_specs=[
            pl.BlockSpec((1, tm, kd), lambda r, i: (r, i, 0)),
            pl.BlockSpec((1, kd, c), lambda r, i: (r, 0, 0)),
        ],
        out_specs=[
            pl.BlockSpec((1, tm, c), lambda r, i: (r, i, 0)),
            pl.BlockSpec((1, 8, c), lambda r, i: (r, i, 0)),
        ],
        out_shape=[
            jax.ShapeDtypeStruct((p, m_pad, c), jnp.float32),
            jax.ShapeDtypeStruct((p, 8 * n_mt, c), jnp.float32),
        ],
        compiler_params=pltpu.CompilerParams(
            dimension_semantics=("parallel", "parallel"),
            vmem_limit_bytes=VMEM_LIMIT),
    )(pat, wts)
    return y, st


def _matmul_bias_tanh(pat, wts, bias, tm):
    p, m_pad, kd = pat.shape
    c = wts.shape[-1]
    n_mt = m_pad // tm
    return pl.pallas_call(
        _mm_bias_tanh_kernel,
        grid=(p, n_mt),
        in_specs=[
            pl.BlockSpec((1, tm, kd), lambda r, i: (r, i, 0)),
            pl.BlockSpec((1, kd, c), lambda r, i: (r, 0, 0)),
            pl.BlockSpec((1, c), lambda r, i: (0, 0)),
        ],
        out_specs=pl.BlockSpec((1, tm, c), lambda r, i: (r, i, 0)),
        out_shape=jax.ShapeDtypeStruct((p, m_pad, c), jnp.float32),
        compiler_params=pltpu.CompilerParams(
            dimension_semantics=("parallel", "parallel"),
            vmem_limit_bytes=VMEM_LIMIT),
    )(pat, wts, bias.reshape(1, c))


def _scale_shift_relu(y2d, scale, shift):
    rows, c = y2d.shape
    tm = _choose_div_tile(rows)
    return pl.pallas_call(
        _scale_shift_relu_kernel,
        grid=(rows // tm,),
        in_specs=[
            pl.BlockSpec((tm, c), lambda i: (i, 0)),
            pl.BlockSpec((1, c), lambda i: (0, 0)),
            pl.BlockSpec((1, c), lambda i: (0, 0)),
        ],
        out_specs=pl.BlockSpec((tm, c), lambda i: (i, 0)),
        out_shape=jax.ShapeDtypeStruct((rows, c), jnp.bfloat16),
        compiler_params=pltpu.CompilerParams(
            dimension_semantics=("parallel",),
            vmem_limit_bytes=VMEM_LIMIT),
    )(y2d, scale.reshape(1, c).astype(jnp.float32),
      shift.reshape(1, c).astype(jnp.float32))


# ------------------------------ layer glue -----------------------------------


def _phase_patches(x_nhwc, tm):
    """Per-output-parity 2x2 patches for a stride-2, k=4, pad=1 ConvTranspose2d.
    x: (N,H,W,C) bf16 -> (4, M_pad, 4*C) bf16 with M = N*H*W (zero row-padded)."""
    n, h, w, c = x_nhwc.shape
    m = n * h * w
    m_pad = _round_up(m, tm)
    xp = jnp.pad(x_nhwc, ((0, 0), (1, 1), (1, 1), (0, 0)))
    pats = []
    for rh in range(2):
        for rw in range(2):
            parts = [xp[:, rh + dh:rh + dh + h, rw + dw:rw + dw + w, :]
                     for dh in range(2) for dw in range(2)]
            pats.append(jnp.concatenate(parts, axis=-1).reshape(m, 4 * c))
    pat = jnp.stack(pats, axis=0)                               # (4, M, 4C)
    pat = jnp.pad(pat, ((0, 0), (0, m_pad - m), (0, 0)))
    return pat, m, m_pad


def _interleave_parities(act, n, h, w, c):
    """act: (4, N*H*W, C) with parity index rh*2+rw -> (N, 2H, 2W, C)."""
    act = act.reshape(2, 2, n, h, w, c)
    act = jnp.transpose(act, (2, 3, 0, 4, 1, 5))
    return act.reshape(n, 2 * h, 2 * w, c)


def _deconv1_bn_relu(x2, w1m, gamma, beta):
    """Layer 1: ConvTranspose2d(z, C1, 4, 1, 0) on 1x1 input == plain matmul."""
    n = x2.shape[0]
    c16 = w1m.shape[-1]
    c1 = c16 // 16
    tm = _choose_tile(n)
    m_pad = _round_up(n, tm)
    pat = jnp.pad(x2, ((0, m_pad - n), (0, 0)))[None]           # (1, M_pad, z)
    y, st = _matmul_stats(pat, w1m[None], tm)                   # (1, M_pad, 16*C1)
    cnt = 16.0 * n
    s = jnp.sum(st[:, 0::8, :], axis=(0, 1)).reshape(16, c1).sum(axis=0)
    sq = jnp.sum(st[:, 1::8, :], axis=(0, 1)).reshape(16, c1).sum(axis=0)
    mean = s / cnt
    var = jnp.maximum(sq / cnt - mean * mean, 0.0)
    scale = gamma * jax.lax.rsqrt(var + EPS)
    shift = beta - mean * scale
    act = _scale_shift_relu(y.reshape(m_pad * 16, c1), scale, shift)
    return act.reshape(m_pad, 4, 4, c1)[:n]                     # (N,4,4,C1) bf16


def _deconv_s2_bn_relu(x_nhwc, wp, gamma, beta):
    """Stride-2 ConvTranspose2d + train-mode BatchNorm + ReLU (two-phase BN)."""
    n, h, w, _ = x_nhwc.shape
    c_out = wp.shape[-1]
    tm = _choose_tile(n * h * w)
    pat, m, m_pad = _phase_patches(x_nhwc, tm)
    y, st = _matmul_stats(pat, wp, tm)                          # (4, M_pad, C_out)
    cnt = 4.0 * m                                               # N * 2H * 2W
    s = jnp.sum(st[:, 0::8, :], axis=(0, 1))
    sq = jnp.sum(st[:, 1::8, :], axis=(0, 1))
    mean = s / cnt
    var = jnp.maximum(sq / cnt - mean * mean, 0.0)
    scale = gamma * jax.lax.rsqrt(var + EPS)
    shift = beta - mean * scale
    act = _scale_shift_relu(y.reshape(4 * m_pad, c_out), scale, shift)
    act = act.reshape(4, m_pad, c_out)[:, :m, :]
    return _interleave_parities(act, n, h, w, c_out)            # bf16


def _deconv_s2_tanh(x_nhwc, wp, bias, channels):
    """Final stride-2 ConvTranspose2d (C_out lane-padded to 128) + tanh*0.5+0.5."""
    n, h, w, _ = x_nhwc.shape
    tm = _choose_tile(n * h * w)
    pat, m, _ = _phase_patches(x_nhwc, tm)
    y = _matmul_bias_tanh(pat, wp, bias, tm)                    # (4, M_pad, 128) f32
    out = y[:, :m, :channels]
    return _interleave_parities(out, n, h, w, channels)         # (N,2H,2W,ch) f32


# --------------------------- params & forward --------------------------------


def init_generator_params(key, z_size, d=128, channels=1, std=0.02):
    """Mirrors Generator.__init__ shapes + weight_init(0, 0.02) semantics."""
    ks = jax.random.split(key, 4)

    def wt(k, cin, cout, kk=4):
        return std * jax.random.normal(k, (cin, cout, kk, kk), jnp.float32)

    c1 = d * 2
    return {
        "w1": wt(ks[0], z_size, c1), "b1": jnp.zeros((c1,), jnp.float32),
        "g1": jnp.ones((c1,), jnp.float32), "be1": jnp.zeros((c1,), jnp.float32),
        "w2": wt(ks[1], c1, c1), "b2": jnp.zeros((c1,), jnp.float32),
        "g2": jnp.ones((c1,), jnp.float32), "be2": jnp.zeros((c1,), jnp.float32),
        "w3": wt(ks[2], c1, d), "b3": jnp.zeros((d,), jnp.float32),
        "g3": jnp.ones((d,), jnp.float32), "be3": jnp.zeros((d,), jnp.float32),
        "w4": wt(ks[3], d, channels), "b4": jnp.zeros((channels,), jnp.float32),
    }


def _phase_weights(w_t):
    """Torch ConvTranspose2d weight (C_in, C_out, 4, 4) -> (4, 4*C_in, C_out)
    per-output-parity matmul weights for stride=2, pad=1.
    Parity index = rh*2 + rw; row order = (dh, dw, ci); tap kh = 3 - rh - 2*dh."""
    ws = []
    for rh in range(2):
        for rw in range(2):
            taps = [w_t[:, :, 3 - rh - 2 * dh, 3 - rw - 2 * dw]
                    for dh in range(2) for dw in range(2)]
            ws.append(jnp.concatenate(taps, axis=0))
    return jnp.stack(ws, axis=0)


def prepare_generator_params(params, channels):
    """One-time weight re-layout + bf16 cast (kept out of the traced forward).
    Conv biases b1..b3 are dropped: train-mode BN mean subtraction cancels them."""
    z = params["w1"].shape[0]
    c1 = params["w1"].shape[1]
    w1m = jnp.transpose(params["w1"], (0, 2, 3, 1)).reshape(z, 16 * c1)
    c_pad = max(128, _round_up(channels, 128))
    wp4 = _phase_weights(params["w4"])                          # (4, 4*d, channels)
    wp4 = jnp.pad(wp4, ((0, 0), (0, 0), (0, c_pad - channels)))
    b4p = jnp.pad(params["b4"], (0, c_pad - channels))
    bf = jnp.bfloat16
    return {
        "w1m": w1m.astype(bf), "g1": params["g1"], "be1": params["be1"],
        "wp2": _phase_weights(params["w2"]).astype(bf),
        "g2": params["g2"], "be2": params["be2"],
        "wp3": _phase_weights(params["w3"]).astype(bf),
        "g3": params["g3"], "be3": params["be3"],
        "wp4": wp4.astype(bf), "b4p": b4p.astype(jnp.float32),
    }


@functools.partial(jax.jit, static_argnames=("channels",))
def generator_forward(prep, x_nchw, *, channels):
    n = x_nchw.shape[0]
    x2 = x_nchw.reshape(n, -1).astype(jnp.bfloat16)                       # (N, z)
    h = _deconv1_bn_relu(x2, prep["w1m"], prep["g1"], prep["be1"])        # (N,4,4,2d)
    h = _deconv_s2_bn_relu(h, prep["wp2"], prep["g2"], prep["be2"])       # (N,8,8,2d)
    h = _deconv_s2_bn_relu(h, prep["wp3"], prep["g3"], prep["be3"])       # (N,16,16,d)
    out = _deconv_s2_tanh(h, prep["wp4"], prep["b4p"], channels)          # (N,32,32,ch)
    return jnp.transpose(out, (0, 3, 1, 2))                               # NCHW f32


# ------------------------- pure-JAX reference check --------------------------


def _ref_deconv(x, w_t, b, stride, pad):
    kk = w_t.shape[-1]
    w2 = jnp.transpose(w_t[:, :, ::-1, ::-1], (1, 0, 2, 3))
    pp = kk - 1 - pad
    y = jax.lax.conv_general_dilated(
        x, w2, window_strides=(1, 1), padding=[(pp, pp), (pp, pp)],
        lhs_dilation=(stride, stride),
        dimension_numbers=("NCHW", "OIHW", "NCHW"),
        preferred_element_type=jnp.float32)
    return y + b[None, :, None, None].astype(jnp.float32)


def reference_forward(params, x_nchw):
    bf = jnp.bfloat16

    def bn_relu(y, g, be):
        mean = jnp.mean(y, axis=(0, 2, 3), keepdims=True)
        var = jnp.mean((y - mean) ** 2, axis=(0, 2, 3), keepdims=True)
        yn = (y - mean) * jax.lax.rsqrt(var + EPS)
        yn = yn * g[None, :, None, None] + be[None, :, None, None]
        return jnp.maximum(yn, 0.0)

    h = x_nchw.astype(bf)
    h = bn_relu(_ref_deconv(h, params["w1"].astype(bf), params["b1"], 1, 0),
                params["g1"], params["be1"]).astype(bf)
    h = bn_relu(_ref_deconv(h, params["w2"].astype(bf), params["b2"], 2, 1),
                params["g2"], params["be2"]).astype(bf)
    h = bn_relu(_ref_deconv(h, params["w3"].astype(bf), params["b3"], 2, 1),
                params["g3"], params["be3"]).astype(bf)
    y = _ref_deconv(h, params["w4"].astype(bf), params["b4"], 2, 1)
    return jnp.tanh(y) * 0.5 + 0.5


if __name__ == "__main__":
    key = jax.random.PRNGKey(0)
    kx, kp = jax.random.split(key)
    N, z_size, d, channels = 2, 32, 16, 1

    params = init_generator_params(kp, z_size, d=d, channels=channels)
    prep = prepare_generator_params(params, channels)
    x = jax.random.normal(kx, (N, z_size, 1, 1), jnp.float32)

    out = generator_forward(prep, x, channels=channels)
    out = jax.block_until_ready(out)

    assert out.shape == (N, channels, 32, 32), out.shape
    assert bool(jnp.all(jnp.isfinite(out)))
    assert bool(jnp.all((out >= 0.0) & (out <= 1.0)))  # tanh*0.5+0.5 range

    ref = jax.block_until_ready(jax.jit(reference_forward)(params, x))
    err = float(jnp.max(jnp.abs(out - ref)))
    assert err < 2e-2, f"max |pallas - reference| = {err}"

    print("KERNEL_OK")
</pallas_src>

<mosaic_0001>
module attributes {stable_mosaic.version = 11 : i64} {
  func.func @_mm_stats_kernel(%arg0: i32, %arg1: i32, %arg2: memref<1x8x32xbf16, #tpu.memory_space<vmem>>, %arg3: memref<1x32x512xbf16, #tpu.memory_space<vmem>>, %arg4: memref<1x8x512xf32, #tpu.memory_space<vmem>>, %arg5: memref<1x8x512xf32, #tpu.memory_space<vmem>>) attributes {dimension_semantics = [#tpu.dimension_semantics<parallel>, #tpu.dimension_semantics<parallel>], iteration_bounds = array<i64: 1, 1>, scalar_prefetch = 0 : i64, scratch_operands = 0 : i64, tpu.core_type = #tpu.core_type<tc>, window_params = [{transform_indices = @transform_0, window_bounds = array<i64: 1, 8, 32>}, {transform_indices = @transform_1, window_bounds = array<i64: 1, 32, 512>}, {transform_indices = @transform_2, window_bounds = array<i64: 1, 8, 512>}, {transform_indices = @transform_3, window_bounds = array<i64: 1, 8, 512>}]} {
    %c0 = arith.constant 0 : index
    %c0_0 = arith.constant 0 : index
    %c0_1 = arith.constant 0 : index
    %0 = vector.load %arg2[%c0, %c0_0, %c0_1] : memref<1x8x32xbf16, #tpu.memory_space<vmem>>, vector<1x8x32xbf16>
    %1 = vector.shape_cast %0 : vector<1x8x32xbf16> to vector<8x32xbf16>
    %c0_2 = arith.constant 0 : index
    %c0_3 = arith.constant 0 : index
    %c0_4 = arith.constant 0 : index
    %2 = vector.load %arg3[%c0_2, %c0_3, %c0_4] : memref<1x32x512xbf16, #tpu.memory_space<vmem>>, vector<1x32x512xbf16>
    %3 = vector.shape_cast %2 : vector<1x32x512xbf16> to vector<32x512xbf16>
    %cst = arith.constant dense<0.000000e+00> : vector<8x512xf32>
    %4 = tpu.matmul %1, %3, %cst {dimension_numbers = #tpu.dot_dimension_numbers<[1], [0], [0], [1], [0, 0, 1, 1], [], []>} : vector<8x32xbf16>, vector<32x512xbf16>, vector<8x512xf32> -> vector<8x512xf32>
    %c0_5 = arith.constant 0 : index
    %c0_6 = arith.constant 0 : index
    %c0_7 = arith.constant 0 : index
    %5 = vector.load %arg4[%c0_5, %c0_6, %c0_7] : memref<1x8x512xf32, #tpu.memory_space<vmem>>, vector<1x8x512xf32>
    %6 = vector.shape_cast %5 : vector<1x8x512xf32> to vector<8x512xf32>
    %7 = vector.shape_cast %4 : vector<8x512xf32> to vector<1x8x512xf32>
    tpu.vector_store %arg4[%c0_5, %c0_6, %c0_7], %7 {strides = array<i32>} : memref<1x8x512xf32, #tpu.memory_space<vmem>>, vector<1x8x512xf32>,
    %cst_8 = arith.constant dense<0.000000e+00> : vector<512xf32>
    %8 = vector.multi_reduction <add>, %4, %cst_8 [0] : vector<8x512xf32> to vector<512xf32>
    %9 = vector.shape_cast %8 : vector<512xf32> to vector<1x512xf32>
    %c0_9 = arith.constant 0 : index
    %c0_10 = arith.constant 0 : index
    %c0_11 = arith.constant 0 : index
    %10 = vector.load %arg5[%c0_9, %c0_10, %c0_11] : memref<1x8x512xf32, #tpu.memory_space<vmem>>, vector<1x1x512xf32>
    %11 = vector.shape_cast %10 : vector<1x1x512xf32> to vector<1x512xf32>
    %12 = vector.shape_cast %9 : vector<1x512xf32> to vector<1x1x512xf32>
    tpu.vector_store %arg5[%c0_9, %c0_10, %c0_11], %12 {strides = array<i32>} : memref<1x8x512xf32, #tpu.memory_space<vmem>>, vector<1x1x512xf32>,
    %13 = arith.mulf %4, %4 : vector<8x512xf32>
    %cst_12 = arith.constant dense<0.000000e+00> : vector<512xf32>
    %14 = vector.multi_reduction <add>, %13, %cst_12 [0] : vector<8x512xf32> to vector<512xf32>
    %15 = vector.shape_cast %14 : vector<512xf32> to vector<1x512xf32>
    %c0_13 = arith.constant 0 : index
    %c1 = arith.constant 1 : index
    %c0_14 = arith.constant 0 : index
    %16 = vector.load %arg5[%c0_13, %c1, %c0_14] : memref<1x8x512xf32, #tpu.memory_space<vmem>>, vector<1x1x512xf32>
    %17 = vector.shape_cast %16 : vector<1x1x512xf32> to vector<1x512xf32>
    %18 = vector.shape_cast %15 : vector<1x512xf32> to vector<1x1x512xf32>
    tpu.vector_store %arg5[%c0_13, %c1, %c0_14], %18 {strides = array<i32>} : memref<1x8x512xf32, #tpu.memory_space<vmem>>, vector<1x1x512xf32>,
    %cst_15 = arith.constant 0.000000e+00 : f32
    %19 = vector.broadcast %cst_15 : f32 to vector<6x512xf32>
    %c0_16 = arith.constant 0 : index
    %c2 = arith.constant 2 : index
    %c0_17 = arith.constant 0 : index
    %20 = vector.load %arg5[%c0_16, %c2, %c0_17] : memref<1x8x512xf32, #tpu.memory_space<vmem>>, vector<1x6x512xf32>
    %21 = vector.shape_cast %20 : vector<1x6x512xf32> to vector<6x512xf32>
    %22 = vector.shape_cast %19 : vector<6x512xf32> to vector<1x6x512xf32>
    tpu.vector_store %arg5[%c0_16, %c2, %c0_17], %22 {strides = array<i32>} : memref<1x8x512xf32, #tpu.memory_space<vmem>>, vector<1x6x512xf32>,
    return
  }
  func.func @transform_0(%arg0: i32, %arg1: i32) -> (i32, i32, i32) {
    %c0_i32 = arith.constant 0 : i32
    %c0_i32_0 = arith.constant 0 : i32
    return %arg0, %arg1, %c0_i32 : i32, i32, i32
  }
  func.func @transform_1(%arg0: i32, %arg1: i32) -> (i32, i32, i32) {
    %c0_i32 = arith.constant 0 : i32
    %c0_i32_0 = arith.constant 0 : i32
    %c0_i32_1 = arith.constant 0 : i32
    return %arg0, %c0_i32, %c0_i32_0 : i32, i32, i32
  }
  func.func @transform_2(%arg0: i32, %arg1: i32) -> (i32, i32, i32) {
    %c0_i32 = arith.constant 0 : i32
    %c0_i32_0 = arith.constant 0 : i32
    return %arg0, %arg1, %c0_i32 : i32, i32, i32
  }
  func.func @transform_3(%arg0: i32, %arg1: i32) -> (i32, i32, i32) {
    %c0_i32 = arith.constant 0 : i32
    %c0_i32_0 = arith.constant 0 : i32
    return %arg0, %arg1, %c0_i32 : i32, i32, i32
  }
}

module attributes {stable_mosaic.version = 11 : i64} {
  func.func @_scale_shift_relu_kernel(%arg0: i32, %arg1: memref<128x32xf32, #tpu.memory_space<vmem>>, %arg2: memref<1x32xf32, #tpu.memory_space<vmem>>, %arg3: memref<1x32xf32, #tpu.memory_space<vmem>>, %arg4: memref<128x32xbf16, #tpu.memory_space<vmem>>) attributes {dimension_semantics = [#tpu.dimension_semantics<parallel>], iteration_bounds = array<i64: 1>, scalar_prefetch = 0 : i64, scratch_operands = 0 : i64, tpu.core_type = #tpu.core_type<tc>, window_params = [{transform_indices = @transform_0, window_bounds = array<i64: 128, 32>}, {pipeline_mode = #tpu.pipeline_mode<synchronous>, transform_indices = @transform_1, window_bounds = array<i64: 1, 32>}, {pipeline_mode = #tpu.pipeline_mode<synchronous>, transform_indices = @transform_2, window_bounds = array<i64: 1, 32>}, {transform_indices = @transform_3, window_bounds = array<i64: 128, 32>}]} {
    %c0 = arith.constant 0 : index
    %c0_0 = arith.constant 0 : index
    %0 = vector.load %arg1[%c0, %c0_0] : memref<128x32xf32, #tpu.memory_space<vmem>>, vector<128x32xf32>
    %c0_1 = arith.constant 0 : index
    %c0_2 = arith.constant 0 : index
    %1 = vector.load %arg2[%c0_1, %c0_2] : memref<1x32xf32, #tpu.memory_space<vmem>>, vector<1x32xf32>
    %2 = vector.broadcast %1 : vector<1x32xf32> to vector<128x32xf32>
    %3 = arith.mulf %0, %2 : vector<128x32xf32>
    %c0_3 = arith.constant 0 : index
    %c0_4 = arith.constant 0 : index
    %4 = vector.load %arg3[%c0_3, %c0_4] : memref<1x32xf32, #tpu.memory_space<vmem>>, vector<1x32xf32>
    %5 = vector.broadcast %4 : vector<1x32xf32> to vector<128x32xf32>
    %6 = arith.addf %3, %5 : vector<128x32xf32>
    %cst = arith.constant 0.000000e+00 : f32
    %7 = vector.broadcast %cst : f32 to vector<128x32xf32>
    %8 = arith.maximumf %6, %7 : vector<128x32xf32>
    %9 = arith.truncf %8 : vector<128x32xf32> to vector<128x32xbf16>
    %c0_5 = arith.constant 0 : index
    %c0_6 = arith.constant 0 : index
    %10 = vector.load %arg4[%c0_5, %c0_6] : memref<128x32xbf16, #tpu.memory_space<vmem>>, vector<128x32xbf16>
    tpu.vector_store %arg4[%c0_5, %c0_6], %9 {strides = array<i32>} : memref<128x32xbf16, #tpu.memory_space<vmem>>, vector<128x32xbf16>,
    return
  }
  func.func @transform_0(%arg0: i32) -> (i32, i32) {
    %c0_i32 = arith.constant 0 : i32
    %c0_i32_0 = arith.constant 0 : i32
    return %arg0, %c0_i32 : i32, i32
  }
  func.func @transform_1(%arg0: i32) -> (i32, i32) {
    %c0_i32 = arith.constant 0 : i32
    %c0_i32_0 = arith.constant 0 : i32
    %c0_i32_1 = arith.constant 0 : i32
    return %c0_i32, %c0_i32_0 : i32, i32
  }
  func.func @transform_2(%arg0: i32) -> (i32, i32) {
    %c0_i32 = arith.constant 0 : i32
    %c0_i32_0 = arith.constant 0 : i32
    %c0_i32_1 = arith.constant 0 : i32
    return %c0_i32, %c0_i32_0 : i32, i32
  }
  func.func @transform_3(%arg0: i32) -> (i32, i32) {
    %c0_i32 = arith.constant 0 : i32
    %c0_i32_0 = arith.constant 0 : i32
    return %arg0, %c0_i32 : i32, i32
  }
}

module attributes {stable_mosaic.version = 11 : i64} {
  func.func @_mm_stats_kernel(%arg0: i32, %arg1: i32, %arg2: memref<1x32x128xbf16, #tpu.memory_space<vmem>>, %arg3: memref<1x128x32xbf16, #tpu.memory_space<vmem>>, %arg4: memref<1x32x32xf32, #tpu.memory_space<vmem>>, %arg5: memref<1x8x32xf32, #tpu.memory_space<vmem>>) attributes {dimension_semantics = [#tpu.dimension_semantics<parallel>, #tpu.dimension_semantics<parallel>], iteration_bounds = array<i64: 4, 1>, scalar_prefetch = 0 : i64, scratch_operands = 0 : i64, tpu.core_type = #tpu.core_type<tc>, window_params = [{transform_indices = @transform_0, window_bounds = array<i64: 1, 32, 128>}, {transform_indices = @transform_1, window_bounds = array<i64: 1, 128, 32>}, {transform_indices = @transform_2, window_bounds = array<i64: 1, 32, 32>}, {transform_indices = @transform_3, window_bounds = array<i64: 1, 8, 32>}]} {
    %c0 = arith.constant 0 : index
    %c0_0 = arith.constant 0 : index
    %c0_1 = arith.constant 0 : index
    %0 = vector.load %arg2[%c0, %c0_0, %c0_1] : memref<1x32x128xbf16, #tpu.memory_space<vmem>>, vector<1x32x128xbf16>
    %1 = vector.shape_cast %0 : vector<1x32x128xbf16> to vector<32x128xbf16>
    %c0_2 = arith.constant 0 : index
    %c0_3 = arith.constant 0 : index
    %c0_4 = arith.constant 0 : index
    %2 = vector.load %arg3[%c0_2, %c0_3, %c0_4] : memref<1x128x32xbf16, #tpu.memory_space<vmem>>, vector<1x128x32xbf16>
    %3 = vector.shape_cast %2 : vector<1x128x32xbf16> to vector<128x32xbf16>
    %cst = arith.constant dense<0.000000e+00> : vector<32x32xf32>
    %4 = tpu.matmul %1, %3, %cst {dimension_numbers = #tpu.dot_dimension_numbers<[1], [0], [0], [1], [0, 0, 1, 1], [], []>} : vector<32x128xbf16>, vector<128x32xbf16>, vector<32x32xf32> -> vector<32x32xf32>
    %c0_5 = arith.constant 0 : index
    %c0_6 = arith.constant 0 : index
    %c0_7 = arith.constant 0 : index
    %5 = vector.load %arg4[%c0_5, %c0_6, %c0_7] : memref<1x32x32xf32, #tpu.memory_space<vmem>>, vector<1x32x32xf32>
    %6 = vector.shape_cast %5 : vector<1x32x32xf32> to vector<32x32xf32>
    %7 = vector.shape_cast %4 : vector<32x32xf32> to vector<1x32x32xf32>
    tpu.vector_store %arg4[%c0_5, %c0_6, %c0_7], %7 {strides = array<i32>} : memref<1x32x32xf32, #tpu.memory_space<vmem>>, vector<1x32x32xf32>,
    %cst_8 = arith.constant dense<0.000000e+00> : vector<32xf32>
    %8 = vector.multi_reduction <add>, %4, %cst_8 [0] : vector<32x32xf32> to vector<32xf32>
    %9 = vector.shape_cast %8 : vector<32xf32> to vector<1x32xf32>
    %c0_9 = arith.constant 0 : index
    %c0_10 = arith.constant 0 : index
    %c0_11 = arith.constant 0 : index
    %10 = vector.load %arg5[%c0_9, %c0_10, %c0_11] : memref<1x8x32xf32, #tpu.memory_space<vmem>>, vector<1x1x32xf32>
    %11 = vector.shape_cast %10 : vector<1x1x32xf32> to vector<1x32xf32>
    %12 = vector.shape_cast %9 : vector<1x32xf32> to vector<1x1x32xf32>
    tpu.vector_store %arg5[%c0_9, %c0_10, %c0_11], %12 {strides = array<i32>} : memref<1x8x32xf32, #tpu.memory_space<vmem>>, vector<1x1x32xf32>,
    %13 = arith.mulf %4, %4 : vector<32x32xf32>
    %cst_12 = arith.constant dense<0.000000e+00> : vector<32xf32>
    %14 = vector.multi_reduction <add>, %13, %cst_12 [0] : vector<32x32xf32> to vector<32xf32>
    %15 = vector.shape_cast %14 : vector<32xf32> to vector<1x32xf32>
    %c0_13 = arith.constant 0 : index
    %c1 = arith.constant 1 : index
    %c0_14 = arith.constant 0 : index
    %16 = vector.load %arg5[%c0_13, %c1, %c0_14] : memref<1x8x32xf32, #tpu.memory_space<vmem>>, vector<1x1x32xf32>
    %17 = vector.shape_cast %16 : vector<1x1x32xf32> to vector<1x32xf32>
    %18 = vector.shape_cast %15 : vector<1x32xf32> to vector<1x1x32xf32>
    tpu.vector_store %arg5[%c0_13, %c1, %c0_14], %18 {strides = array<i32>} : memref<1x8x32xf32, #tpu.memory_space<vmem>>, vector<1x1x32xf32>,
    %cst_15 = arith.constant 0.000000e+00 : f32
    %19 = vector.broadcast %cst_15 : f32 to vector<6x32xf32>
    %c0_16 = arith.constant 0 : index
    %c2 = arith.constant 2 : index
    %c0_17 = arith.constant 0 : index
    %20 = vector.load %arg5[%c0_16, %c2, %c0_17] : memref<1x8x32xf32, #tpu.memory_space<vmem>>, vector<1x6x32xf32>
    %21 = vector.shape_cast %20 : vector<1x6x32xf32> to vector<6x32xf32>
    %22 = vector.shape_cast %19 : vector<6x32xf32> to vector<1x6x32xf32>
    tpu.vector_store %arg5[%c0_16, %c2, %c0_17], %22 {strides = array<i32>} : memref<1x8x32xf32, #tpu.memory_space<vmem>>, vector<1x6x32xf32>,
    return
  }
  func.func @transform_0(%arg0: i32, %arg1: i32) -> (i32, i32, i32) {
    %c0_i32 = arith.constant 0 : i32
    %c0_i32_0 = arith.constant 0 : i32
    return %arg0, %arg1, %c0_i32 : i32, i32, i32
  }
  func.func @transform_1(%arg0: i32, %arg1: i32) -> (i32, i32, i32) {
    %c0_i32 = arith.constant 0 : i32
    %c0_i32_0 = arith.constant 0 : i32
    %c0_i32_1 = arith.constant 0 : i32
    return %arg0, %c0_i32, %c0_i32_0 : i32, i32, i32
  }
  func.func @transform_2(%arg0: i32, %arg1: i32) -> (i32, i32, i32) {
    %c0_i32 = arith.constant 0 : i32
    %c0_i32_0 = arith.constant 0 : i32
    return %arg0, %arg1, %c0_i32 : i32, i32, i32
  }
  func.func @transform_3(%arg0: i32, %arg1: i32) -> (i32, i32, i32) {
    %c0_i32 = arith.constant 0 : i32
    %c0_i32_0 = arith.constant 0 : i32
    return %arg0, %arg1, %c0_i32 : i32, i32, i32
  }
}

module attributes {stable_mosaic.version = 11 : i64} {
  func.func @_mm_stats_kernel(%arg0: i32, %arg1: i32, %arg2: memref<1x128x128xbf16, #tpu.memory_space<vmem>>, %arg3: memref<1x128x16xbf16, #tpu.memory_space<vmem>>, %arg4: memref<1x128x16xf32, #tpu.memory_space<vmem>>, %arg5: memref<1x8x16xf32, #tpu.memory_space<vmem>>) attributes {dimension_semantics = [#tpu.dimension_semantics<parallel>, #tpu.dimension_semantics<parallel>], iteration_bounds = array<i64: 4, 1>, scalar_prefetch = 0 : i64, scratch_operands = 0 : i64, tpu.core_type = #tpu.core_type<tc>, window_params = [{transform_indices = @transform_0, window_bounds = array<i64: 1, 128, 128>}, {transform_indices = @transform_1, window_bounds = array<i64: 1, 128, 16>}, {transform_indices = @transform_2, window_bounds = array<i64: 1, 128, 16>}, {transform_indices = @transform_3, window_bounds = array<i64: 1, 8, 16>}]} {
    %c0 = arith.constant 0 : index
    %c0_0 = arith.constant 0 : index
    %c0_1 = arith.constant 0 : index
    %0 = vector.load %arg2[%c0, %c0_0, %c0_1] : memref<1x128x128xbf16, #tpu.memory_space<vmem>>, vector<1x128x128xbf16>
    %1 = vector.shape_cast %0 : vector<1x128x128xbf16> to vector<128x128xbf16>
    %c0_2 = arith.constant 0 : index
    %c0_3 = arith.constant 0 : index
    %c0_4 = arith.constant 0 : index
    %2 = vector.load %arg3[%c0_2, %c0_3, %c0_4] : memref<1x128x16xbf16, #tpu.memory_space<vmem>>, vector<1x128x16xbf16>
    %3 = vector.shape_cast %2 : vector<1x128x16xbf16> to vector<128x16xbf16>
    %cst = arith.constant dense<0.000000e+00> : vector<128x16xf32>
    %4 = tpu.matmul %1, %3, %cst {dimension_numbers = #tpu.dot_dimension_numbers<[1], [0], [0], [1], [0, 0, 1, 1], [], []>} : vector<128x128xbf16>, vector<128x16xbf16>, vector<128x16xf32> -> vector<128x16xf32>
    %c0_5 = arith.constant 0 : index
    %c0_6 = arith.constant 0 : index
    %c0_7 = arith.constant 0 : index
    %5 = vector.load %arg4[%c0_5, %c0_6, %c0_7] : memref<1x128x16xf32, #tpu.memory_space<vmem>>, vector<1x128x16xf32>
    %6 = vector.shape_cast %5 : vector<1x128x16xf32> to vector<128x16xf32>
    %7 = vector.shape_cast %4 : vector<128x16xf32> to vector<1x128x16xf32>
    tpu.vector_store %arg4[%c0_5, %c0_6, %c0_7], %7 {strides = array<i32>} : memref<1x128x16xf32, #tpu.memory_space<vmem>>, vector<1x128x16xf32>,
    %cst_8 = arith.constant dense<0.000000e+00> : vector<16xf32>
    %8 = vector.multi_reduction <add>, %4, %cst_8 [0] : vector<128x16xf32> to vector<16xf32>
    %9 = vector.shape_cast %8 : vector<16xf32> to vector<1x16xf32>
    %c0_9 = arith.constant 0 : index
    %c0_10 = arith.constant 0 : index
    %c0_11 = arith.constant 0 : index
    %10 = vector.load %arg5[%c0_9, %c0_10, %c0_11] : memref<1x8x16xf32, #tpu.memory_space<vmem>>, vector<1x1x16xf32>
    %11 = vector.shape_cast %10 : vector<1x1x16xf32> to vector<1x16xf32>
    %12 = vector.shape_cast %9 : vector<1x16xf32> to vector<1x1x16xf32>
    tpu.vector_store %arg5[%c0_9, %c0_10, %c0_11], %12 {strides = array<i32>} : memref<1x8x16xf32, #tpu.memory_space<vmem>>, vector<1x1x16xf32>,
    %13 = arith.mulf %4, %4 : vector<128x16xf32>
    %cst_12 = arith.constant dense<0.000000e+00> : vector<16xf32>
    %14 = vector.multi_reduction <add>, %13, %cst_12 [0] : vector<128x16xf32> to vector<16xf32>
    %15 = vector.shape_cast %14 : vector<16xf32> to vector<1x16xf32>
    %c0_13 = arith.constant 0 : index
    %c1 = arith.constant 1 : index
    %c0_14 = arith.constant 0 : index
    %16 = vector.load %arg5[%c0_13, %c1, %c0_14] : memref<1x8x16xf32, #tpu.memory_space<vmem>>, vector<1x1x16xf32>
    %17 = vector.shape_cast %16 : vector<1x1x16xf32> to vector<1x16xf32>
    %18 = vector.shape_cast %15 : vector<1x16xf32> to vector<1x1x16xf32>
    tpu.vector_store %arg5[%c0_13, %c1, %c0_14], %18 {strides = array<i32>} : memref<1x8x16xf32, #tpu.memory_space<vmem>>, vector<1x1x16xf32>,
    %cst_15 = arith.constant 0.000000e+00 : f32
    %19 = vector.broadcast %cst_15 : f32 to vector<6x16xf32>
    %c0_16 = arith.constant 0 : index
    %c2 = arith.constant 2 : index
    %c0_17 = arith.constant 0 : index
    %20 = vector.load %arg5[%c0_16, %c2, %c0_17] : memref<1x8x16xf32, #tpu.memory_space<vmem>>, vector<1x6x16xf32>
    %21 = vector.shape_cast %20 : vector<1x6x16xf32> to vector<6x16xf32>
    %22 = vector.shape_cast %19 : vector<6x16xf32> to vector<1x6x16xf32>
    tpu.vector_store %arg5[%c0_16, %c2, %c0_17], %22 {strides = array<i32>} : memref<1x8x16xf32, #tpu.memory_space<vmem>>, vector<1x6x16xf32>,
    return
  }
  func.func @transform_0(%arg0: i32, %arg1: i32) -> (i32, i32, i32) {
    %c0_i32 = arith.constant 0 : i32
    %c0_i32_0 = arith.constant 0 : i32
    return %arg0, %arg1, %c0_i32 : i32, i32, i32
  }
  func.func @transform_1(%arg0: i32, %arg1: i32) -> (i32, i32, i32) {
    %c0_i32 = arith.constant 0 : i32
    %c0_i32_0 = arith.constant 0 : i32
    %c0_i32_1 = arith.constant 0 : i32
    return %arg0, %c0_i32, %c0_i32_0 : i32, i32, i32
  }
  func.func @transform_2(%arg0: i32, %arg1: i32) -> (i32, i32, i32) {
    %c0_i32 = arith.constant 0 : i32
    %c0_i32_0 = arith.constant 0 : i32
    return %arg0, %arg1, %c0_i32 : i32, i32, i32
  }
  func.func @transform_3(%arg0: i32, %arg1: i32) -> (i32, i32, i32) {
    %c0_i32 = arith.constant 0 : i32
    %c0_i32_0 = arith.constant 0 : i32
    return %arg0, %arg1, %c0_i32 : i32, i32, i32
  }
}

module attributes {stable_mosaic.version = 11 : i64} {
  func.func @_scale_shift_relu_kernel(%arg0: i32, %arg1: memref<512x16xf32, #tpu.memory_space<vmem>>, %arg2: memref<1x16xf32, #tpu.memory_space<vmem>>, %arg3: memref<1x16xf32, #tpu.memory_space<vmem>>, %arg4: memref<512x16xbf16, #tpu.memory_space<vmem>>) attributes {dimension_semantics = [#tpu.dimension_semantics<parallel>], iteration_bounds = array<i64: 1>, scalar_prefetch = 0 : i64, scratch_operands = 0 : i64, tpu.core_type = #tpu.core_type<tc>, window_params = [{transform_indices = @transform_0, window_bounds = array<i64: 512, 16>}, {pipeline_mode = #tpu.pipeline_mode<synchronous>, transform_indices = @transform_1, window_bounds = array<i64: 1, 16>}, {pipeline_mode = #tpu.pipeline_mode<synchronous>, transform_indices = @transform_2, window_bounds = array<i64: 1, 16>}, {transform_indices = @transform_3, window_bounds = array<i64: 512, 16>}]} {
    %c0 = arith.constant 0 : index
    %c0_0 = arith.constant 0 : index
    %0 = vector.load %arg1[%c0, %c0_0] : memref<512x16xf32, #tpu.memory_space<vmem>>, vector<512x16xf32>
    %c0_1 = arith.constant 0 : index
    %c0_2 = arith.constant 0 : index
    %1 = vector.load %arg2[%c0_1, %c0_2] : memref<1x16xf32, #tpu.memory_space<vmem>>, vector<1x16xf32>
    %2 = vector.broadcast %1 : vector<1x16xf32> to vector<512x16xf32>
    %3 = arith.mulf %0, %2 : vector<512x16xf32>
    %c0_3 = arith.constant 0 : index
    %c0_4 = arith.constant 0 : index
    %4 = vector.load %arg3[%c0_3, %c0_4] : memref<1x16xf32, #tpu.memory_space<vmem>>, vector<1x16xf32>
    %5 = vector.broadcast %4 : vector<1x16xf32> to vector<512x16xf32>
    %6 = arith.addf %3, %5 : vector<512x16xf32>
    %cst = arith.constant 0.000000e+00 : f32
    %7 = vector.broadcast %cst : f32 to vector<512x16xf32>
    %8 = arith.maximumf %6, %7 : vector<512x16xf32>
    %9 = arith.truncf %8 : vector<512x16xf32> to vector<512x16xbf16>
    %c0_5 = arith.constant 0 : index
    %c0_6 = arith.constant 0 : index
    %10 = vector.load %arg4[%c0_5, %c0_6] : memref<512x16xbf16, #tpu.memory_space<vmem>>, vector<512x16xbf16>
    tpu.vector_store %arg4[%c0_5, %c0_6], %9 {strides = array<i32>} : memref<512x16xbf16, #tpu.memory_space<vmem>>, vector<512x16xbf16>,
    return
  }
  func.func @transform_0(%arg0: i32) -> (i32, i32) {
    %c0_i32 = arith.constant 0 : i32
    %c0_i32_0 = arith.constant 0 : i32
    return %arg0, %c0_i32 : i32, i32
  }
  func.func @transform_1(%arg0: i32) -> (i32, i32) {
    %c0_i32 = arith.constant 0 : i32
    %c0_i32_0 = arith.constant 0 : i32
    %c0_i32_1 = arith.constant 0 : i32
    return %c0_i32, %c0_i32_0 : i32, i32
  }
  func.func @transform_2(%arg0: i32) -> (i32, i32) {
    %c0_i32 = arith.constant 0 : i32
    %c0_i32_0 = arith.constant 0 : i32
    %c0_i32_1 = arith.constant 0 : i32
    return %c0_i32, %c0_i32_0 : i32, i32
  }
  func.func @transform_3(%arg0: i32) -> (i32, i32) {
    %c0_i32 = arith.constant 0 : i32
    %c0_i32_0 = arith.constant 0 : i32
    return %arg0, %c0_i32 : i32, i32
  }
}

module attributes {stable_mosaic.version = 11 : i64} {
  func.func @_mm_bias_tanh_kernel(%arg0: i32, %arg1: i32, %arg2: memref<1x512x64xbf16, #tpu.memory_space<vmem>>, %arg3: memref<1x64x128xbf16, #tpu.memory_space<vmem>>, %arg4: memref<1x128xf32, #tpu.memory_space<vmem>>, %arg5: memref<1x512x128xf32, #tpu.memory_space<vmem>>) attributes {dimension_semantics = [#tpu.dimension_semantics<parallel>, #tpu.dimension_semantics<parallel>], iteration_bounds = array<i64: 4, 1>, scalar_prefetch = 0 : i64, scratch_operands = 0 : i64, tpu.core_type = #tpu.core_type<tc>, window_params = [{transform_indices = @transform_0, window_bounds = array<i64: 1, 512, 64>}, {transform_indices = @transform_1, window_bounds = array<i64: 1, 64, 128>}, {pipeline_mode = #tpu.pipeline_mode<synchronous>, transform_indices = @transform_2, window_bounds = array<i64: 1, 128>}, {transform_indices = @transform_3, window_bounds = array<i64: 1, 512, 128>}]} {
    %c0 = arith.constant 0 : index
    %c0_0 = arith.constant 0 : index
    %c0_1 = arith.constant 0 : index
    %0 = vector.load %arg2[%c0, %c0_0, %c0_1] : memref<1x512x64xbf16, #tpu.memory_space<vmem>>, vector<1x512x64xbf16>
    %1 = vector.shape_cast %0 : vector<1x512x64xbf16> to vector<512x64xbf16>
    %c0_2 = arith.constant 0 : index
    %c0_3 = arith.constant 0 : index
    %c0_4 = arith.constant 0 : index
    %2 = vector.load %arg3[%c0_2, %c0_3, %c0_4] : memref<1x64x128xbf16, #tpu.memory_space<vmem>>, vector<1x64x128xbf16>
    %3 = vector.shape_cast %2 : vector<1x64x128xbf16> to vector<64x128xbf16>
    %cst = arith.constant dense<0.000000e+00> : vector<512x128xf32>
    %4 = tpu.matmul %1, %3, %cst {dimension_numbers = #tpu.dot_dimension_numbers<[1], [0], [0], [1], [0, 0, 1, 1], [], []>} : vector<512x64xbf16>, vector<64x128xbf16>, vector<512x128xf32> -> vector<512x128xf32>
    %c0_5 = arith.constant 0 : index
    %c0_6 = arith.constant 0 : index
    %5 = vector.load %arg4[%c0_5, %c0_6] : memref<1x128xf32, #tpu.memory_space<vmem>>, vector<1x128xf32>
    %6 = vector.broadcast %5 : vector<1x128xf32> to vector<512x128xf32>
    %7 = arith.addf %4, %6 : vector<512x128xf32>
    %8 = math.tanh %7 : vector<512x128xf32>
    %cst_7 = arith.constant 5.000000e-01 : f32
    %9 = vector.broadcast %cst_7 : f32 to vector<512x128xf32>
    %10 = arith.mulf %8, %9 : vector<512x128xf32>
    %cst_8 = arith.constant 5.000000e-01 : f32
    %11 = vector.broadcast %cst_8 : f32 to vector<512x128xf32>
    %12 = arith.addf %10, %11 : vector<512x128xf32>
    %c0_9 = arith.constant 0 : index
    %c0_10 = arith.constant 0 : index
    %c0_11 = arith.constant 0 : index
    %13 = vector.load %arg5[%c0_9, %c0_10, %c0_11] : memref<1x512x128xf32, #tpu.memory_space<vmem>>, vector<1x512x128xf32>
    %14 = vector.shape_cast %13 : vector<1x512x128xf32> to vector<512x128xf32>
    %15 = vector.shape_cast %12 : vector<512x128xf32> to vector<1x512x128xf32>
    tpu.vector_store %arg5[%c0_9, %c0_10, %c0_11], %15 {strides = array<i32>} : memref<1x512x128xf32, #tpu.memory_space<vmem>>, vector<1x512x128xf32>,
    return
  }
  func.func @transform_0(%arg0: i32, %arg1: i32) -> (i32, i32, i32) {
    %c0_i32 = arith.constant 0 : i32
    %c0_i32_0 = arith.constant 0 : i32
    return %arg0, %arg1, %c0_i32 : i32, i32, i32
  }
  func.func @transform_1(%arg0: i32, %arg1: i32) -> (i32, i32, i32) {
    %c0_i32 = arith.constant 0 : i32
    %c0_i32_0 = arith.constant 0 : i32
    %c0_i32_1 = arith.constant 0 : i32
    return %arg0, %c0_i32, %c0_i32_0 : i32, i32, i32
  }
  func.func @transform_2(%arg0: i32, %arg1: i32) -> (i32, i32) {
    %c0_i32 = arith.constant 0 : i32
    %c0_i32_0 = arith.constant 0 : i32
    %c0_i32_1 = arith.constant 0 : i32
    return %c0_i32, %c0_i32_0 : i32, i32
  }
  func.func @transform_3(%arg0: i32, %arg1: i32) -> (i32, i32, i32) {
    %c0_i32 = arith.constant 0 : i32
    %c0_i32_0 = arith.constant 0 : i32
    return %arg0, %arg1, %c0_i32 : i32, i32, i32
  }
}

</mosaic_0001>

<llo_original>
// kernel: generator_forward.8
$region0: #{generator_forward.8}
  #allocation0 [shape = 'u32[]', space=smem, size = 0x4, offset = 0x4, fixed_abs, tag = 'smem constant byte address 0x4 - core index']
  #allocation1 [shape = 'u32[144,128]{1,0:T(1,128)}', space=vmem, size = 0x12000, scoped, tag = 'internal scratch']
  %s0 = inlined_call_operand.vmem [shape: f32[128,32], index: 0, kind: input, shape index: {}]
  %s1 = inlined_call_operand.vmem [shape: f32[1,32], index: 1, kind: input, shape index: {}]
  %s2 = inlined_call_operand.vmem [shape: f32[1,32], index: 2, kind: input, shape index: {}]
  %s3 = inlined_call_operand.vmem [shape: bf16[128,32], index: 3, kind: output, shape index: {}]
  %s4 = sld [smem:[#allocation0]]
  $region22: #{generator_forward.8} parent=0
    _
  %s6 = ssub.s32 1, %s4
  %s7 = scalar_select 0, %s6, %s4
  // Predicated region
  $region2: #{generator_forward.8} parent=0 // pred_check
    _
  $region3: #{generator_forward.8} parent=0 // pred_check_branch
    %9 = sbr.rel (0) target = $region5
  $region4: #{generator_forward.8} parent=0 // pred_region
    _
  $region5: #{generator_forward.8} parent=0 // pred_fallthru
    _
  // Predicated region
  $region6: #{generator_forward.8} parent=0 // pred_check
    _
  $region7: #{generator_forward.8} parent=0 // pred_check_branch
    %11 = sbr.rel (0) target = $region9
  $region8: #{generator_forward.8} parent=0 // pred_region
    _
  $region9: #{generator_forward.8} parent=0 // pred_fallthru
    _
  // Predicated region
  $region10: #{generator_forward.8} parent=0 // pred_check
    _
  $region11: #{generator_forward.8} parent=0 // pred_check_branch
    %13 = sbr.rel (0) target = $region13
  $region12: #{generator_forward.8} parent=0 // pred_region
    _
  $region13: #{generator_forward.8} parent=0 // pred_fallthru
    _
  %v14 = vld [vmem:[%s0] sm:$0xff]
  %v15 = vld [vmem:[%s0 + $0x8] sm:$0xff]
  %v16 = vld [vmem:[%s0 + $0x10] sm:$0xff]
  %v17 = vld [vmem:[%s0 + $0x18] sm:$0xff]
  %v18 = vld [vmem:[%s0 + $0x20] sm:$0xff]
  %v19 = vld [vmem:[%s0 + $0x28] sm:$0xff]
  %v20 = vld [vmem:[%s0 + $0x30] sm:$0xff]
  %v21 = vld [vmem:[%s0 + $0x38] sm:$0xff]
  %v22 = vld [vmem:[%s0 + $0x40] sm:$0xff]
  %v23 = vld [vmem:[%s0 + $0x48] sm:$0xff]
  %v24 = vld [vmem:[%s0 + $0x50] sm:$0xff]
  %v25 = vld [vmem:[%s0 + $0x58] sm:$0xff]
  %v26 = vld [vmem:[%s0 + $0x60] sm:$0xff]
  %v27 = vld [vmem:[%s0 + $0x68] sm:$0xff]
  %v28 = vld [vmem:[%s0 + $0x70] sm:$0xff]
  %v29 = vld [vmem:[%s0 + $0x78] sm:$0xff]
  %v30 = vld [vmem:[%s1] sm:$0x1]
  %v32 = vlaneseq
  %v33 = vshrl.u32 %v32, 7
  %v34 = vsub.s32 0, %v33
  %v35 = vrot.slane %v30, %v34
  %v37 = vmul.f32 %v14, %v35
  %v38 = vmul.f32 %v15, %v35
  %v39 = vmul.f32 %v16, %v35
  %v40 = vmul.f32 %v17, %v35
  %v41 = vmul.f32 %v18, %v35
  %v42 = vmul.f32 %v19, %v35
  %v43 = vmul.f32 %v20, %v35
  %v44 = vmul.f32 %v21, %v35
  %v45 = vmul.f32 %v22, %v35
  %v46 = vmul.f32 %v23, %v35
  %v47 = vmul.f32 %v24, %v35
  %v48 = vmul.f32 %v25, %v35
  %v49 = vmul.f32 %v26, %v35
  %v50 = vmul.f32 %v27, %v35
  %v51 = vmul.f32 %v28, %v35
  %v52 = vmul.f32 %v29, %v35
  %v53 = vld [vmem:[%s2] sm:$0x1]
  %v55 = vlaneseq
  %v56 = vshrl.u32 %v55, 7
  %v57 = vsub.s32 0, %v56
  %v58 = vrot.slane %v53, %v57
  %v60 = vadd.f32 %v37, %v58
  %v61 = vadd.f32 %v38, %v58
  %v62 = vadd.f32 %v39, %v58
  %v63 = vadd.f32 %v40, %v58
  %v64 = vadd.f32 %v41, %v58
  %v65 = vadd.f32 %v42, %v58
  %v66 = vadd.f32 %v43, %v58
  %v67 = vadd.f32 %v44, %v58
  %v68 = vadd.f32 %v45, %v58
  %v69 = vadd.f32 %v46, %v58
  %v70 = vadd.f32 %v47, %v58
  %v71 = vadd.f32 %v48, %v58
  %v72 = vadd.f32 %v49, %v58
  %v73 = vadd.f32 %v50, %v58
  %v74 = vadd.f32 %v51, %v58
  %v75 = vadd.f32 %v52, %v58
  %v76 = vmax.f32 %v60, 0.0
  %v77 = vmax.f32 %v61, 0.0
  %v78 = vmax.f32 %v62, 0.0
  %v79 = vmax.f32 %v63, 0.0
  %v80 = vmax.f32 %v64, 0.0
  %v81 = vmax.f32 %v65, 0.0
  %v82 = vmax.f32 %v66, 0.0
  %v83 = vmax.f32 %v67, 0.0
  %v84 = vmax.f32 %v68, 0.0
  %v85 = vmax.f32 %v69, 0.0
  %v86 = vmax.f32 %v70, 0.0
  %v87 = vmax.f32 %v71, 0.0
  %v88 = vmax.f32 %v72, 0.0
  %v89 = vmax.f32 %v73, 0.0
  %v90 = vmax.f32 %v74, 0.0
  %v91 = vmax.f32 %v75, 0.0
  %v92 = vpack.c.bf16 %v77, %v76
  %v93 = vpack.c.bf16 %v79, %v78
  %v94 = vpack.c.bf16 %v81, %v80
  %v95 = vpack.c.bf16 %v83, %v82
  %v96 = vpack.c.bf16 %v85, %v84
  %v97 = vpack.c.bf16 %v87, %v86
  %v98 = vpack.c.bf16 %v89, %v88
  %v99 = vpack.c.bf16 %v91, %v90
  %v108 = vunpack.c.l.b16 %v92
  %v109 = vunpack.c.h.b16 %v92
  %v110 = vunpack.c.l.b16 %v93
  %v111 = vunpack.c.h.b16 %v93
  %v112 = vunpack.c.l.b16 %v94
  %v113 = vunpack.c.h.b16 %v94
  %v114 = vunpack.c.l.b16 %v95
  %v115 = vunpack.c.h.b16 %v95
  %v116 = vunpack.c.l.b16 %v96
  %v117 = vunpack.c.h.b16 %v96
  %v118 = vunpack.c.l.b16 %v97
  %v119 = vunpack.c.h.b16 %v97
  %v120 = vunpack.c.l.b16 %v98
  %v121 = vunpack.c.h.b16 %v98
  %v122 = vunpack.c.l.b16 %v99
  %v123 = vunpack.c.h.b16 %v99
  %v124 = vpack.c.b16 %v108, %v108
  %v125 = vpack.c.b16 %v109, %v109
  %v126 = vpack.c.b16 %v110, %v110
  %v127 = vpack.c.b16 %v111, %v111
  %v128 = vpack.c.b16 %v112, %v112
  %v129 = vpack.c.b16 %v113, %v113
  %v130 = vpack.c.b16 %v114, %v114
  %v131 = vpack.c.b16 %v115, %v115
  %v132 = vpack.c.b16 %v116, %v116
  %v133 = vpack.c.b16 %v117, %v117
  %v134 = vpack.c.b16 %v118, %v118
  %v135 = vpack.c.b16 %v119, %v119
  %v136 = vpack.c.b16 %v120, %v120
  %v137 = vpack.c.b16 %v121, %v121
  %v138 = vpack.c.b16 %v122, %v122
  %v139 = vpack.c.b16 %v123, %v123
  %vm156 = vcmask 257024
  %157 = vst.msk [vmem:[%s3] sm:$0xf] %vm156, %v124
  %158 = vst.msk [vmem:[%s3 + $0x4] sm:$0xf] %vm156, %v125
  %159 = vst.msk [vmem:[%s3 + $0x8] sm:$0xf] %vm156, %v126
  %160 = vst.msk [vmem:[%s3 + $0xc] sm:$0xf] %vm156, %v127
  %161 = vst.msk [vmem:[%s3 + $0x10] sm:$0xf] %vm156, %v128
  %162 = vst.msk [vmem:[%s3 + $0x14] sm:$0xf] %vm156, %v129
  %163 = vst.msk [vmem:[%s3 + $0x18] sm:$0xf] %vm156, %v130
  %164 = vst.msk [vmem:[%s3 + $0x1c] sm:$0xf] %vm156, %v131
  %165 = vst.msk [vmem:[%s3 + $0x20] sm:$0xf] %vm156, %v132
  %166 = vst.msk [vmem:[%s3 + $0x24] sm:$0xf] %vm156, %v133
  %167 = vst.msk [vmem:[%s3 + $0x28] sm:$0xf] %vm156, %v134
  %168 = vst.msk [vmem:[%s3 + $0x2c] sm:$0xf] %vm156, %v135
  %169 = vst.msk [vmem:[%s3 + $0x30] sm:$0xf] %vm156, %v136
  %170 = vst.msk [vmem:[%s3 + $0x34] sm:$0xf] %vm156, %v137
  %171 = vst.msk [vmem:[%s3 + $0x38] sm:$0xf] %vm156, %v138
  %172 = vst.msk [vmem:[%s3 + $0x3c] sm:$0xf] %vm156, %v139
  // Predicated region
  $region14: #{generator_forward.8} parent=0 // pred_check
    _
  $region15: #{generator_forward.8} parent=0 // pred_check_branch
    %174 = sbr.rel (0) target = $region17
  $region16: #{generator_forward.8} parent=0 // pred_region
    _
  $region17: #{generator_forward.8} parent=0 // pred_fallthru
    _
  // Predicated region
  $region18: #{generator_forward.8} parent=0 // pred_check
    _
  $region19: #{generator_forward.8} parent=0 // pred_check_branch
    %176 = sbr.rel (0) target = $region21
  $region20: #{generator_forward.8} parent=0 // pred_region
    _
  $region21: #{generator_forward.8} parent=0 // pred_fallthru
    _

// kernel: generator_forward.7
$region0: #{generator_forward.7}
  #allocation0 [shape = 'u32[]', space=smem, size = 0x4, offset = 0x4, fixed_abs, tag = 'smem constant byte address 0x4 - core index']
  #allocation1 [shape = 'u32[144,128]{1,0:T(1,128)}', space=vmem, size = 0x12000, scoped, tag = 'internal scratch']
  %s0 = inlined_call_operand.vmem [shape: bf16[1,8,32], index: 0, kind: input, shape index: {}]
  %s1 = inlined_call_operand.hbm [shape: bf16[1,32,512], index: 1, kind: input, shape index: {}]
  %s2 = inlined_call_operand.vmem [shape: f32[1,8,512], index: 2, kind: output, shape index: {0}]
  %s3 = inlined_call_operand.vmem [shape: f32[1,8,512], index: 3, kind: output, shape index: {1}]
  %4 = xla_tuple %s2, %s3
  %s5 = sld [smem:[#allocation0]]
  $region30: #{generator_forward.7} parent=0
    _
  %s7 = ssub.s32 1, %s5
  %s8 = scalar_select 0, %s7, %s5
  $region1: #{generator_forward.7} parent=0
    #allocation2 [shape = 'u8[32768]{0}', space=vmem, size = 0x8000, scoped, tag = 'input window, operand 1, single buffered']
    #allocation3 [shape = 's32[1]{0}', space=sflag, size = 0x4, scoped, tag = 'scoped memory for generator_forward.7']
    %9 = vsyncpa [#allocation3], 0
    // Predicated region
    $region2: #{generator_forward.7} parent=1 // pred_check
      _
    $region3: #{generator_forward.7} parent=1 // pred_check_branch
      %11 = sbr.rel (0) target = $region5
    $region4: #{generator_forward.7} parent=1 // pred_region
      _
    $region5: #{generator_forward.7} parent=1 // pred_fallthru
      _
    // Predicated region
    $region6: #{generator_forward.7} parent=1 // pred_check
      _
    $region7: #{generator_forward.7} parent=1 // pred_check_branch
      %13 = sbr.rel (0) target = $region9
    $region8: #{generator_forward.7} parent=1 // pred_region
      %s15 = ssub.s32 1024, 1024
      %16 = vsyncadd [#allocation3], %s15
      %s17 = sshll.u32 [#allocation2], 4
      %s18 = int_to_ptr.vmem [resolvable:$true] %s17
      %23 = dma.hbm_to_vmem [thread:$0]  %s1, 1024, %s18, [#allocation3], 256, 256, 16
    $region9: #{generator_forward.7} parent=1 // pred_fallthru
      _
    // Predicated region
    $region10: #{generator_forward.7} parent=1 // pred_check
      _
    $region11: #{generator_forward.7} parent=1 // pred_check_branch
      %25 = sbr.rel (0) target = $region13
    $region12: #{generator_forward.7} parent=1 // pred_region
      %26 = dma.done [#allocation3], 1024
    $region13: #{generator_forward.7} parent=1 // pred_fallthru
      _
    %v28 = vld [vmem:[%s0] sm:$0xf]
    %v29 = vld [vmem:[#allocation2] sm:$0xff]
    %v30 = vld [vmem:[#allocation2 + $0x8] sm:$0xff]
    %v31 = vld [vmem:[#allocation2 + $0x10] sm:$0xff]
    %v32 = vld [vmem:[#allocation2 + $0x18] sm:$0xff]
    %v33 = vld [vmem:[#allocation2 + $0x20] sm:$0xff]
    %v34 = vld [vmem:[#allocation2 + $0x28] sm:$0xff]
    %v35 = vld [vmem:[#allocation2 + $0x30] sm:$0xff]
    %v36 = vld [vmem:[#allocation2 + $0x38] sm:$0xff]
    %v45 = vunpack.c.l.b16 %v29
    %v46 = vunpack.c.h.b16 %v29
    %v47 = vunpack.c.l.b16 %v30
    %v48 = vunpack.c.h.b16 %v30
    %v49 = vunpack.c.l.b16 %v31
    %v50 = vunpack.c.h.b16 %v31
    %v51 = vunpack.c.l.b16 %v32
    %v52 = vunpack.c.h.b16 %v32
    %v53 = vunpack.c.l.b16 %v33
    %v54 = vunpack.c.h.b16 %v33
    %v55 = vunpack.c.l.b16 %v34
    %v56 = vunpack.c.h.b16 %v34
    %v57 = vunpack.c.l.b16 %v35
    %v58 = vunpack.c.h.b16 %v35
    %v59 = vunpack.c.l.b16 %v36
    %v60 = vunpack.c.h.b16 %v36
    %v61 = vpack.c.b16 %v49, %v45
    %v62 = vpack.c.b16 %v50, %v46
    %v63 = vpack.c.b16 %v51, %v47
    %v64 = vpack.c.b16 %v52, %v48
    %v65 = vpack.c.b16 %v57, %v53
    %v66 = vpack.c.b16 %v58, %v54
    %v67 = vpack.c.b16 %v59, %v55
    %v68 = vpack.c.b16 %v60, %v56
    %vm77 = vcmask 261120
    %v79 = vsel %vm77, %v28, 0
    %81 = vmatprep.subr.bf16.mxu0 0
    %82 = vmatpush1.bf16.msra.mxu0 0
    %83 = vmatprep.subr.bf16.mxu0 0
    %84 = vmatpush1.bf16.msra.mxu0 0
    %85 = vmatprep.subr.bf16.mxu0 0
    %86 = vmatpush1.bf16.msra.mxu0 0
    %87 = vmatprep.subr.bf16.mxu0 0
    %88 = vmatpush1.bf16.msra.mxu0 0
    %89 = vmatprep.subr.bf16.mxu0 0
    %90 = vmatpush1.bf16.msra.mxu0 0
    %91 = vmatprep.subr.bf16.mxu0 0
    %92 = vmatpush1.bf16.msra.mxu0 0
    %93 = vmatprep.subr.bf16.mxu0 %v66
    %94 = vmatpush1.bf16.msra.mxu0 %v65
    %95 = vmatprep.subr.bf16.mxu0 %v62
    %96 = vmatpush1.bf16.msra.mxu0 %v61
    %97 = vmatprep.subr.bf16.mxu0 0
    %98 = vmatpush2.bf16.msra.mxu0 0
    %99 = vmatprep.subr.bf16.mxu0 0
    %100 = vmatpush2.bf16.msra.mxu0 0
    %101 = vmatprep.subr.bf16.mxu0 0
    %102 = vmatpush2.bf16.msra.mxu0 0
    %103 = vmatprep.subr.bf16.mxu0 0
    %104 = vmatpush2.bf16.msra.mxu0 0
    %105 = vmatprep.subr.bf16.mxu0 0
    %106 = vmatpush2.bf16.msra.mxu0 0
    %107 = vmatprep.subr.bf16.mxu0 0
    %108 = vmatpush2.bf16.msra.mxu0 0
    %109 = vmatprep.subr.bf16.mxu0 0
    %110 = vmatpush2.bf16.msra.mxu0 0
    %111 = vmatprep.subr.bf16.mxu0 0
    %112 = vmatpush2.bf16.msra.mxu0 0
    %113 = vmatprep.mubr.bf16.mxu0 0
    %114 = vmatmul.mubr.bf16.gmra.mxu0 %v79
    %v115 = vpop.f32.mrf.mxu0
    %v116 = vadd.f32 0.0, %v115
    %v117 = vpop.f32.mrf.mxu0
    %v118 = vadd.f32 0.0, %v117
    %v119 = vpop.f32.mrf.mxu0
    %v120 = vpop.f32.mrf.mxu0
    %121 = vdwg.mxu0
    %122 = vmatprep.subr.bf16.mxu0 0
    %123 = vmatpush1.bf16.msra.mxu0 0
    %124 = vmatprep.subr.bf16.mxu0 0
    %125 = vmatpush1.bf16.msra.mxu0 0
    %126 = vmatprep.subr.bf16.mxu0 0
    %127 = vmatpush1.bf16.msra.mxu0 0
    %128 = vmatprep.subr.bf16.mxu0 0
    %129 = vmatpush1.bf16.msra.mxu0 0
    %130 = vmatprep.subr.bf16.mxu0 0
    %131 = vmatpush1.bf16.msra.mxu0 0
    %132 = vmatprep.subr.bf16.mxu0 0
    %133 = vmatpush1.bf16.msra.mxu0 0
    %134 = vmatprep.subr.bf16.mxu0 %v68
    %135 = vmatpush1.bf16.msra.mxu0 %v67
    %136 = vmatprep.subr.bf16.mxu0 %v64
    %137 = vmatpush1.bf16.msra.mxu0 %v63
    %138 = vmatprep.subr.bf16.mxu0 0
    %139 = vmatpush2.bf16.msra.mxu0 0
    %140 = vmatprep.subr.bf16.mxu0 0
    %141 = vmatpush2.bf16.msra.mxu0 0
    %142 = vmatprep.subr.bf16.mxu0 0
    %143 = vmatpush2.bf16.msra.mxu0 0
    %144 = vmatprep.subr.bf16.mxu0 0
    %145 = vmatpush2.bf16.msra.mxu0 0
    %146 = vmatprep.subr.bf16.mxu0 0
    %147 = vmatpush2.bf16.msra.mxu0 0
    %148 = vmatprep.subr.bf16.mxu0 0
    %149 = vmatpush2.bf16.msra.mxu0 0
    %150 = vmatprep.subr.bf16.mxu0 0
    %151 = vmatpush2.bf16.msra.mxu0 0
    %152 = vmatprep.subr.bf16.mxu0 0
    %153 = vmatpush2.bf16.msra.mxu0 0
    %154 = vmatprep.mubr.bf16.mxu0 0
    %155 = vmatmul.mubr.bf16.gmra.mxu0 %v79
    %v156 = vpop.f32.mrf.mxu0
    %v157 = vadd.f32 0.0, %v156
    %v158 = vpop.f32.mrf.mxu0
    %v159 = vadd.f32 0.0, %v158
    %v160 = vpop.f32.mrf.mxu0
    %v161 = vpop.f32.mrf.mxu0
    %162 = vdwg.mxu0
    %163 = vst [vmem:[%s2] sm:$0xff] %v116
    %164 = vst [vmem:[%s2 + $0x8] sm:$0xff] %v118
    %165 = vst [vmem:[%s2 + $0x10] sm:$0xff] %v157
    %166 = vst [vmem:[%s2 + $0x18] sm:$0xff] %v159
    %v167 = vrot.slane %v116, 4
    %v168 = vadd.f32 %v116, %v167
    %v169 = vrot.slane %v168, 2
    %v170 = vadd.f32 %v168, %v169
    %v171 = vrot.slane %v170, 1
    %v172 = vadd.f32 %v170, %v171
    %v173 = vrot.slane %v118, 4
    %v174 = vadd.f32 %v118, %v173
    %v175 = vrot.slane %v174, 2
    %v176 = vadd.f32 %v174, %v175
    %v177 = vrot.slane %v176, 1
    %v178 = vadd.f32 %v176, %v177
    %v179 = vrot.slane %v157, 4
    %v180 = vadd.f32 %v157, %v179
    %v181 = vrot.slane %v180, 2
    %v182 = vadd.f32 %v180, %v181
    %v183 = vrot.slane %v182, 1
    %v184 = vadd.f32 %v182, %v183
    %v185 = vrot.slane %v159, 4
    %v186 = vadd.f32 %v159, %v185
    %v187 = vrot.slane %v186, 2
    %v188 = vadd.f32 %v186, %v187
    %v189 = vrot.slane %v188, 1
    %v190 = vadd.f32 %v188, %v189
    %v195 = vcombine.low %v172, %v178
    %v196 = vcombine.low %v184, %v190
    %v198 = vunpack.c.l.s4 1966171168
    %v199 = vunpack.c.0.s8 %v198
    %v200 = vlaneseq
    %v201 = vshrl.u32 %v200, 7
    %v202 = vsub.s32 %v199, %v201
    %v203 = vrot.slane %v195, %v202
    %v205 = vunpack.c.l.s4 1966171168
    %v206 = vunpack.c.0.s8 %v205
    %v207 = vlaneseq
    %v208 = vshrl.u32 %v207, 7
    %v209 = vsub.s32 %v206, %v208
    %v210 = vrot.slane %v196, %v209
    %v211 = vcombine.low %v203, %v210
    %v213 = vunpack.c.l.s4 1966171168
    %v214 = vunpack.c.0.s8 %v213
    %v215 = vlaneseq
    %v216 = vshrl.u32 %v215, 7
    %v217 = vsub.s32 %v214, %v216
    %v218 = vrot.slane %v211, %v217
    %v220 = vlaneseq
    %vm221 = vcmp.ge.s32.totalorder %v220, 0
    %vm222 = vcmp.lt.s32.totalorder %v220, 512
    %vm223 = vmand %vm221, %vm222
    %224 = vst.msk [vmem:[%s3] ss:$8 sm:$0xf] %vm223, %v218
    %225 = vst.msk [vmem:[%s3] ss:$8 sm:$0x0] %vm223, %v218
    %v226 = vmul.f32 %v116, %v116
    %v227 = vmul.f32 %v118, %v118
    %v228 = vmul.f32 %v157, %v157
    %v229 = vmul.f32 %v159, %v159
    %v230 = vrot.slane %v226, 4
    %v231 = vadd.f32 %v226, %v230
    %v232 = vrot.slane %v231, 2
    %v233 = vadd.f32 %v231, %v232
    %v234 = vrot.slane %v233, 1
    %v235 = vadd.f32 %v233, %v234
    %v236 = vrot.slane %v227, 4
    %v237 = vadd.f32 %v227, %v236
    %v238 = vrot.slane %v237, 2
    %v239 = vadd.f32 %v237, %v238
    %v240 = vrot.slane %v239, 1
    %v241 = vadd.f32 %v239, %v240
    %v242 = vrot.slane %v228, 4
    %v243 = vadd.f32 %v228, %v242
    %v244 = vrot.slane %v243, 2
    %v245 = vadd.f32 %v243, %v244
    %v246 = vrot.slane %v245, 1
    %v247 = vadd.f32 %v245, %v246
    %v248 = vrot.slane %v229, 4
    %v249 = vadd.f32 %v229, %v248
    %v250 = vrot.slane %v249, 2
    %v251 = vadd.f32 %v249, %v250
    %v252 = vrot.slane %v251, 1
    %v253 = vadd.f32 %v251, %v252
    %v258 = vcombine.low %v235, %v241
    %v259 = vcombine.low %v247, %v253
    %v261 = vunpack.c.l.s4 1966171168
    %v262 = vunpack.c.0.s8 %v261
    %v263 = vlaneseq
    %v264 = vshrl.u32 %v263, 7
    %v265 = vsub.s32 %v262, %v264
    %v266 = vrot.slane %v258, %v265
    %v268 = vunpack.c.l.s4 1966171168
    %v269 = vunpack.c.0.s8 %v268
    %v270 = vlaneseq
    %v271 = vshrl.u32 %v270, 7
    %v272 = vsub.s32 %v269, %v271
    %v273 = vrot.slane %v259, %v272
    %v274 = vcombine.low %v266, %v273
    %v276 = vunpack.c.l.s4 1966171168
    %v277 = vunpack.c.0.s8 %v276
    %v278 = vlaneseq
    %v279 = vshrl.u32 %v278, 7
    %v280 = vsub.s32 %v277, %v279
    %v281 = vrot.slane %v274, %v280
    %s283 = scalar_lea.vmem %s3, 1
    %284 = vst.msk [vmem:[%s283] ss:$8 sm:$0xf] %vm223, %v281
    %285 = vst.msk [vmem:[%s283] ss:$8 sm:$0x0] %vm223, %v281
    %286 = vst [vmem:[%s3] sm:$0xfc] 0.0
    %287 = vst [vmem:[%s3 + $0x8] sm:$0xfc] 0.0
    %288 = vst [vmem:[%s3 + $0x10] sm:$0xfc] 0.0
    %289 = vst [vmem:[%s3 + $0x18] sm:$0xfc] 0.0
    // Predicated region
    $region14: #{generator_forward.7} parent=1 // pred_check
      _
    $region15: #{generator_forward.7} parent=1 // pred_check_branch
      %291 = sbr.rel (0) target = $region17
    $region16: #{generator_forward.7} parent=1 // pred_region
      _
    $region17: #{generator_forward.7} parent=1 // pred_fallthru
      _
    // Predicated region
    $region18: #{generator_forward.7} parent=1 // pred_check
      _
    $region19: #{generator_forward.7} parent=1 // pred_check_branch
      %293 = sbr.rel (0) target = $region21
    $region20: #{generator_forward.7} parent=1 // pred_region
      _
    $region21: #{generator_forward.7} parent=1 // pred_fallthru
      _
    // Predicated region
    $region22: #{generator_forward.7} parent=1 // pred_check
      _
    $region23: #{generator_forward.7} parent=1 // pred_check_branch
      %295 = sbr.rel (0) target = $region25
    $region24: #{generator_forward.7} parent=1 // pred_region
      _
    $region25: #{generator_forward.7} parent=1 // pred_fallthru
      _
    // Predicated region
    $region26: #{generator_forward.7} parent=1 // pred_check
      _
    $region27: #{generator_forward.7} parent=1 // pred_check_branch
      %297 = sbr.rel (0) target = $region29
    $region28: #{generator_forward.7} parent=1 // pred_region
      _
    $region29: #{generator_forward.7} parent=1 // pred_fallthru
      _
    %298 = vsyncpa [#allocation3], 1

// kernel: generator_forward.9
$region0: #{generator_forward.9}
  #allocation0 [shape = 'u32[]', space=smem, size = 0x4, offset = 0x4, fixed_abs, tag = 'smem constant byte address 0x4 - core index']
  #allocation1 [shape = 'u32[144,128]{1,0:T(1,128)}', space=vmem, size = 0x12000, scoped, tag = 'internal scratch']
  %s0 = inlined_call_operand.vmem [shape: bf16[4,32,128], index: 0, kind: input, shape index: {}]
  %s1 = inlined_call_operand.vmem [shape: bf16[4,128,32], index: 1, kind: input, shape index: {}]
  %s2 = inlined_call_operand.vmem [shape: f32[4,32,32], index: 2, kind: output, shape index: {0}]
  %s3 = inlined_call_operand.vmem [shape: f32[4,8,32], index: 3, kind: output, shape index: {1}]
  %4 = xla_tuple %s2, %s3
  %s5 = sld [smem:[#allocation0]]
  $region49: #{generator_forward.9} parent=0
    _
  %s7 = ssub.s32 1, %s5
  %s8 = scalar_select 0, %s7, %s5
  loop: start=0, step=1, limit=6
  $region2: #{generator_forward.9} parent=0 // loop_pre_header
    _
  $region3: #{generator_forward.9} parent=0 // loop_header
    %s10 = sphi 0, %s14
    %p11 = scmp.ge.s32.totalorder %s10, 6
    %s17 = sphi 0, %s29
    %s18 = sphi 0, %s25
    %s19 = sphi 0, %s17
    %s20 = sphi 0, %s18
    %s21 = sphi 0, %s19
    %s22 = sphi 0, %s20
    %s34 = sphi 0, %s36
    %s37 = sphi 0, %s34
    %s38 = sphi 0, %s37
    %s54 = sphi 0, %s38
    %s60 = sphi 0, %s62
    %s63 = sphi 0, %s60
    %s64 = sphi 0, %s63
    %s80 = sphi 0, %s64
    %s88 = sphi 0, %s90
    %s91 = sphi 0, %s88
    %s92 = sphi 0, %s91
    %s108 = sphi 0, %s92
    %s116 = sphi 0, %s118
    %s119 = sphi 0, %s116
    %s120 = sphi 0, %s119
    %s136 = sphi 0, %s120
  $region4: #{generator_forward.9} parent=0 // loop_header_branch
    %13 = sbr.rel (%p11) target = $region8
  $region5: #{generator_forward.9} parent=0 // loop_body
    %s15 = ssub.s32 %s10, 1
    %s16 = ssub.s32 %s10, 2
    %s23 = sadd.s32 1, %s18
    %p24 = scmp.ge.s32.totalorder %s23, 1
    %s25 = scalar_select %p24, 0, %s23
    %s26 = sadd.s32 1, %s17
    %s27 = scalar_select %p24, %s26, %s17
    %p28 = scmp.ge.s32.totalorder %s27, 4
    %s29 = scalar_select %p28, 0, %s27
    %s30 = ssub.s32 %s17, %s29
    %s31 = ssub.s32 %s18, %s25
    %s32 = sor.u32 %s30, %s31
    %p33 = scmp.eq.s32.totalorder %s32, 0
    %s35 = sadd.s32 %s34, 1
    %s36 = scalar_select %p33, %s34, %s35
    %p39 = pneg %p33
    %p40 = scmp.eq.s32.totalorder %s10, 3
    %p41 = por %p39, %p40
    %p42 = scmp.ne.s32.totalorder %s34, %s37
    %p43 = scmp.eq.s32.totalorder %s10, 0
    %p44 = por %p42, %p43
    %p45 = scmp.ne.s32.totalorder %s34, %s37
    %p46 = scmp.eq.s32.totalorder %s15, 3
    %p47 = por %p45, %p46
    %p48 = scmp.ne.s32.totalorder %s37, %s38
    %p49 = scmp.eq.s32.totalorder %s15, 0
    %p50 = por %p48, %p49
    %p51 = scmp.ne.s32.totalorder %s37, %s38
    %p52 = scmp.eq.s32.totalorder %s16, 3
    %p53 = por %p51, %p52
    %p55 = scmp.ne.s32.totalorder %s38, %s54
    %p56 = scmp.eq.s32.totalorder %s16, 0
    %p57 = por %p55, %p56
    %s58 = ssub.s32 %s17, %s29
    %p59 = scmp.eq.s32.totalorder %s58, 0
    %s61 = sadd.s32 %s60, 1
    %s62 = scalar_select %p59, %s60, %s61
    %p65 = pneg %p59
    %p66 = scmp.eq.s32.totalorder %s10, 3
    %p67 = por %p65, %p66
    %p68 = scmp.ne.s32.totalorder %s60, %s63
    %p69 = scmp.eq.s32.totalorder %s10, 0
    %p70 = por %p68, %p69
    %p71 = scmp.ne.s32.totalorder %s60, %s63
    %p72 = scmp.eq.s32.totalorder %s15, 3
    %p73 = por %p71, %p72
    %p74 = scmp.ne.s32.totalorder %s63, %s64
    %p75 = scmp.eq.s32.totalorder %s15, 0
    %p76 = por %p74, %p75
    %p77 = scmp.ne.s32.totalorder %s63, %s64
    %p78 = scmp.eq.s32.totalorder %s16, 3
    %p79 = por %p77, %p78
    %p81 = scmp.ne.s32.totalorder %s64, %s80
    %p82 = scmp.eq.s32.totalorder %s16, 0
    %p83 = por %p81, %p82
    %s84 = ssub.s32 %s17, %s29
    %s85 = ssub.s32 %s18, %s25
    %s86 = sor.u32 %s84, %s85
    %p87 = scmp.eq.s32.totalorder %s86, 0
    %s89 = sadd.s32 %s88, 1
    %s90 = scalar_select %p87, %s88, %s89
    %p93 = pneg %p87
    %p94 = scmp.eq.s32.totalorder %s10, 3
    %p95 = por %p93, %p94
    %p96 = scmp.ne.s32.totalorder %s88, %s91
    %p97 = scmp.eq.s32.totalorder %s10, 0
    %p98 = por %p96, %p97
    %p99 = scmp.ne.s32.totalorder %s88, %s91
    %p100 = scmp.eq.s32.totalorder %s15, 3
    %p101 = por %p99, %p100
    %p102 = scmp.ne.s32.totalorder %s91, %s92
    %p103 = scmp.eq.s32.totalorder %s15, 0
    %p104 = por %p102, %p103
    %p105 = scmp.ne.s32.totalorder %s91, %s92
    %p106 = scmp.eq.s32.totalorder %s16, 3
    %p107 = por %p105, %p106
    %p109 = scmp.ne.s32.totalorder %s92, %s108
    %p110 = scmp.eq.s32.totalorder %s16, 0
    %p111 = por %p109, %p110
    %s112 = ssub.s32 %s17, %s29
    %s113 = ssub.s32 %s18, %s25
    %s114 = sor.u32 %s112, %s113
    %p115 = scmp.eq.s32.totalorder %s114, 0
    %s117 = sadd.s32 %s116, 1
    %s118 = scalar_select %p115, %s116, %s117
    %p121 = pneg %p115
    %p122 = scmp.eq.s32.totalorder %s10, 3
    %p123 = por %p121, %p122
    %p124 = scmp.ne.s32.totalorder %s116, %s119
    %p125 = scmp.eq.s32.totalorder %s10, 0
    %p126 = por %p124, %p125
    %p127 = scmp.ne.s32.totalorder %s116, %s119
    %p128 = scmp.eq.s32.totalorder %s15, 3
    %p129 = por %p127, %p128
    %p130 = scmp.ne.s32.totalorder %s119, %s120
    %p131 = scmp.eq.s32.totalorder %s15, 0
    %p132 = por %p130, %p131
    %p133 = scmp.ne.s32.totalorder %s119, %s120
    %p134 = scmp.eq.s32.totalorder %s16, 3
    %p135 = por %p133, %p134
    %p137 = scmp.ne.s32.totalorder %s120, %s136
    %p138 = scmp.eq.s32.totalorder %s16, 0
    %p139 = por %p137, %p138
    %p140 = scmp.le.s32.totalorder 1, %s10
    %p141 = scmp.lt.s32.totalorder %s10, 5
    %p142 = pnand %p140, %p141
    %p143 = pneg %p142
    // Predicated region
    $region9: #{generator_forward.9} parent=5 // pred_check
      _
    $region10: #{generator_forward.9} parent=5 // pred_check_branch
      %145 = sbr.rel (%p142) target = $region12
    $region11: #{generator_forward.9} parent=5 // pred_region
      %s146 = ssub.s32 %s10, 1
    $region12: #{generator_forward.9} parent=5 // pred_fallthru
      _
    %p147 = scmp.lt.s32.totalorder %s10, 4
    // Predicated region
    $region13: #{generator_forward.9} parent=5 // pred_check
      %p148 = pneg %p147
    $region14: #{generator_forward.9} parent=5 // pred_check_branch
      %150 = sbr.rel (%p148) target = $region16
    $region15: #{generator_forward.9} parent=5 // pred_region
      // Predicated region
      $region17: #{generator_forward.9} parent=15 // pred_check
        %p151 = pneg %p44
      $region18: #{generator_forward.9} parent=15 // pred_check_branch
        %153 = sbr.rel (%p151) target = $region20
      $region19: #{generator_forward.9} parent=15 // pred_region
        %s154 = smul.u32 4, %s18
        %p155 = scmp.lt.s32.totalorder %s17, 3
        %s156 = scalar_select %p155, %s17, 3
        %p157 = scmp.lt.s32.totalorder %s154, 3
        %s158 = scalar_select %p157, %s154, 3
        %s159 = smul.addr %s156, 4
        %s160 = sadd.s32 %s158, %s159
        %s161 = smul.addr %s160, 4
        %s162 = scalar_lea.vmem %s0, %s161
        %s163 = smul.u32 4, %s18
      $region20: #{generator_forward.9} parent=15 // pred_fallthru
        _
      // Predicated region
      $region21: #{generator_forward.9} parent=15 // pred_check
        %p164 = pneg %p70
      $region22: #{generator_forward.9} parent=15 // pred_check_branch
        %166 = sbr.rel (%p164) target = $region24
      $region23: #{generator_forward.9} parent=15 // pred_region
        %p167 = scmp.lt.s32.totalorder %s17, 3
        %s168 = scalar_select %p167, %s17, 3
        %s169 = smul.addr %s168, 16
        %s170 = smul.addr %s169, 4
        %s171 = scalar_lea.vmem %s1, %s170
      $region24: #{generator_forward.9} parent=15 // pred_fallthru
        _
    $region16: #{generator_forward.9} parent=5 // pred_fallthru
      _
    %p172 = scmp.le.s32.totalorder 1, %s10
    %p173 = scmp.lt.s32.totalorder %s10, 5
    %p174 = pnand %p172, %p173
    %p175 = pneg %p174
    // Predicated region
    $region25: #{generator_forward.9} parent=5 // pred_check
      _
    $region26: #{generator_forward.9} parent=5 // pred_check_branch
      %177 = sbr.rel (%p174) target = $region28
    $region27: #{generator_forward.9} parent=5 // pred_region
      %s178 = ssub.s32 %s10, 1
      %s179 = smul.u32 4, %s20
      %p180 = scmp.lt.s32.totalorder %s19, 3
      %s181 = scalar_select %p180, %s19, 3
      %p182 = scmp.lt.s32.totalorder %s179, 3
      %s183 = scalar_select %p182, %s179, 3
      %s184 = smul.addr %s181, 4
      %s185 = sadd.s32 %s183, %s184
      %s186 = smul.addr %s185, 4
      %s187 = scalar_lea.vmem %s0, %s186
      %p188 = pneg %p50
      %p189 = pneg %p47
      %p190 = scmp.lt.s32.totalorder %s19, 3
      %s191 = scalar_select %p190, %s19, 3
      %s192 = smul.addr %s191, 16
      %s193 = smul.addr %s192, 4
      %s194 = scalar_lea.vmem %s1, %s193
      %p195 = pneg %p76
      %p196 = pneg %p73
      %p197 = pneg %p104
      %p198 = pneg %p101
      %s199 = smul.u32 4, %s20
      %p200 = scmp.lt.s32.totalorder %s19, 3
      %s201 = scalar_select %p200, %s19, 3
      %p202 = scmp.lt.s32.totalorder %s199, 3
      %s203 = scalar_select %p202, %s199, 3
      %s204 = smul.addr %s201, 4
      %s205 = sadd.s32 %s203, %s204
      %s206 = smul.addr %s205, 8
      %s207 = scalar_lea.vmem %s2, %s206
      %p208 = pneg %p132
      %p209 = pneg %p129
      %p210 = scmp.lt.s32.totalorder %s19, 3
      %s211 = scalar_select %p210, %s19, 3
      %p212 = scmp.lt.s32.totalorder %s20, 0
      %s213 = scalar_select %p212, %s20, 0
      %s214 = sadd.s32 %s213, %s211
      %s215 = smul.addr %s214, 8
      %s216 = scalar_lea.vmem %s3, %s215
      %s217 = smul.u32 4, %s20
      %p218 = scmp.lt.s32.totalorder %s19, 3
      %s219 = scalar_select %p218, %s19, 3
      %p220 = scmp.lt.s32.totalorder %s217, 3
      %s221 = scalar_select %p220, %s217, 3
      %s222 = smul.addr %s219, 4
      %s223 = sadd.s32 %s221, %s222
      %s224 = smul.addr %s223, 4
      %s225 = scalar_lea.vmem %s0, %s224
      %s226 = smul.u32 4, %s20
      %p227 = scmp.lt.s32.totalorder %s19, 3
      %s228 = scalar_select %p227, %s19, 3
      %s229 = smul.addr %s228, 16
      %s230 = smul.addr %s229, 4
      %s231 = scalar_lea.vmem %s1, %s230
      %s232 = smul.u32 4, %s20
      %p233 = scmp.lt.s32.totalorder %s19, 3
      %s234 = scalar_select %p233, %s19, 3
      %p235 = scmp.lt.s32.totalorder %s232, 3
      %s236 = scalar_select %p235, %s232, 3
      %s237 = smul.addr %s234, 4
      %s238 = sadd.s32 %s236, %s237
      %s239 = smul.addr %s238, 8
      %s240 = scalar_lea.vmem %s2, %s239
      %s241 = smul.u32 4, %s20
      %p242 = scmp.lt.s32.totalorder %s19, 3
      %s243 = scalar_select %p242, %s19, 3
      %p244 = scmp.lt.s32.totalorder %s20, 0
      %s245 = scalar_select %p244, %s20, 0
      %s246 = sadd.s32 %s245, %s243
      %s247 = smul.addr %s246, 8
      %s248 = scalar_lea.vmem %s3, %s247
      %v250 = vld [vmem:[%s225] sm:$0xf]
      %v251 = vld [vmem:[%s225 + $0x4] sm:$0xf]
      %v252 = vld [vmem:[%s225 + $0x8] sm:$0xf]
      %v253 = vld [vmem:[%s225 + $0xc] sm:$0xf]
      %v254 = vld [vmem:[%s231] sm:$0xf]
      %v255 = vld [vmem:[%s231 + $0x4] sm:$0xf]
      %v256 = vld [vmem:[%s231 + $0x8] sm:$0xf]
      %v257 = vld [vmem:[%s231 + $0xc] sm:$0xf]
      %v258 = vld [vmem:[%s231 + $0x10] sm:$0xf]
      %v259 = vld [vmem:[%s231 + $0x14] sm:$0xf]
      %v260 = vld [vmem:[%s231 + $0x18] sm:$0xf]
      %v261 = vld [vmem:[%s231 + $0x1c] sm:$0xf]
      %v262 = vld [vmem:[%s231 + $0x20] sm:$0xf]
      %v263 = vld [vmem:[%s231 + $0x24] sm:$0xf]
      %v264 = vld [vmem:[%s231 + $0x28] sm:$0xf]
      %v265 = vld [vmem:[%s231 + $0x2c] sm:$0xf]
      %v266 = vld [vmem:[%s231 + $0x30] sm:$0xf]
      %v267 = vld [vmem:[%s231 + $0x34] sm:$0xf]
      %v268 = vld [vmem:[%s231 + $0x38] sm:$0xf]
      %v269 = vld [vmem:[%s231 + $0x3c] sm:$0xf]
      %v274 = vunpack.c.l.b16 %v250
      %v275 = vunpack.c.l.b16 %v251
      %v276 = vunpack.c.l.b16 %v252
      %v277 = vunpack.c.l.b16 %v253
      %v278 = vpack.c.b16 %v275, %v274
      %v279 = vpack.c.b16 %v277, %v276
      %v298 = vunpack.c.l.b16 %v254
      %v299 = vunpack.c.l.b16 %v255
      %v300 = vunpack.c.l.b16 %v256
      %v301 = vunpack.c.l.b16 %v257
      %v302 = vunpack.c.l.b16 %v258
      %v303 = vunpack.c.l.b16 %v259
      %v304 = vunpack.c.l.b16 %v260
      %v305 = vunpack.c.l.b16 %v261
      %v306 = vunpack.c.l.b16 %v262
      %v307 = vunpack.c.l.b16 %v263
      %v308 = vunpack.c.l.b16 %v264
      %v309 = vunpack.c.l.b16 %v265
      %v310 = vunpack.c.l.b16 %v266
      %v311 = vunpack.c.l.b16 %v267
      %v312 = vunpack.c.l.b16 %v268
      %v313 = vunpack.c.l.b16 %v269
      %v314 = vpack.c.b16 %v299, %v298
      %v315 = vpack.c.b16 %v301, %v300
      %v316 = vpack.c.b16 %v303, %v302
      %v317 = vpack.c.b16 %v305, %v304
      %v318 = vpack.c.b16 %v307, %v306
      %v319 = vpack.c.b16 %v309, %v308
      %v320 = vpack.c.b16 %v311, %v310
      %v321 = vpack.c.b16 %v313, %v312
      %330 = vmatprep.subr.bf16.mxu0 0
      %331 = vmatpush1.bf16.msra.mxu0 %v321
      %332 = vmatprep.subr.bf16.mxu0 0
      %333 = vmatpush1.bf16.msra.mxu0 %v320
      %334 = vmatprep.subr.bf16.mxu0 0
      %335 = vmatpush1.bf16.msra.mxu0 %v319
      %336 = vmatprep.subr.bf16.mxu0 0
      %337 = vmatpush1.bf16.msra.mxu0 %v318
      %338 = vmatprep.subr.bf16.mxu0 0
      %339 = vmatpush1.bf16.msra.mxu0 %v317
      %340 = vmatprep.subr.bf16.mxu0 0
      %341 = vmatpush1.bf16.msra.mxu0 %v316
      %342 = vmatprep.subr.bf16.mxu0 0
      %343 = vmatpush1.bf16.msra.mxu0 %v315
      %344 = vmatprep.subr.bf16.mxu0 0
      %345 = vmatpush1.bf16.msra.mxu0 %v314
      %346 = vmatprep.subr.bf16.mxu0 0
      %347 = vmatpush2.bf16.msra.mxu0 0
      %348 = vmatprep.subr.bf16.mxu0 0
      %349 = vmatpush2.bf16.msra.mxu0 0
      %350 = vmatprep.subr.bf16.mxu0 0
      %351 = vmatpush2.bf16.msra.mxu0 0
      %352 = vmatprep.subr.bf16.mxu0 0
      %353 = vmatpush2.bf16.msra.mxu0 0
      %354 = vmatprep.subr.bf16.mxu0 0
      %355 = vmatpush2.bf16.msra.mxu0 0
      %356 = vmatprep.subr.bf16.mxu0 0
      %357 = vmatpush2.bf16.msra.mxu0 0
      %358 = vmatprep.subr.bf16.mxu0 0
      %359 = vmatpush2.bf16.msra.mxu0 0
      %360 = vmatprep.subr.bf16.mxu0 0
      %361 = vmatpush2.bf16.msra.mxu0 0
      %362 = vmatprep.mubr.bf16.mxu0 0
      %363 = vmatmul.mubr.bf16.gmra.mxu0 %v278
      %v364 = vpop.f32.mrf.mxu0
      %v365 = vadd.f32 0.0, %v364
      %v366 = vpop.f32.mrf.mxu0
      %v367 = vpop.f32.mrf.mxu0
      %v368 = vadd.f32 0.0, %v367
      %v369 = vpop.f32.mrf.mxu0
      %370 = vmatprep.mubr.bf16.mxu0 0
      %371 = vmatmul.mubr.bf16.gmra.mxu0 %v279
      %v372 = vpop.f32.mrf.mxu0
      %v373 = vadd.f32 0.0, %v372
      %v374 = vpop.f32.mrf.mxu0
      %v375 = vpop.f32.mrf.mxu0
      %v376 = vadd.f32 0.0, %v375
      %v377 = vpop.f32.mrf.mxu0
      %378 = vdwg.mxu0
      %vm379 = vcmask 261120
      %380 = vst.msk [vmem:[%s240] sm:$0xff] %vm379, %v365
      %381 = vst.msk [vmem:[%s240 + $0x8] sm:$0xff] %vm379, %v368
      %382 = vst.msk [vmem:[%s240 + $0x10] sm:$0xff] %vm379, %v373
      %383 = vst.msk [vmem:[%s240 + $0x18] sm:$0xff] %vm379, %v376
      %v384 = vsel %vm379, %v365, 0.0
      %v385 = vsel %vm379, %v368, 0.0
      %v386 = vadd.f32 %v384, %v385
      %v387 = vsel %vm379, %v373, 0.0
      %v388 = vadd.f32 %v386, %v387
      %v389 = vsel %vm379, %v376, 0.0
      %v390 = vadd.f32 %v388, %v389
      %v391 = vrot.slane %v390, 4
      %v392 = vadd.f32 %v390, %v391
      %v393 = vrot.slane %v392, 2
      %v394 = vadd.f32 %v392, %v393
      %v395 = vrot.slane %v394, 1
      %v396 = vadd.f32 %v394, %v395
      %vm397 = vcmask 253952
      %398 = vst.msk [vmem:[%s248] sm:$0x1] %vm397, %v396
      %v399 = vmul.f32 %v365, %v365
      %v400 = vmul.f32 %v368, %v368
      %v401 = vmul.f32 %v373, %v373
      %v402 = vmul.f32 %v376, %v376
      %v403 = vsel %vm379, %v399, 0.0
      %v404 = vsel %vm379, %v400, 0.0
      %v405 = vadd.f32 %v403, %v404
      %v406 = vsel %vm379, %v401, 0.0
      %v407 = vadd.f32 %v405, %v406
      %v408 = vsel %vm379, %v402, 0.0
      %v409 = vadd.f32 %v407, %v408
      %v410 = vrot.slane %v409, 4
      %v411 = vadd.f32 %v409, %v410
      %v412 = vrot.slane %v411, 2
      %v413 = vadd.f32 %v411, %v412
      %v414 = vrot.slane %v413, 1
      %v415 = vadd.f32 %v413, %v414
      %416 = vst.msk [vmem:[%s248 + $0x1] sm:$0x1] %vm397, %v415
      %vm417 = vcmask 259072
      %418 = vst.msk [vmem:[%s248 + $0x2] sm:$0x3f] %vm417, 0.0
      %s419 = smul.u32 4, %s20
      %p420 = scmp.lt.s32.totalorder %s19, 3
      %s421 = scalar_select %p420, %s19, 3
      %p422 = scmp.lt.s32.totalorder %s419, 3
      %s423 = scalar_select %p422, %s419, 3
      %s424 = smul.addr %s421, 4
      %s425 = sadd.s32 %s423, %s424
      %s426 = smul.addr %s425, 8
      %s427 = scalar_lea.vmem %s2, %s426
      %p428 = scmp.lt.s32.totalorder %s19, 3
      %s429 = scalar_select %p428, %s19, 3
      %p430 = scmp.lt.s32.totalorder %s20, 0
      %s431 = scalar_select %p430, %s20, 0
      %s432 = sadd.s32 %s431, %s429
      %s433 = smul.addr %s432, 8
      %s434 = scalar_lea.vmem %s3, %s433
      // Predicated region
      $region29: #{generator_forward.9} parent=27 // pred_check
        %p435 = pneg %p101
      $region30: #{generator_forward.9} parent=27 // pred_check_branch
        %437 = sbr.rel (%p435) target = $region32
      $region31: #{generator_forward.9} parent=27 // pred_region
        %s438 = smul.u32 4, %s20
      $region32: #{generator_forward.9} parent=27 // pred_fallthru
        _
      // Predicated region
      $region33: #{generator_forward.9} parent=27 // pred_check
        %p439 = pneg %p129
      $region34: #{generator_forward.9} parent=27 // pred_check_branch
        %441 = sbr.rel (%p439) target = $region36
      $region35: #{generator_forward.9} parent=27 // pred_region
        _
      $region36: #{generator_forward.9} parent=27 // pred_fallthru
        _
    $region28: #{generator_forward.9} parent=5 // pred_fallthru
      _
    %p442 = scmp.le.s32.totalorder 2, %s10
    // Predicated region
    $region37: #{generator_forward.9} parent=5 // pred_check
      %p443 = pneg %p442
    $region38: #{generator_forward.9} parent=5 // pred_check_branch
      %445 = sbr.rel (%p443) target = $region40
    $region39: #{generator_forward.9} parent=5 // pred_region
      %s446 = ssub.s32 %s10, 2
      // Predicated region
      $region41: #{generator_forward.9} parent=39 // pred_check
        %p447 = pneg %p107
      $region42: #{generator_forward.9} parent=39 // pred_check_branch
        %449 = sbr.rel (%p447) target = $region44
      $region43: #{generator_forward.9} parent=39 // pred_region
        %s450 = smul.u32 4, %s22
        %p451 = scmp.lt.s32.totalorder %s21, 3
        %s452 = scalar_select %p451, %s21, 3
        %p453 = scmp.lt.s32.totalorder %s450, 3
        %s454 = scalar_select %p453, %s450, 3
        %s455 = smul.addr %s452, 4
        %s456 = sadd.s32 %s454, %s455
        %s457 = smul.addr %s456, 8
        %s458 = scalar_lea.vmem %s2, %s457
      $region44: #{generator_forward.9} parent=39 // pred_fallthru
        _
      // Predicated region
      $region45: #{generator_forward.9} parent=39 // pred_check
        %p459 = pneg %p135
      $region46: #{generator_forward.9} parent=39 // pred_check_branch
        %461 = sbr.rel (%p459) target = $region48
      $region47: #{generator_forward.9} parent=39 // pred_region
        %p462 = scmp.lt.s32.totalorder %s21, 3
        %s463 = scalar_select %p462, %s21, 3
        %p464 = scmp.lt.s32.totalorder %s22, 0
        %s465 = scalar_select %p464, %s22, 0
        %s466 = sadd.s32 %s465, %s463
        %s467 = smul.addr %s466, 8
        %s468 = scalar_lea.vmem %s3, %s467
      $region48: #{generator_forward.9} parent=39 // pred_fallthru
        _
    $region40: #{generator_forward.9} parent=5 // pred_fallthru
      _
  $region6: #{generator_forward.9} parent=0 // loop_footer
    %s14 = sadd.s32 1, %s10
  $region7: #{generator_forward.9} parent=0 // loop_footer_branch
    %9 = sbr.rel target = $region3
  $region8: #{generator_forward.9} parent=0 // loop_exit
    _

// kernel: generator_forward.11
$region0: #{generator_forward.11}
  #allocation0 [shape = 'u32[]', space=smem, size = 0x4, offset = 0x4, fixed_abs, tag = 'smem constant byte address 0x4 - core index']
  #allocation1 [shape = 'u32[144,128]{1,0:T(1,128)}', space=vmem, size = 0x12000, scoped, tag = 'internal scratch']
  %s0 = inlined_call_operand.vmem [shape: bf16[4,128,128], index: 0, kind: input, shape index: {}]
  %s1 = inlined_call_operand.vmem [shape: bf16[4,128,16], index: 1, kind: input, shape index: {}]
  %s2 = inlined_call_operand.vmem [shape: f32[4,128,16], index: 2, kind: output, shape index: {0}]
  %s3 = inlined_call_operand.vmem [shape: f32[4,8,16], index: 3, kind: output, shape index: {1}]
  %4 = xla_tuple %s2, %s3
  %s5 = sld [smem:[#allocation0]]
  $region49: #{generator_forward.11} parent=0
    _
  %s7 = ssub.s32 1, %s5
  %s8 = scalar_select 0, %s7, %s5
  loop: start=0, step=1, limit=6
  $region2: #{generator_forward.11} parent=0 // loop_pre_header
    _
  $region3: #{generator_forward.11} parent=0 // loop_header
    %s10 = sphi 0, %s14
    %p11 = scmp.ge.s32.totalorder %s10, 6
    %s17 = sphi 0, %s29
    %s18 = sphi 0, %s25
    %s19 = sphi 0, %s17
    %s20 = sphi 0, %s18
    %s21 = sphi 0, %s19
    %s22 = sphi 0, %s20
    %s34 = sphi 0, %s36
    %s37 = sphi 0, %s34
    %s38 = sphi 0, %s37
    %s54 = sphi 0, %s38
    %s60 = sphi 0, %s62
    %s63 = sphi 0, %s60
    %s64 = sphi 0, %s63
    %s80 = sphi 0, %s64
    %s88 = sphi 0, %s90
    %s91 = sphi 0, %s88
    %s92 = sphi 0, %s91
    %s108 = sphi 0, %s92
    %s116 = sphi 0, %s118
    %s119 = sphi 0, %s116
    %s120 = sphi 0, %s119
    %s136 = sphi 0, %s120
  $region4: #{generator_forward.11} parent=0 // loop_header_branch
    %13 = sbr.rel (%p11) target = $region8
  $region5: #{generator_forward.11} parent=0 // loop_body
    %s15 = ssub.s32 %s10, 1
    %s16 = ssub.s32 %s10, 2
    %s23 = sadd.s32 1, %s18
    %p24 = scmp.ge.s32.totalorder %s23, 1
    %s25 = scalar_select %p24, 0, %s23
    %s26 = sadd.s32 1, %s17
    %s27 = scalar_select %p24, %s26, %s17
    %p28 = scmp.ge.s32.totalorder %s27, 4
    %s29 = scalar_select %p28, 0, %s27
    %s30 = ssub.s32 %s17, %s29
    %s31 = ssub.s32 %s18, %s25
    %s32 = sor.u32 %s30, %s31
    %p33 = scmp.eq.s32.totalorder %s32, 0
    %s35 = sadd.s32 %s34, 1
    %s36 = scalar_select %p33, %s34, %s35
    %p39 = pneg %p33
    %p40 = scmp.eq.s32.totalorder %s10, 3
    %p41 = por %p39, %p40
    %p42 = scmp.ne.s32.totalorder %s34, %s37
    %p43 = scmp.eq.s32.totalorder %s10, 0
    %p44 = por %p42, %p43
    %p45 = scmp.ne.s32.totalorder %s34, %s37
    %p46 = scmp.eq.s32.totalorder %s15, 3
    %p47 = por %p45, %p46
    %p48 = scmp.ne.s32.totalorder %s37, %s38
    %p49 = scmp.eq.s32.totalorder %s15, 0
    %p50 = por %p48, %p49
    %p51 = scmp.ne.s32.totalorder %s37, %s38
    %p52 = scmp.eq.s32.totalorder %s16, 3
    %p53 = por %p51, %p52
    %p55 = scmp.ne.s32.totalorder %s38, %s54
    %p56 = scmp.eq.s32.totalorder %s16, 0
    %p57 = por %p55, %p56
    %s58 = ssub.s32 %s17, %s29
    %p59 = scmp.eq.s32.totalorder %s58, 0
    %s61 = sadd.s32 %s60, 1
    %s62 = scalar_select %p59, %s60, %s61
    %p65 = pneg %p59
    %p66 = scmp.eq.s32.totalorder %s10, 3
    %p67 = por %p65, %p66
    %p68 = scmp.ne.s32.totalorder %s60, %s63
    %p69 = scmp.eq.s32.totalorder %s10, 0
    %p70 = por %p68, %p69
    %p71 = scmp.ne.s32.totalorder %s60, %s63
    %p72 = scmp.eq.s32.totalorder %s15, 3
    %p73 = por %p71, %p72
    %p74 = scmp.ne.s32.totalorder %s63, %s64
    %p75 = scmp.eq.s32.totalorder %s15, 0
    %p76 = por %p74, %p75
    %p77 = scmp.ne.s32.totalorder %s63, %s64
    %p78 = scmp.eq.s32.totalorder %s16, 3
    %p79 = por %p77, %p78
    %p81 = scmp.ne.s32.totalorder %s64, %s80
    %p82 = scmp.eq.s32.totalorder %s16, 0
    %p83 = por %p81, %p82
    %s84 = ssub.s32 %s17, %s29
    %s85 = ssub.s32 %s18, %s25
    %s86 = sor.u32 %s84, %s85
    %p87 = scmp.eq.s32.totalorder %s86, 0
    %s89 = sadd.s32 %s88, 1
    %s90 = scalar_select %p87, %s88, %s89
    %p93 = pneg %p87
    %p94 = scmp.eq.s32.totalorder %s10, 3
    %p95 = por %p93, %p94
    %p96 = scmp.ne.s32.totalorder %s88, %s91
    %p97 = scmp.eq.s32.totalorder %s10, 0
    %p98 = por %p96, %p97
    %p99 = scmp.ne.s32.totalorder %s88, %s91
    %p100 = scmp.eq.s32.totalorder %s15, 3
    %p101 = por %p99, %p100
    %p102 = scmp.ne.s32.totalorder %s91, %s92
    %p103 = scmp.eq.s32.totalorder %s15, 0
    %p104 = por %p102, %p103
    %p105 = scmp.ne.s32.totalorder %s91, %s92
    %p106 = scmp.eq.s32.totalorder %s16, 3
    %p107 = por %p105, %p106
    %p109 = scmp.ne.s32.totalorder %s92, %s108
    %p110 = scmp.eq.s32.totalorder %s16, 0
    %p111 = por %p109, %p110
    %s112 = ssub.s32 %s17, %s29
    %s113 = ssub.s32 %s18, %s25
    %s114 = sor.u32 %s112, %s113
    %p115 = scmp.eq.s32.totalorder %s114, 0
    %s117 = sadd.s32 %s116, 1
    %s118 = scalar_select %p115, %s116, %s117
    %p121 = pneg %p115
    %p122 = scmp.eq.s32.totalorder %s10, 3
    %p123 = por %p121, %p122
    %p124 = scmp.ne.s32.totalorder %s116, %s119
    %p125 = scmp.eq.s32.totalorder %s10, 0
    %p126 = por %p124, %p125
    %p127 = scmp.ne.s32.totalorder %s116, %s119
    %p128 = scmp.eq.s32.totalorder %s15, 3
    %p129 = por %p127, %p128
    %p130 = scmp.ne.s32.totalorder %s119, %s120
    %p131 = scmp.eq.s32.totalorder %s15, 0
    %p132 = por %p130, %p131
    %p133 = scmp.ne.s32.totalorder %s119, %s120
    %p134 = scmp.eq.s32.totalorder %s16, 3
    %p135 = por %p133, %p134
    %p137 = scmp.ne.s32.totalorder %s120, %s136
    %p138 = scmp.eq.s32.totalorder %s16, 0
    %p139 = por %p137, %p138
    %p140 = scmp.le.s32.totalorder 1, %s10
    %p141 = scmp.lt.s32.totalorder %s10, 5
    %p142 = pnand %p140, %p141
    %p143 = pneg %p142
    // Predicated region
    $region9: #{generator_forward.11} parent=5 // pred_check
      _
    $region10: #{generator_forward.11} parent=5 // pred_check_branch
      %145 = sbr.rel (%p142) target = $region12
    $region11: #{generator_forward.11} parent=5 // pred_region
      %s146 = ssub.s32 %s10, 1
    $region12: #{generator_forward.11} parent=5 // pred_fallthru
      _
    %p147 = scmp.lt.s32.totalorder %s10, 4
    // Predicated region
    $region13: #{generator_forward.11} parent=5 // pred_check
      %p148 = pneg %p147
    $region14: #{generator_forward.11} parent=5 // pred_check_branch
      %150 = sbr.rel (%p148) target = $region16
    $region15: #{generator_forward.11} parent=5 // pred_region
      // Predicated region
      $region17: #{generator_forward.11} parent=15 // pred_check
        %p151 = pneg %p44
      $region18: #{generator_forward.11} parent=15 // pred_check_branch
        %153 = sbr.rel (%p151) target = $region20
      $region19: #{generator_forward.11} parent=15 // pred_region
        %s154 = smul.u32 16, %s18
        %p155 = scmp.lt.s32.totalorder %s17, 3
        %s156 = scalar_select %p155, %s17, 3
        %p157 = scmp.lt.s32.totalorder %s154, 15
        %s158 = scalar_select %p157, %s154, 15
        %s159 = smul.addr %s156, 16
        %s160 = sadd.s32 %s158, %s159
        %s161 = smul.addr %s160, 4
        %s162 = scalar_lea.vmem %s0, %s161
        %s163 = smul.u32 16, %s18
      $region20: #{generator_forward.11} parent=15 // pred_fallthru
        _
      // Predicated region
      $region21: #{generator_forward.11} parent=15 // pred_check
        %p164 = pneg %p70
      $region22: #{generator_forward.11} parent=15 // pred_check_branch
        %166 = sbr.rel (%p164) target = $region24
      $region23: #{generator_forward.11} parent=15 // pred_region
        %p167 = scmp.lt.s32.totalorder %s17, 3
        %s168 = scalar_select %p167, %s17, 3
        %s169 = smul.addr %s168, 16
        %s170 = smul.addr %s169, 4
        %s171 = scalar_lea.vmem %s1, %s170
      $region24: #{generator_forward.11} parent=15 // pred_fallthru
        _
    $region16: #{generator_forward.11} parent=5 // pred_fallthru
      _
    %p172 = scmp.le.s32.totalorder 1, %s10
    %p173 = scmp.lt.s32.totalorder %s10, 5
    %p174 = pnand %p172, %p173
    %p175 = pneg %p174
    // Predicated region
    $region25: #{generator_forward.11} parent=5 // pred_check
      _
    $region26: #{generator_forward.11} parent=5 // pred_check_branch
      %177 = sbr.rel (%p174) target = $region28
    $region27: #{generator_forward.11} parent=5 // pred_region
      %s178 = ssub.s32 %s10, 1
      %s179 = smul.u32 16, %s20
      %p180 = scmp.lt.s32.totalorder %s19, 3
      %s181 = scalar_select %p180, %s19, 3
      %p182 = scmp.lt.s32.totalorder %s179, 15
      %s183 = scalar_select %p182, %s179, 15
      %s184 = smul.addr %s181, 16
      %s185 = sadd.s32 %s183, %s184
      %s186 = smul.addr %s185, 4
      %s187 = scalar_lea.vmem %s0, %s186
      %p188 = pneg %p50
      %p189 = pneg %p47
      %p190 = scmp.lt.s32.totalorder %s19, 3
      %s191 = scalar_select %p190, %s19, 3
      %s192 = smul.addr %s191, 16
      %s193 = smul.addr %s192, 4
      %s194 = scalar_lea.vmem %s1, %s193
      %p195 = pneg %p76
      %p196 = pneg %p73
      %p197 = pneg %p104
      %p198 = pneg %p101
      %s199 = smul.u32 16, %s20
      %p200 = scmp.lt.s32.totalorder %s19, 3
      %s201 = scalar_select %p200, %s19, 3
      %p202 = scmp.lt.s32.totalorder %s199, 15
      %s203 = scalar_select %p202, %s199, 15
      %s204 = smul.addr %s201, 16
      %s205 = sadd.s32 %s203, %s204
      %s206 = smul.addr %s205, 8
      %s207 = scalar_lea.vmem %s2, %s206
      %p208 = pneg %p132
      %p209 = pneg %p129
      %p210 = scmp.lt.s32.totalorder %s19, 3
      %s211 = scalar_select %p210, %s19, 3
      %p212 = scmp.lt.s32.totalorder %s20, 0
      %s213 = scalar_select %p212, %s20, 0
      %s214 = sadd.s32 %s213, %s211
      %s215 = smul.addr %s214, 8
      %s216 = scalar_lea.vmem %s3, %s215
      %s217 = smul.u32 16, %s20
      %p218 = scmp.lt.s32.totalorder %s19, 3
      %s219 = scalar_select %p218, %s19, 3
      %p220 = scmp.lt.s32.totalorder %s217, 15
      %s221 = scalar_select %p220, %s217, 15
      %s222 = smul.addr %s219, 16
      %s223 = sadd.s32 %s221, %s222
      %s224 = smul.addr %s223, 4
      %s225 = scalar_lea.vmem %s0, %s224
      %s226 = smul.u32 16, %s20
      %p227 = scmp.lt.s32.totalorder %s19, 3
      %s228 = scalar_select %p227, %s19, 3
      %s229 = smul.addr %s228, 16
      %s230 = smul.addr %s229, 4
      %s231 = scalar_lea.vmem %s1, %s230
      %s232 = smul.u32 16, %s20
      %p233 = scmp.lt.s32.totalorder %s19, 3
      %s234 = scalar_select %p233, %s19, 3
      %p235 = scmp.lt.s32.totalorder %s232, 15
      %s236 = scalar_select %p235, %s232, 15
      %s237 = smul.addr %s234, 16
      %s238 = sadd.s32 %s236, %s237
      %s239 = smul.addr %s238, 8
      %s240 = scalar_lea.vmem %s2, %s239
      %s241 = smul.u32 16, %s20
      %p242 = scmp.lt.s32.totalorder %s19, 3
      %s243 = scalar_select %p242, %s19, 3
      %p244 = scmp.lt.s32.totalorder %s20, 0
      %s245 = scalar_select %p244, %s20, 0
      %s246 = sadd.s32 %s245, %s243
      %s247 = smul.addr %s246, 8
      %s248 = scalar_lea.vmem %s3, %s247
      %v250 = vld [vmem:[%s225] sm:$0xf]
      %v251 = vld [vmem:[%s225 + $0x4] sm:$0xf]
      %v252 = vld [vmem:[%s225 + $0x8] sm:$0xf]
      %v253 = vld [vmem:[%s225 + $0xc] sm:$0xf]
      %v254 = vld [vmem:[%s225 + $0x10] sm:$0xf]
      %v255 = vld [vmem:[%s225 + $0x14] sm:$0xf]
      %v256 = vld [vmem:[%s225 + $0x18] sm:$0xf]
      %v257 = vld [vmem:[%s225 + $0x1c] sm:$0xf]
      %v258 = vld [vmem:[%s225 + $0x20] sm:$0xf]
      %v259 = vld [vmem:[%s225 + $0x24] sm:$0xf]
      %v260 = vld [vmem:[%s225 + $0x28] sm:$0xf]
      %v261 = vld [vmem:[%s225 + $0x2c] sm:$0xf]
      %v262 = vld [vmem:[%s225 + $0x30] sm:$0xf]
      %v263 = vld [vmem:[%s225 + $0x34] sm:$0xf]
      %v264 = vld [vmem:[%s225 + $0x38] sm:$0xf]
      %v265 = vld [vmem:[%s225 + $0x3c] sm:$0xf]
      %v266 = vld [vmem:[%s231] sm:$0xf]
      %v267 = vld [vmem:[%s231 + $0x4] sm:$0xf]
      %v268 = vld [vmem:[%s231 + $0x8] sm:$0xf]
      %v269 = vld [vmem:[%s231 + $0xc] sm:$0xf]
      %v270 = vld [vmem:[%s231 + $0x10] sm:$0xf]
      %v271 = vld [vmem:[%s231 + $0x14] sm:$0xf]
      %v272 = vld [vmem:[%s231 + $0x18] sm:$0xf]
      %v273 = vld [vmem:[%s231 + $0x1c] sm:$0xf]
      %v274 = vld [vmem:[%s231 + $0x20] sm:$0xf]
      %v275 = vld [vmem:[%s231 + $0x24] sm:$0xf]
      %v276 = vld [vmem:[%s231 + $0x28] sm:$0xf]
      %v277 = vld [vmem:[%s231 + $0x2c] sm:$0xf]
      %v278 = vld [vmem:[%s231 + $0x30] sm:$0xf]
      %v279 = vld [vmem:[%s231 + $0x34] sm:$0xf]
      %v280 = vld [vmem:[%s231 + $0x38] sm:$0xf]
      %v281 = vld [vmem:[%s231 + $0x3c] sm:$0xf]
      %v298 = vunpack.c.l.b16 %v250
      %v299 = vunpack.c.l.b16 %v251
      %v300 = vunpack.c.l.b16 %v252
      %v301 = vunpack.c.l.b16 %v253
      %v302 = vunpack.c.l.b16 %v254
      %v303 = vunpack.c.l.b16 %v255
      %v304 = vunpack.c.l.b16 %v256
      %v305 = vunpack.c.l.b16 %v257
      %v306 = vunpack.c.l.b16 %v258
      %v307 = vunpack.c.l.b16 %v259
      %v308 = vunpack.c.l.b16 %v260
      %v309 = vunpack.c.l.b16 %v261
      %v310 = vunpack.c.l.b16 %v262
      %v311 = vunpack.c.l.b16 %v263
      %v312 = vunpack.c.l.b16 %v264
      %v313 = vunpack.c.l.b16 %v265
      %v314 = vpack.c.b16 %v299, %v298
      %v315 = vpack.c.b16 %v301, %v300
      %v316 = vpack.c.b16 %v303, %v302
      %v317 = vpack.c.b16 %v305, %v304
      %v318 = vpack.c.b16 %v307, %v306
      %v319 = vpack.c.b16 %v309, %v308
      %v320 = vpack.c.b16 %v311, %v310
      %v321 = vpack.c.b16 %v313, %v312
      %v346 = vunpack.c.l.b16 %v266
      %v347 = vunpack.c.l.b16 %v267
      %v348 = vunpack.c.l.b16 %v268
      %v349 = vunpack.c.l.b16 %v269
      %v350 = vunpack.c.l.b16 %v270
      %v351 = vunpack.c.l.b16 %v271
      %v352 = vunpack.c.l.b16 %v272
      %v353 = vunpack.c.l.b16 %v273
      %v354 = vunpack.c.l.b16 %v274
      %v355 = vunpack.c.l.b16 %v275
      %v356 = vunpack.c.l.b16 %v276
      %v357 = vunpack.c.l.b16 %v277
      %v358 = vunpack.c.l.b16 %v278
      %v359 = vunpack.c.l.b16 %v279
      %v360 = vunpack.c.l.b16 %v280
      %v361 = vunpack.c.l.b16 %v281
      %v362 = vpack.c.b16 %v347, %v346
      %v363 = vpack.c.b16 %v349, %v348
      %v364 = vpack.c.b16 %v351, %v350
      %v365 = vpack.c.b16 %v353, %v352
      %v366 = vpack.c.b16 %v355, %v354
      %v367 = vpack.c.b16 %v357, %v356
      %v368 = vpack.c.b16 %v359, %v358
      %v369 = vpack.c.b16 %v361, %v360
      %378 = vmatprep.subr.bf16.mxu0 0
      %379 = vmatpush1.bf16.msra.mxu0 %v369
      %380 = vmatprep.subr.bf16.mxu0 0
      %381 = vmatpush1.bf16.msra.mxu0 %v368
      %382 = vmatprep.subr.bf16.mxu0 0
      %383 = vmatpush1.bf16.msra.mxu0 %v367
      %384 = vmatprep.subr.bf16.mxu0 0
      %385 = vmatpush1.bf16.msra.mxu0 %v366
      %386 = vmatprep.subr.bf16.mxu0 0
      %387 = vmatpush1.bf16.msra.mxu0 %v365
      %388 = vmatprep.subr.bf16.mxu0 0
      %389 = vmatpush1.bf16.msra.mxu0 %v364
      %390 = vmatprep.subr.bf16.mxu0 0
      %391 = vmatpush1.bf16.msra.mxu0 %v363
      %392 = vmatprep.subr.bf16.mxu0 0
      %393 = vmatpush1.bf16.msra.mxu0 %v362
      %394 = vmatprep.subr.bf16.mxu0 0
      %395 = vmatpush2.bf16.msra.mxu0 0
      %396 = vmatprep.subr.bf16.mxu0 0
      %397 = vmatpush2.bf16.msra.mxu0 0
      %398 = vmatprep.subr.bf16.mxu0 0
      %399 = vmatpush2.bf16.msra.mxu0 0
      %400 = vmatprep.subr.bf16.mxu0 0
      %401 = vmatpush2.bf16.msra.mxu0 0
      %402 = vmatprep.subr.bf16.mxu0 0
      %403 = vmatpush2.bf16.msra.mxu0 0
      %404 = vmatprep.subr.bf16.mxu0 0
      %405 = vmatpush2.bf16.msra.mxu0 0
      %406 = vmatprep.subr.bf16.mxu0 0
      %407 = vmatpush2.bf16.msra.mxu0 0
      %408 = vmatprep.subr.bf16.mxu0 0
      %409 = vmatpush2.bf16.msra.mxu0 0
      %410 = vmatprep.mubr.bf16.mxu0 0
      %411 = vmatmul.mubr.bf16.gmra.mxu0 %v314
      %v412 = vpop.f32.mrf.mxu0
      %v413 = vadd.f32 0.0, %v412
      %v414 = vpop.f32.mrf.mxu0
      %v415 = vpop.f32.mrf.mxu0
      %v416 = vadd.f32 0.0, %v415
      %v417 = vpop.f32.mrf.mxu0
      %418 = vmatprep.mubr.bf16.mxu0 0
      %419 = vmatmul.mubr.bf16.gmra.mxu0 %v315
      %v420 = vpop.f32.mrf.mxu0
      %v421 = vadd.f32 0.0, %v420
      %v422 = vpop.f32.mrf.mxu0
      %v423 = vpop.f32.mrf.mxu0
      %v424 = vadd.f32 0.0, %v423
      %v425 = vpop.f32.mrf.mxu0
      %426 = vmatprep.mubr.bf16.mxu0 0
      %427 = vmatmul.mubr.bf16.gmra.mxu0 %v316
      %v428 = vpop.f32.mrf.mxu0
      %v429 = vadd.f32 0.0, %v428
      %v430 = vpop.f32.mrf.mxu0
      %v431 = vpop.f32.mrf.mxu0
      %v432 = vadd.f32 0.0, %v431
      %v433 = vpop.f32.mrf.mxu0
      %434 = vmatprep.mubr.bf16.mxu0 0
      %435 = vmatmul.mubr.bf16.gmra.mxu0 %v317
      %v436 = vpop.f32.mrf.mxu0
      %v437 = vadd.f32 0.0, %v436
      %v438 = vpop.f32.mrf.mxu0
      %v439 = vpop.f32.mrf.mxu0
      %v440 = vadd.f32 0.0, %v439
      %v441 = vpop.f32.mrf.mxu0
      %442 = vmatprep.mubr.bf16.mxu0 0
      %443 = vmatmul.mubr.bf16.gmra.mxu0 %v318
      %v444 = vpop.f32.mrf.mxu0
      %v445 = vadd.f32 0.0, %v444
      %v446 = vpop.f32.mrf.mxu0
      %v447 = vpop.f32.mrf.mxu0
      %v448 = vadd.f32 0.0, %v447
      %v449 = vpop.f32.mrf.mxu0
      %450 = vmatprep.mubr.bf16.mxu0 0
      %451 = vmatmul.mubr.bf16.gmra.mxu0 %v319
      %v452 = vpop.f32.mrf.mxu0
      %v453 = vadd.f32 0.0, %v452
      %v454 = vpop.f32.mrf.mxu0
      %v455 = vpop.f32.mrf.mxu0
      %v456 = vadd.f32 0.0, %v455
      %v457 = vpop.f32.mrf.mxu0
      %458 = vmatprep.mubr.bf16.mxu0 0
      %459 = vmatmul.mubr.bf16.gmra.mxu0 %v320
      %v460 = vpop.f32.mrf.mxu0
      %v461 = vadd.f32 0.0, %v460
      %v462 = vpop.f32.mrf.mxu0
      %v463 = vpop.f32.mrf.mxu0
      %v464 = vadd.f32 0.0, %v463
      %v465 = vpop.f32.mrf.mxu0
      %466 = vmatprep.mubr.bf16.mxu0 0
      %467 = vmatmul.mubr.bf16.gmra.mxu0 %v321
      %v468 = vpop.f32.mrf.mxu0
      %v469 = vadd.f32 0.0, %v468
      %v470 = vpop.f32.mrf.mxu0
      %v471 = vpop.f32.mrf.mxu0
      %v472 = vadd.f32 0.0, %v471
      %v473 = vpop.f32.mrf.mxu0
      %474 = vdwg.mxu0
      %vm475 = vcmask 130048
      %476 = vst.msk [vmem:[%s240] sm:$0xff] %vm475, %v413
      %477 = vst.msk [vmem:[%s240 + $0x8] sm:$0xff] %vm475, %v416
      %478 = vst.msk [vmem:[%s240 + $0x10] sm:$0xff] %vm475, %v421
      %479 = vst.msk [vmem:[%s240 + $0x18] sm:$0xff] %vm475, %v424
      %480 = vst.msk [vmem:[%s240 + $0x20] sm:$0xff] %vm475, %v429
      %481 = vst.msk [vmem:[%s240 + $0x28] sm:$0xff] %vm475, %v432
      %482 = vst.msk [vmem:[%s240 + $0x30] sm:$0xff] %vm475, %v437
      %483 = vst.msk [vmem:[%s240 + $0x38] sm:$0xff] %vm475, %v440
      %484 = vst.msk [vmem:[%s240 + $0x40] sm:$0xff] %vm475, %v445
      %485 = vst.msk [vmem:[%s240 + $0x48] sm:$0xff] %vm475, %v448
      %486 = vst.msk [vmem:[%s240 + $0x50] sm:$0xff] %vm475, %v453
      %487 = vst.msk [vmem:[%s240 + $0x58] sm:$0xff] %vm475, %v456
      %488 = vst.msk [vmem:[%s240 + $0x60] sm:$0xff] %vm475, %v461
      %489 = vst.msk [vmem:[%s240 + $0x68] sm:$0xff] %vm475, %v464
      %490 = vst.msk [vmem:[%s240 + $0x70] sm:$0xff] %vm475, %v469
      %491 = vst.msk [vmem:[%s240 + $0x78] sm:$0xff] %vm475, %v472
      %v492 = vsel %vm475, %v413, 0.0
      %v493 = vsel %vm475, %v416, 0.0
      %v494 = vadd.f32 %v492, %v493
      %v495 = vsel %vm475, %v421, 0.0
      %v496 = vadd.f32 %v494, %v495
      %v497 = vsel %vm475, %v424, 0.0
      %v498 = vadd.f32 %v496, %v497
      %v499 = vsel %vm475, %v429, 0.0
      %v500 = vadd.f32 %v498, %v499
      %v501 = vsel %vm475, %v432, 0.0
      %v502 = vadd.f32 %v500, %v501
      %v503 = vsel %vm475, %v437, 0.0
      %v504 = vadd.f32 %v502, %v503
      %v505 = vsel %vm475, %v440, 0.0
      %v506 = vadd.f32 %v504, %v505
      %v507 = vsel %vm475, %v445, 0.0
      %v508 = vadd.f32 %v506, %v507
      %v509 = vsel %vm475, %v448, 0.0
      %v510 = vadd.f32 %v508, %v509
      %v511 = vsel %vm475, %v453, 0.0
      %v512 = vadd.f32 %v510, %v511
      %v513 = vsel %vm475, %v456, 0.0
      %v514 = vadd.f32 %v512, %v513
      %v515 = vsel %vm475, %v461, 0.0
      %v516 = vadd.f32 %v514, %v515
      %v517 = vsel %vm475, %v464, 0.0
      %v518 = vadd.f32 %v516, %v517
      %v519 = vsel %vm475, %v469, 0.0
      %v520 = vadd.f32 %v518, %v519
      %v521 = vsel %vm475, %v472, 0.0
      %v522 = vadd.f32 %v520, %v521
      %v523 = vrot.slane %v522, 4
      %v524 = vadd.f32 %v522, %v523
      %v525 = vrot.slane %v524, 2
      %v526 = vadd.f32 %v524, %v525
      %v527 = vrot.slane %v526, 1
      %v528 = vadd.f32 %v526, %v527
      %vm529 = vcmask 122880
      %530 = vst.msk [vmem:[%s248] sm:$0x1] %vm529, %v528
      %v531 = vmul.f32 %v413, %v413
      %v532 = vmul.f32 %v416, %v416
      %v533 = vmul.f32 %v421, %v421
      %v534 = vmul.f32 %v424, %v424
      %v535 = vmul.f32 %v429, %v429
      %v536 = vmul.f32 %v432, %v432
      %v537 = vmul.f32 %v437, %v437
      %v538 = vmul.f32 %v440, %v440
      %v539 = vmul.f32 %v445, %v445
      %v540 = vmul.f32 %v448, %v448
      %v541 = vmul.f32 %v453, %v453
      %v542 = vmul.f32 %v456, %v456
      %v543 = vmul.f32 %v461, %v461
      %v544 = vmul.f32 %v464, %v464
      %v545 = vmul.f32 %v469, %v469
      %v546 = vmul.f32 %v472, %v472
      %v547 = vsel %vm475, %v531, 0.0
      %v548 = vsel %vm475, %v532, 0.0
      %v549 = vadd.f32 %v547, %v548
      %v550 = vsel %vm475, %v533, 0.0
      %v551 = vadd.f32 %v549, %v550
      %v552 = vsel %vm475, %v534, 0.0
      %v553 = vadd.f32 %v551, %v552
      %v554 = vsel %vm475, %v535, 0.0
      %v555 = vadd.f32 %v553, %v554
      %v556 = vsel %vm475, %v536, 0.0
      %v557 = vadd.f32 %v555, %v556
      %v558 = vsel %vm475, %v537, 0.0
      %v559 = vadd.f32 %v557, %v558
      %v560 = vsel %vm475, %v538, 0.0
      %v561 = vadd.f32 %v559, %v560
      %v562 = vsel %vm475, %v539, 0.0
      %v563 = vadd.f32 %v561, %v562
      %v564 = vsel %vm475, %v540, 0.0
      %v565 = vadd.f32 %v563, %v564
      %v566 = vsel %vm475, %v541, 0.0
      %v567 = vadd.f32 %v565, %v566
      %v568 = vsel %vm475, %v542, 0.0
      %v569 = vadd.f32 %v567, %v568
      %v570 = vsel %vm475, %v543, 0.0
      %v571 = vadd.f32 %v569, %v570
      %v572 = vsel %vm475, %v544, 0.0
      %v573 = vadd.f32 %v571, %v572
      %v574 = vsel %vm475, %v545, 0.0
      %v575 = vadd.f32 %v573, %v574
      %v576 = vsel %vm475, %v546, 0.0
      %v577 = vadd.f32 %v575, %v576
      %v578 = vrot.slane %v577, 4
      %v579 = vadd.f32 %v577, %v578
      %v580 = vrot.slane %v579, 2
      %v581 = vadd.f32 %v579, %v580
      %v582 = vrot.slane %v581, 1
      %v583 = vadd.f32 %v581, %v582
      %584 = vst.msk [vmem:[%s248 + $0x1] sm:$0x1] %vm529, %v583
      %vm585 = vcmask 128000
      %586 = vst.msk [vmem:[%s248 + $0x2] sm:$0x3f] %vm585, 0.0
      %s587 = smul.u32 16, %s20
      %p588 = scmp.lt.s32.totalorder %s19, 3
      %s589 = scalar_select %p588, %s19, 3
      %p590 = scmp.lt.s32.totalorder %s587, 15
      %s591 = scalar_select %p590, %s587, 15
      %s592 = smul.addr %s589, 16
      %s593 = sadd.s32 %s591, %s592
      %s594 = smul.addr %s593, 8
      %s595 = scalar_lea.vmem %s2, %s594
      %p596 = scmp.lt.s32.totalorder %s19, 3
      %s597 = scalar_select %p596, %s19, 3
      %p598 = scmp.lt.s32.totalorder %s20, 0
      %s599 = scalar_select %p598, %s20, 0
      %s600 = sadd.s32 %s599, %s597
      %s601 = smul.addr %s600, 8
      %s602 = scalar_lea.vmem %s3, %s601
      // Predicated region
      $region29: #{generator_forward.11} parent=27 // pred_check
        %p603 = pneg %p101
      $region30: #{generator_forward.11} parent=27 // pred_check_branch
        %605 = sbr.rel (%p603) target = $region32
      $region31: #{generator_forward.11} parent=27 // pred_region
        %s606 = smul.u32 16, %s20
      $region32: #{generator_forward.11} parent=27 // pred_fallthru
        _
      // Predicated region
      $region33: #{generator_forward.11} parent=27 // pred_check
        %p607 = pneg %p129
      $region34: #{generator_forward.11} parent=27 // pred_check_branch
        %609 = sbr.rel (%p607) target = $region36
      $region35: #{generator_forward.11} parent=27 // pred_region
        _
      $region36: #{generator_forward.11} parent=27 // pred_fallthru
        _
    $region28: #{generator_forward.11} parent=5 // pred_fallthru
      _
    %p610 = scmp.le.s32.totalorder 2, %s10
    // Predicated region
    $region37: #{generator_forward.11} parent=5 // pred_check
      %p611 = pneg %p610
    $region38: #{generator_forward.11} parent=5 // pred_check_branch
      %613 = sbr.rel (%p611) target = $region40
    $region39: #{generator_forward.11} parent=5 // pred_region
      %s614 = ssub.s32 %s10, 2
      // Predicated region
      $region41: #{generator_forward.11} parent=39 // pred_check
        %p615 = pneg %p107
      $region42: #{generator_forward.11} parent=39 // pred_check_branch
        %617 = sbr.rel (%p615) target = $region44
      $region43: #{generator_forward.11} parent=39 // pred_region
        %s618 = smul.u32 16, %s22
        %p619 = scmp.lt.s32.totalorder %s21, 3
        %s620 = scalar_select %p619, %s21, 3
        %p621 = scmp.lt.s32.totalorder %s618, 15
        %s622 = scalar_select %p621, %s618, 15
        %s623 = smul.addr %s620, 16
        %s624 = sadd.s32 %s622, %s623
        %s625 = smul.addr %s624, 8
        %s626 = scalar_lea.vmem %s2, %s625
      $region44: #{generator_forward.11} parent=39 // pred_fallthru
        _
      // Predicated region
      $region45: #{generator_forward.11} parent=39 // pred_check
        %p627 = pneg %p135
      $region46: #{generator_forward.11} parent=39 // pred_check_branch
        %629 = sbr.rel (%p627) target = $region48
      $region47: #{generator_forward.11} parent=39 // pred_region
        %p630 = scmp.lt.s32.totalorder %s21, 3
        %s631 = scalar_select %p630, %s21, 3
        %p632 = scmp.lt.s32.totalorder %s22, 0
        %s633 = scalar_select %p632, %s22, 0
        %s634 = sadd.s32 %s633, %s631
        %s635 = smul.addr %s634, 8
        %s636 = scalar_lea.vmem %s3, %s635
      $region48: #{generator_forward.11} parent=39 // pred_fallthru
        _
    $region40: #{generator_forward.11} parent=5 // pred_fallthru
      _
  $region6: #{generator_forward.11} parent=0 // loop_footer
    %s14 = sadd.s32 1, %s10
  $region7: #{generator_forward.11} parent=0 // loop_footer_branch
    %9 = sbr.rel target = $region3
  $region8: #{generator_forward.11} parent=0 // loop_exit
    _

// kernel: generator_forward.12
$region0: #{generator_forward.12}
  #allocation0 [shape = 'u32[]', space=smem, size = 0x4, offset = 0x4, fixed_abs, tag = 'smem constant byte address 0x4 - core index']
  #allocation1 [shape = 'u32[144,128]{1,0:T(1,128)}', space=vmem, size = 0x12000, scoped, tag = 'internal scratch']
  %s0 = inlined_call_operand.vmem [shape: f32[512,16], index: 0, kind: input, shape index: {}]
  %s1 = inlined_call_operand.vmem [shape: f32[1,16], index: 1, kind: input, shape index: {}]
  %s2 = inlined_call_operand.vmem [shape: f32[1,16], index: 2, kind: input, shape index: {}]
  %s3 = inlined_call_operand.vmem [shape: bf16[512,16], index: 3, kind: output, shape index: {}]
  %s4 = sld [smem:[#allocation0]]
  $region22: #{generator_forward.12} parent=0
    _
  %s6 = ssub.s32 1, %s4
  %s7 = scalar_select 0, %s6, %s4
  // Predicated region
  $region2: #{generator_forward.12} parent=0 // pred_check
    _
  $region3: #{generator_forward.12} parent=0 // pred_check_branch
    %9 = sbr.rel (0) target = $region5
  $region4: #{generator_forward.12} parent=0 // pred_region
    _
  $region5: #{generator_forward.12} parent=0 // pred_fallthru
    _
  // Predicated region
  $region6: #{generator_forward.12} parent=0 // pred_check
    _
  $region7: #{generator_forward.12} parent=0 // pred_check_branch
    %11 = sbr.rel (0) target = $region9
  $region8: #{generator_forward.12} parent=0 // pred_region
    _
  $region9: #{generator_forward.12} parent=0 // pred_fallthru
    _
  // Predicated region
  $region10: #{generator_forward.12} parent=0 // pred_check
    _
  $region11: #{generator_forward.12} parent=0 // pred_check_branch
    %13 = sbr.rel (0) target = $region13
  $region12: #{generator_forward.12} parent=0 // pred_region
    _
  $region13: #{generator_forward.12} parent=0 // pred_fallthru
    _
  %v14 = vld [vmem:[%s0] sm:$0xff]
  %v15 = vld [vmem:[%s0 + $0x8] sm:$0xff]
  %v16 = vld [vmem:[%s0 + $0x10] sm:$0xff]
  %v17 = vld [vmem:[%s0 + $0x18] sm:$0xff]
  %v18 = vld [vmem:[%s0 + $0x20] sm:$0xff]
  %v19 = vld [vmem:[%s0 + $0x28] sm:$0xff]
  %v20 = vld [vmem:[%s0 + $0x30] sm:$0xff]
  %v21 = vld [vmem:[%s0 + $0x38] sm:$0xff]
  %v22 = vld [vmem:[%s0 + $0x40] sm:$0xff]
  %v23 = vld [vmem:[%s0 + $0x48] sm:$0xff]
  %v24 = vld [vmem:[%s0 + $0x50] sm:$0xff]
  %v25 = vld [vmem:[%s0 + $0x58] sm:$0xff]
  %v26 = vld [vmem:[%s0 + $0x60] sm:$0xff]
  %v27 = vld [vmem:[%s0 + $0x68] sm:$0xff]
  %v28 = vld [vmem:[%s0 + $0x70] sm:$0xff]
  %v29 = vld [vmem:[%s0 + $0x78] sm:$0xff]
  %v30 = vld [vmem:[%s0 + $0x80] sm:$0xff]
  %v31 = vld [vmem:[%s0 + $0x88] sm:$0xff]
  %v32 = vld [vmem:[%s0 + $0x90] sm:$0xff]
  %v33 = vld [vmem:[%s0 + $0x98] sm:$0xff]
  %v34 = vld [vmem:[%s0 + $0xa0] sm:$0xff]
  %v35 = vld [vmem:[%s0 + $0xa8] sm:$0xff]
  %v36 = vld [vmem:[%s0 + $0xb0] sm:$0xff]
  %v37 = vld [vmem:[%s0 + $0xb8] sm:$0xff]
  %v38 = vld [vmem:[%s0 + $0xc0] sm:$0xff]
  %v39 = vld [vmem:[%s0 + $0xc8] sm:$0xff]
  %v40 = vld [vmem:[%s0 + $0xd0] sm:$0xff]
  %v41 = vld [vmem:[%s0 + $0xd8] sm:$0xff]
  %v42 = vld [vmem:[%s0 + $0xe0] sm:$0xff]
  %v43 = vld [vmem:[%s0 + $0xe8] sm:$0xff]
  %v44 = vld [vmem:[%s0 + $0xf0] sm:$0xff]
  %v45 = vld [vmem:[%s0 + $0xf8] sm:$0xff]
  %v46 = vld [vmem:[%s0 + $0x100] sm:$0xff]
  %v47 = vld [vmem:[%s0 + $0x108] sm:$0xff]
  %v48 = vld [vmem:[%s0 + $0x110] sm:$0xff]
  %v49 = vld [vmem:[%s0 + $0x118] sm:$0xff]
  %v50 = vld [vmem:[%s0 + $0x120] sm:$0xff]
  %v51 = vld [vmem:[%s0 + $0x128] sm:$0xff]
  %v52 = vld [vmem:[%s0 + $0x130] sm:$0xff]
  %v53 = vld [vmem:[%s0 + $0x138] sm:$0xff]
  %v54 = vld [vmem:[%s0 + $0x140] sm:$0xff]
  %v55 = vld [vmem:[%s0 + $0x148] sm:$0xff]
  %v56 = vld [vmem:[%s0 + $0x150] sm:$0xff]
  %v57 = vld [vmem:[%s0 + $0x158] sm:$0xff]
  %v58 = vld [vmem:[%s0 + $0x160] sm:$0xff]
  %v59 = vld [vmem:[%s0 + $0x168] sm:$0xff]
  %v60 = vld [vmem:[%s0 + $0x170] sm:$0xff]
  %v61 = vld [vmem:[%s0 + $0x178] sm:$0xff]
  %v62 = vld [vmem:[%s0 + $0x180] sm:$0xff]
  %v63 = vld [vmem:[%s0 + $0x188] sm:$0xff]
  %v64 = vld [vmem:[%s0 + $0x190] sm:$0xff]
  %v65 = vld [vmem:[%s0 + $0x198] sm:$0xff]
  %v66 = vld [vmem:[%s0 + $0x1a0] sm:$0xff]
  %v67 = vld [vmem:[%s0 + $0x1a8] sm:$0xff]
  %v68 = vld [vmem:[%s0 + $0x1b0] sm:$0xff]
  %v69 = vld [vmem:[%s0 + $0x1b8] sm:$0xff]
  %v70 = vld [vmem:[%s0 + $0x1c0] sm:$0xff]
  %v71 = vld [vmem:[%s0 + $0x1c8] sm:$0xff]
  %v72 = vld [vmem:[%s0 + $0x1d0] sm:$0xff]
  %v73 = vld [vmem:[%s0 + $0x1d8] sm:$0xff]
  %v74 = vld [vmem:[%s0 + $0x1e0] sm:$0xff]
  %v75 = vld [vmem:[%s0 + $0x1e8] sm:$0xff]
  %v76 = vld [vmem:[%s0 + $0x1f0] sm:$0xff]
  %v77 = vld [vmem:[%s0 + $0x1f8] sm:$0xff]
  %v78 = vld [vmem:[%s1] sm:$0x1]
  %v80 = vlaneseq
  %v81 = vshrl.u32 %v80, 7
  %v82 = vsub.s32 0, %v81
  %v83 = vrot.slane %v78, %v82
  %v85 = vmul.f32 %v14, %v83
  %v86 = vmul.f32 %v15, %v83
  %v87 = vmul.f32 %v16, %v83
  %v88 = vmul.f32 %v17, %v83
  %v89 = vmul.f32 %v18, %v83
  %v90 = vmul.f32 %v19, %v83
  %v91 = vmul.f32 %v20, %v83
  %v92 = vmul.f32 %v21, %v83
  %v93 = vmul.f32 %v22, %v83
  %v94 = vmul.f32 %v23, %v83
  %v95 = vmul.f32 %v24, %v83
  %v96 = vmul.f32 %v25, %v83
  %v97 = vmul.f32 %v26, %v83
  %v98 = vmul.f32 %v27, %v83
  %v99 = vmul.f32 %v28, %v83
  %v100 = vmul.f32 %v29, %v83
  %v101 = vmul.f32 %v30, %v83
  %v102 = vmul.f32 %v31, %v83
  %v103 = vmul.f32 %v32, %v83
  %v104 = vmul.f32 %v33, %v83
  %v105 = vmul.f32 %v34, %v83
  %v106 = vmul.f32 %v35, %v83
  %v107 = vmul.f32 %v36, %v83
  %v108 = vmul.f32 %v37, %v83
  %v109 = vmul.f32 %v38, %v83
  %v110 = vmul.f32 %v39, %v83
  %v111 = vmul.f32 %v40, %v83
  %v112 = vmul.f32 %v41, %v83
  %v113 = vmul.f32 %v42, %v83
  %v114 = vmul.f32 %v43, %v83
  %v115 = vmul.f32 %v44, %v83
  %v116 = vmul.f32 %v45, %v83
  %v117 = vmul.f32 %v46, %v83
  %v118 = vmul.f32 %v47, %v83
  %v119 = vmul.f32 %v48, %v83
  %v120 = vmul.f32 %v49, %v83
  %v121 = vmul.f32 %v50, %v83
  %v122 = vmul.f32 %v51, %v83
  %v123 = vmul.f32 %v52, %v83
  %v124 = vmul.f32 %v53, %v83
  %v125 = vmul.f32 %v54, %v83
  %v126 = vmul.f32 %v55, %v83
  %v127 = vmul.f32 %v56, %v83
  %v128 = vmul.f32 %v57, %v83
  %v129 = vmul.f32 %v58, %v83
  %v130 = vmul.f32 %v59, %v83
  %v131 = vmul.f32 %v60, %v83
  %v132 = vmul.f32 %v61, %v83
  %v133 = vmul.f32 %v62, %v83
  %v134 = vmul.f32 %v63, %v83
  %v135 = vmul.f32 %v64, %v83
  %v136 = vmul.f32 %v65, %v83
  %v137 = vmul.f32 %v66, %v83
  %v138 = vmul.f32 %v67, %v83
  %v139 = vmul.f32 %v68, %v83
  %v140 = vmul.f32 %v69, %v83
  %v141 = vmul.f32 %v70, %v83
  %v142 = vmul.f32 %v71, %v83
  %v143 = vmul.f32 %v72, %v83
  %v144 = vmul.f32 %v73, %v83
  %v145 = vmul.f32 %v74, %v83
  %v146 = vmul.f32 %v75, %v83
  %v147 = vmul.f32 %v76, %v83
  %v148 = vmul.f32 %v77, %v83
  %v149 = vld [vmem:[%s2] sm:$0x1]
  %v151 = vlaneseq
  %v152 = vshrl.u32 %v151, 7
  %v153 = vsub.s32 0, %v152
  %v154 = vrot.slane %v149, %v153
  %v156 = vadd.f32 %v85, %v154
  %v157 = vadd.f32 %v86, %v154
  %v158 = vadd.f32 %v87, %v154
  %v159 = vadd.f32 %v88, %v154
  %v160 = vadd.f32 %v89, %v154
  %v161 = vadd.f32 %v90, %v154
  %v162 = vadd.f32 %v91, %v154
  %v163 = vadd.f32 %v92, %v154
  %v164 = vadd.f32 %v93, %v154
  %v165 = vadd.f32 %v94, %v154
  %v166 = vadd.f32 %v95, %v154
  %v167 = vadd.f32 %v96, %v154
  %v168 = vadd.f32 %v97, %v154
  %v169 = vadd.f32 %v98, %v154
  %v170 = vadd.f32 %v99, %v154
  %v171 = vadd.f32 %v100, %v154
  %v172 = vadd.f32 %v101, %v154
  %v173 = vadd.f32 %v102, %v154
  %v174 = vadd.f32 %v103, %v154
  %v175 = vadd.f32 %v104, %v154
  %v176 = vadd.f32 %v105, %v154
  %v177 = vadd.f32 %v106, %v154
  %v178 = vadd.f32 %v107, %v154
  %v179 = vadd.f32 %v108, %v154
  %v180 = vadd.f32 %v109, %v154
  %v181 = vadd.f32 %v110, %v154
  %v182 = vadd.f32 %v111, %v154
  %v183 = vadd.f32 %v112, %v154
  %v184 = vadd.f32 %v113, %v154
  %v185 = vadd.f32 %v114, %v154
  %v186 = vadd.f32 %v115, %v154
  %v187 = vadd.f32 %v116, %v154
  %v188 = vadd.f32 %v117, %v154
  %v189 = vadd.f32 %v118, %v154
  %v190 = vadd.f32 %v119, %v154
  %v191 = vadd.f32 %v120, %v154
  %v192 = vadd.f32 %v121, %v154
  %v193 = vadd.f32 %v122, %v154
  %v194 = vadd.f32 %v123, %v154
  %v195 = vadd.f32 %v124, %v154
  %v196 = vadd.f32 %v125, %v154
  %v197 = vadd.f32 %v126, %v154
  %v198 = vadd.f32 %v127, %v154
  %v199 = vadd.f32 %v128, %v154
  %v200 = vadd.f32 %v129, %v154
  %v201 = vadd.f32 %v130, %v154
  %v202 = vadd.f32 %v131, %v154
  %v203 = vadd.f32 %v132, %v154
  %v204 = vadd.f32 %v133, %v154
  %v205 = vadd.f32 %v134, %v154
  %v206 = vadd.f32 %v135, %v154
  %v207 = vadd.f32 %v136, %v154
  %v208 = vadd.f32 %v137, %v154
  %v209 = vadd.f32 %v138, %v154
  %v210 = vadd.f32 %v139, %v154
  %v211 = vadd.f32 %v140, %v154
  %v212 = vadd.f32 %v141, %v154
  %v213 = vadd.f32 %v142, %v154
  %v214 = vadd.f32 %v143, %v154
  %v215 = vadd.f32 %v144, %v154
  %v216 = vadd.f32 %v145, %v154
  %v217 = vadd.f32 %v146, %v154
  %v218 = vadd.f32 %v147, %v154
  %v219 = vadd.f32 %v148, %v154
  %v220 = vmax.f32 %v156, 0.0
  %v221 = vmax.f32 %v157, 0.0
  %v222 = vmax.f32 %v158, 0.0
  %v223 = vmax.f32 %v159, 0.0
  %v224 = vmax.f32 %v160, 0.0
  %v225 = vmax.f32 %v161, 0.0
  %v226 = vmax.f32 %v162, 0.0
  %v227 = vmax.f32 %v163, 0.0
  %v228 = vmax.f32 %v164, 0.0
  %v229 = vmax.f32 %v165, 0.0
  %v230 = vmax.f32 %v166, 0.0
  %v231 = vmax.f32 %v167, 0.0
  %v232 = vmax.f32 %v168, 0.0
  %v233 = vmax.f32 %v169, 0.0
  %v234 = vmax.f32 %v170, 0.0
  %v235 = vmax.f32 %v171, 0.0
  %v236 = vmax.f32 %v172, 0.0
  %v237 = vmax.f32 %v173, 0.0
  %v238 = vmax.f32 %v174, 0.0
  %v239 = vmax.f32 %v175, 0.0
  %v240 = vmax.f32 %v176, 0.0
  %v241 = vmax.f32 %v177, 0.0
  %v242 = vmax.f32 %v178, 0.0
  %v243 = vmax.f32 %v179, 0.0
  %v244 = vmax.f32 %v180, 0.0
  %v245 = vmax.f32 %v181, 0.0
  %v246 = vmax.f32 %v182, 0.0
  %v247 = vmax.f32 %v183, 0.0
  %v248 = vmax.f32 %v184, 0.0
  %v249 = vmax.f32 %v185, 0.0
  %v250 = vmax.f32 %v186, 0.0
  %v251 = vmax.f32 %v187, 0.0
  %v252 = vmax.f32 %v188, 0.0
  %v253 = vmax.f32 %v189, 0.0
  %v254 = vmax.f32 %v190, 0.0
  %v255 = vmax.f32 %v191, 0.0
  %v256 = vmax.f32 %v192, 0.0
  %v257 = vmax.f32 %v193, 0.0
  %v258 = vmax.f32 %v194, 0.0
  %v259 = vmax.f32 %v195, 0.0
  %v260 = vmax.f32 %v196, 0.0
  %v261 = vmax.f32 %v197, 0.0
  %v262 = vmax.f32 %v198, 0.0
  %v263 = vmax.f32 %v199, 0.0
  %v264 = vmax.f32 %v200, 0.0
  %v265 = vmax.f32 %v201, 0.0
  %v266 = vmax.f32 %v202, 0.0
  %v267 = vmax.f32 %v203, 0.0
  %v268 = vmax.f32 %v204, 0.0
  %v269 = vmax.f32 %v205, 0.0
  %v270 = vmax.f32 %v206, 0.0
  %v271 = vmax.f32 %v207, 0.0
  %v272 = vmax.f32 %v208, 0.0
  %v273 = vmax.f32 %v209, 0.0
  %v274 = vmax.f32 %v210, 0.0
  %v275 = vmax.f32 %v211, 0.0
  %v276 = vmax.f32 %v212, 0.0
  %v277 = vmax.f32 %v213, 0.0
  %v278 = vmax.f32 %v214, 0.0
  %v279 = vmax.f32 %v215, 0.0
  %v280 = vmax.f32 %v216, 0.0
  %v281 = vmax.f32 %v217, 0.0
  %v282 = vmax.f32 %v218, 0.0
  %v283 = vmax.f32 %v219, 0.0
  %v284 = vpack.c.bf16 %v221, %v220
  %v285 = vpack.c.bf16 %v223, %v222
  %v286 = vpack.c.bf16 %v225, %v224
  %v287 = vpack.c.bf16 %v227, %v226
  %v288 = vpack.c.bf16 %v229, %v228
  %v289 = vpack.c.bf16 %v231, %v230
  %v290 = vpack.c.bf16 %v233, %v232
  %v291 = vpack.c.bf16 %v235, %v234
  %v292 = vpack.c.bf16 %v237, %v236
  %v293 = vpack.c.bf16 %v239, %v238
  %v294 = vpack.c.bf16 %v241, %v240
  %v295 = vpack.c.bf16 %v243, %v242
  %v296 = vpack.c.bf16 %v245, %v244
  %v297 = vpack.c.bf16 %v247, %v246
  %v298 = vpack.c.bf16 %v249, %v248
  %v299 = vpack.c.bf16 %v251, %v250
  %v300 = vpack.c.bf16 %v253, %v252
  %v301 = vpack.c.bf16 %v255, %v254
  %v302 = vpack.c.bf16 %v257, %v256
  %v303 = vpack.c.bf16 %v259, %v258
  %v304 = vpack.c.bf16 %v261, %v260
  %v305 = vpack.c.bf16 %v263, %v262
  %v306 = vpack.c.bf16 %v265, %v264
  %v307 = vpack.c.bf16 %v267, %v266
  %v308 = vpack.c.bf16 %v269, %v268
  %v309 = vpack.c.bf16 %v271, %v270
  %v310 = vpack.c.bf16 %v273, %v272
  %v311 = vpack.c.bf16 %v275, %v274
  %v312 = vpack.c.bf16 %v277, %v276
  %v313 = vpack.c.bf16 %v279, %v278
  %v314 = vpack.c.bf16 %v281, %v280
  %v315 = vpack.c.bf16 %v283, %v282
  %v348 = vunpack.c.l.b16 %v284
  %v349 = vunpack.c.h.b16 %v284
  %v350 = vunpack.c.l.b16 %v285
  %v351 = vunpack.c.h.b16 %v285
  %v352 = vunpack.c.l.b16 %v286
  %v353 = vunpack.c.h.b16 %v286
  %v354 = vunpack.c.l.b16 %v287
  %v355 = vunpack.c.h.b16 %v287
  %v356 = vunpack.c.l.b16 %v288
  %v357 = vunpack.c.h.b16 %v288
  %v358 = vunpack.c.l.b16 %v289
  %v359 = vunpack.c.h.b16 %v289
  %v360 = vunpack.c.l.b16 %v290
  %v361 = vunpack.c.h.b16 %v290
  %v362 = vunpack.c.l.b16 %v291
  %v363 = vunpack.c.h.b16 %v291
  %v364 = vunpack.c.l.b16 %v292
  %v365 = vunpack.c.h.b16 %v292
  %v366 = vunpack.c.l.b16 %v293
  %v367 = vunpack.c.h.b16 %v293
  %v368 = vunpack.c.l.b16 %v294
  %v369 = vunpack.c.h.b16 %v294
  %v370 = vunpack.c.l.b16 %v295
  %v371 = vunpack.c.h.b16 %v295
  %v372 = vunpack.c.l.b16 %v296
  %v373 = vunpack.c.h.b16 %v296
  %v374 = vunpack.c.l.b16 %v297
  %v375 = vunpack.c.h.b16 %v297
  %v376 = vunpack.c.l.b16 %v298
  %v377 = vunpack.c.h.b16 %v298
  %v378 = vunpack.c.l.b16 %v299
  %v379 = vunpack.c.h.b16 %v299
  %v380 = vunpack.c.l.b16 %v300
  %v381 = vunpack.c.h.b16 %v300
  %v382 = vunpack.c.l.b16 %v301
  %v383 = vunpack.c.h.b16 %v301
  %v384 = vunpack.c.l.b16 %v302
  %v385 = vunpack.c.h.b16 %v302
  %v386 = vunpack.c.l.b16 %v303
  %v387 = vunpack.c.h.b16 %v303
  %v388 = vunpack.c.l.b16 %v304
  %v389 = vunpack.c.h.b16 %v304
  %v390 = vunpack.c.l.b16 %v305
  %v391 = vunpack.c.h.b16 %v305
  %v392 = vunpack.c.l.b16 %v306
  %v393 = vunpack.c.h.b16 %v306
  %v394 = vunpack.c.l.b16 %v307
  %v395 = vunpack.c.h.b16 %v307
  %v396 = vunpack.c.l.b16 %v308
  %v397 = vunpack.c.h.b16 %v308
  %v398 = vunpack.c.l.b16 %v309
  %v399 = vunpack.c.h.b16 %v309
  %v400 = vunpack.c.l.b16 %v310
  %v401 = vunpack.c.h.b16 %v310
  %v402 = vunpack.c.l.b16 %v311
  %v403 = vunpack.c.h.b16 %v311
  %v404 = vunpack.c.l.b16 %v312
  %v405 = vunpack.c.h.b16 %v312
  %v406 = vunpack.c.l.b16 %v313
  %v407 = vunpack.c.h.b16 %v313
  %v408 = vunpack.c.l.b16 %v314
  %v409 = vunpack.c.h.b16 %v314
  %v410 = vunpack.c.l.b16 %v315
  %v411 = vunpack.c.h.b16 %v315
  %v412 = vpack.c.b16 %v348, %v348
  %v413 = vpack.c.b16 %v349, %v349
  %v414 = vpack.c.b16 %v350, %v350
  %v415 = vpack.c.b16 %v351, %v351
  %v416 = vpack.c.b16 %v352, %v352
  %v417 = vpack.c.b16 %v353, %v353
  %v418 = vpack.c.b16 %v354, %v354
  %v419 = vpack.c.b16 %v355, %v355
  %v420 = vpack.c.b16 %v356, %v356
  %v421 = vpack.c.b16 %v357, %v357
  %v422 = vpack.c.b16 %v358, %v358
  %v423 = vpack.c.b16 %v359, %v359
  %v424 = vpack.c.b16 %v360, %v360
  %v425 = vpack.c.b16 %v361, %v361
  %v426 = vpack.c.b16 %v362, %v362
  %v427 = vpack.c.b16 %v363, %v363
  %v428 = vpack.c.b16 %v364, %v364
  %v429 = vpack.c.b16 %v365, %v365
  %v430 = vpack.c.b16 %v366, %v366
  %v431 = vpack.c.b16 %v367, %v367
  %v432 = vpack.c.b16 %v368, %v368
  %v433 = vpack.c.b16 %v369, %v369
  %v434 = vpack.c.b16 %v370, %v370
  %v435 = vpack.c.b16 %v371, %v371
  %v436 = vpack.c.b16 %v372, %v372
  %v437 = vpack.c.b16 %v373, %v373
  %v438 = vpack.c.b16 %v374, %v374
  %v439 = vpack.c.b16 %v375, %v375
  %v440 = vpack.c.b16 %v376, %v376
  %v441 = vpack.c.b16 %v377, %v377
  %v442 = vpack.c.b16 %v378, %v378
  %v443 = vpack.c.b16 %v379, %v379
  %v444 = vpack.c.b16 %v380, %v380
  %v445 = vpack.c.b16 %v381, %v381
  %v446 = vpack.c.b16 %v382, %v382
  %v447 = vpack.c.b16 %v383, %v383
  %v448 = vpack.c.b16 %v384, %v384
  %v449 = vpack.c.b16 %v385, %v385
  %v450 = vpack.c.b16 %v386, %v386
  %v451 = vpack.c.b16 %v387, %v387
  %v452 = vpack.c.b16 %v388, %v388
  %v453 = vpack.c.b16 %v389, %v389
  %v454 = vpack.c.b16 %v390, %v390
  %v455 = vpack.c.b16 %v391, %v391
  %v456 = vpack.c.b16 %v392, %v392
  %v457 = vpack.c.b16 %v393, %v393
  %v458 = vpack.c.b16 %v394, %v394
  %v459 = vpack.c.b16 %v395, %v395
  %v460 = vpack.c.b16 %v396, %v396
  %v461 = vpack.c.b16 %v397, %v397
  %v462 = vpack.c.b16 %v398, %v398
  %v463 = vpack.c.b16 %v399, %v399
  %v464 = vpack.c.b16 %v400, %v400
  %v465 = vpack.c.b16 %v401, %v401
  %v466 = vpack.c.b16 %v402, %v402
  %v467 = vpack.c.b16 %v403, %v403
  %v468 = vpack.c.b16 %v404, %v404
  %v469 = vpack.c.b16 %v405, %v405
  %v470 = vpack.c.b16 %v406, %v406
  %v471 = vpack.c.b16 %v407, %v407
  %v472 = vpack.c.b16 %v408, %v408
  %v473 = vpack.c.b16 %v409, %v409
  %v474 = vpack.c.b16 %v410, %v410
  %v475 = vpack.c.b16 %v411, %v411
  %vm540 = vcmask 125952
  %541 = vst.msk [vmem:[%s3] sm:$0xf] %vm540, %v412
  %542 = vst.msk [vmem:[%s3 + $0x4] sm:$0xf] %vm540, %v413
  %543 = vst.msk [vmem:[%s3 + $0x8] sm:$0xf] %vm540, %v414
  %544 = vst.msk [vmem:[%s3 + $0xc] sm:$0xf] %vm540, %v415
  %545 = vst.msk [vmem:[%s3 + $0x10] sm:$0xf] %vm540, %v416
  %546 = vst.msk [vmem:[%s3 + $0x14] sm:$0xf] %vm540, %v417
  %547 = vst.msk [vmem:[%s3 + $0x18] sm:$0xf] %vm540, %v418
  %548 = vst.msk [vmem:[%s3 + $0x1c] sm:$0xf] %vm540, %v419
  %549 = vst.msk [vmem:[%s3 + $0x20] sm:$0xf] %vm540, %v420
  %550 = vst.msk [vmem:[%s3 + $0x24] sm:$0xf] %vm540, %v421
  %551 = vst.msk [vmem:[%s3 + $0x28] sm:$0xf] %vm540, %v422
  %552 = vst.msk [vmem:[%s3 + $0x2c] sm:$0xf] %vm540, %v423
  %553 = vst.msk [vmem:[%s3 + $0x30] sm:$0xf] %vm540, %v424
  %554 = vst.msk [vmem:[%s3 + $0x34] sm:$0xf] %vm540, %v425
  %555 = vst.msk [vmem:[%s3 + $0x38] sm:$0xf] %vm540, %v426
  %556 = vst.msk [vmem:[%s3 + $0x3c] sm:$0xf] %vm540, %v427
  %557 = vst.msk [vmem:[%s3 + $0x40] sm:$0xf] %vm540, %v428
  %558 = vst.msk [vmem:[%s3 + $0x44] sm:$0xf] %vm540, %v429
  %559 = vst.msk [vmem:[%s3 + $0x48] sm:$0xf] %vm540, %v430
  %560 = vst.msk [vmem:[%s3 + $0x4c] sm:$0xf] %vm540, %v431
  %561 = vst.msk [vmem:[%s3 + $0x50] sm:$0xf] %vm540, %v432
  %562 = vst.msk [vmem:[%s3 + $0x54] sm:$0xf] %vm540, %v433
  %563 = vst.msk [vmem:[%s3 + $0x58] sm:$0xf] %vm540, %v434
  %564 = vst.msk [vmem:[%s3 + $0x5c] sm:$0xf] %vm540, %v435
  %565 = vst.msk [vmem:[%s3 + $0x60] sm:$0xf] %vm540, %v436
  %566 = vst.msk [vmem:[%s3 + $0x64] sm:$0xf] %vm540, %v437
  %567 = vst.msk [vmem:[%s3 + $0x68] sm:$0xf] %vm540, %v438
  %568 = vst.msk [vmem:[%s3 + $0x6c] sm:$0xf] %vm540, %v439
  %569 = vst.msk [vmem:[%s3 + $0x70] sm:$0xf] %vm540, %v440
  %570 = vst.msk [vmem:[%s3 + $0x74] sm:$0xf] %vm540, %v441
  %571 = vst.msk [vmem:[%s3 + $0x78] sm:$0xf] %vm540, %v442
  %572 = vst.msk [vmem:[%s3 + $0x7c] sm:$0xf] %vm540, %v443
  %573 = vst.msk [vmem:[%s3 + $0x80] sm:$0xf] %vm540, %v444
  %574 = vst.msk [vmem:[%s3 + $0x84] sm:$0xf] %vm540, %v445
  %575 = vst.msk [vmem:[%s3 + $0x88] sm:$0xf] %vm540, %v446
  %576 = vst.msk [vmem:[%s3 + $0x8c] sm:$0xf] %vm540, %v447
  %577 = vst.msk [vmem:[%s3 + $0x90] sm:$0xf] %vm540, %v448
  %578 = vst.msk [vmem:[%s3 + $0x94] sm:$0xf] %vm540, %v449
  %579 = vst.msk [vmem:[%s3 + $0x98] sm:$0xf] %vm540, %v450
  %580 = vst.msk [vmem:[%s3 + $0x9c] sm:$0xf] %vm540, %v451
  %581 = vst.msk [vmem:[%s3 + $0xa0] sm:$0xf] %vm540, %v452
  %582 = vst.msk [vmem:[%s3 + $0xa4] sm:$0xf] %vm540, %v453
  %583 = vst.msk [vmem:[%s3 + $0xa8] sm:$0xf] %vm540, %v454
  %584 = vst.msk [vmem:[%s3 + $0xac] sm:$0xf] %vm540, %v455
  %585 = vst.msk [vmem:[%s3 + $0xb0] sm:$0xf] %vm540, %v456
  %586 = vst.msk [vmem:[%s3 + $0xb4] sm:$0xf] %vm540, %v457
  %587 = vst.msk [vmem:[%s3 + $0xb8] sm:$0xf] %vm540, %v458
  %588 = vst.msk [vmem:[%s3 + $0xbc] sm:$0xf] %vm540, %v459
  %589 = vst.msk [vmem:[%s3 + $0xc0] sm:$0xf] %vm540, %v460
  %590 = vst.msk [vmem:[%s3 + $0xc4] sm:$0xf] %vm540, %v461
  %591 = vst.msk [vmem:[%s3 + $0xc8] sm:$0xf] %vm540, %v462
  %592 = vst.msk [vmem:[%s3 + $0xcc] sm:$0xf] %vm540, %v463
  %593 = vst.msk [vmem:[%s3 + $0xd0] sm:$0xf] %vm540, %v464
  %594 = vst.msk [vmem:[%s3 + $0xd4] sm:$0xf] %vm540, %v465
  %595 = vst.msk [vmem:[%s3 + $0xd8] sm:$0xf] %vm540, %v466
  %596 = vst.msk [vmem:[%s3 + $0xdc] sm:$0xf] %vm540, %v467
  %597 = vst.msk [vmem:[%s3 + $0xe0] sm:$0xf] %vm540, %v468
  %598 = vst.msk [vmem:[%s3 + $0xe4] sm:$0xf] %vm540, %v469
  %599 = vst.msk [vmem:[%s3 + $0xe8] sm:$0xf] %vm540, %v470
  %600 = vst.msk [vmem:[%s3 + $0xec] sm:$0xf] %vm540, %v471
  %601 = vst.msk [vmem:[%s3 + $0xf0] sm:$0xf] %vm540, %v472
  %602 = vst.msk [vmem:[%s3 + $0xf4] sm:$0xf] %vm540, %v473
  %603 = vst.msk [vmem:[%s3 + $0xf8] sm:$0xf] %vm540, %v474
  %604 = vst.msk [vmem:[%s3 + $0xfc] sm:$0xf] %vm540, %v475
  // Predicated region
  $region14: #{generator_forward.12} parent=0 // pred_check
    _
  $region15: #{generator_forward.12} parent=0 // pred_check_branch
    %606 = sbr.rel (0) target = $region17
  $region16: #{generator_forward.12} parent=0 // pred_region
    _
  $region17: #{generator_forward.12} parent=0 // pred_fallthru
    _
  // Predicated region
  $region18: #{generator_forward.12} parent=0 // pred_check
    _
  $region19: #{generator_forward.12} parent=0 // pred_check_branch
    %608 = sbr.rel (0) target = $region21
  $region20: #{generator_forward.12} parent=0 // pred_region
    _
  $region21: #{generator_forward.12} parent=0 // pred_fallthru
    _

// kernel: generator_forward.13
$region0: #{generator_forward.13}
  #allocation0 [shape = 'u32[]', space=smem, size = 0x4, offset = 0x4, fixed_abs, tag = 'smem constant byte address 0x4 - core index']
  #allocation1 [shape = 'u32[144,128]{1,0:T(1,128)}', space=vmem, size = 0x12000, scoped, tag = 'internal scratch']
  %s0 = inlined_call_operand.vmem [shape: bf16[4,512,64], index: 0, kind: input, shape index: {}]
  %s1 = inlined_call_operand.vmem [shape: bf16[4,64,128], index: 1, kind: input, shape index: {}]
  %s2 = inlined_call_operand.vmem [shape: f32[1,128], index: 2, kind: input, shape index: {}]
  %s3 = inlined_call_operand.vmem [shape: f32[4,512,128], index: 3, kind: output, shape index: {}]
  %s4 = sld [smem:[#allocation0]]
  $region45: #{generator_forward.13} parent=0
    _
  %s6 = ssub.s32 1, %s4
  %s7 = scalar_select 0, %s6, %s4
  loop: start=0, step=1, limit=6
  $region2: #{generator_forward.13} parent=0 // loop_pre_header
    _
  $region3: #{generator_forward.13} parent=0 // loop_header
    %s9 = sphi 0, %s13
    %p10 = scmp.ge.s32.totalorder %s9, 6
    %s16 = sphi 0, %s28
    %s17 = sphi 0, %s24
    %s18 = sphi 0, %s16
    %s19 = sphi 0, %s17
    %s20 = sphi 0, %s18
    %s21 = sphi 0, %s19
    %s33 = sphi 0, %s35
    %s36 = sphi 0, %s33
    %s37 = sphi 0, %s36
    %s53 = sphi 0, %s37
    %s59 = sphi 0, %s61
    %s62 = sphi 0, %s59
    %s63 = sphi 0, %s62
    %s79 = sphi 0, %s63
    %s83 = sphi 0, %s83
    %s85 = sphi 0, %s83
    %s86 = sphi 0, %s85
    %s100 = sphi 0, %s86
    %s108 = sphi 0, %s110
    %s111 = sphi 0, %s108
    %s112 = sphi 0, %s111
    %s128 = sphi 0, %s112
  $region4: #{generator_forward.13} parent=0 // loop_header_branch
    %12 = sbr.rel (%p10) target = $region8
  $region5: #{generator_forward.13} parent=0 // loop_body
    %s14 = ssub.s32 %s9, 1
    %s15 = ssub.s32 %s9, 2
    %s22 = sadd.s32 1, %s17
    %p23 = scmp.ge.s32.totalorder %s22, 1
    %s24 = scalar_select %p23, 0, %s22
    %s25 = sadd.s32 1, %s16
    %s26 = scalar_select %p23, %s25, %s16
    %p27 = scmp.ge.s32.totalorder %s26, 4
    %s28 = scalar_select %p27, 0, %s26
    %s29 = ssub.s32 %s16, %s28
    %s30 = ssub.s32 %s17, %s24
    %s31 = sor.u32 %s29, %s30
    %p32 = scmp.eq.s32.totalorder %s31, 0
    %s34 = sadd.s32 %s33, 1
    %s35 = scalar_select %p32, %s33, %s34
    %p38 = pneg %p32
    %p39 = scmp.eq.s32.totalorder %s9, 3
    %p40 = por %p38, %p39
    %p41 = scmp.ne.s32.totalorder %s33, %s36
    %p42 = scmp.eq.s32.totalorder %s9, 0
    %p43 = por %p41, %p42
    %p44 = scmp.ne.s32.totalorder %s33, %s36
    %p45 = scmp.eq.s32.totalorder %s14, 3
    %p46 = por %p44, %p45
    %p47 = scmp.ne.s32.totalorder %s36, %s37
    %p48 = scmp.eq.s32.totalorder %s14, 0
    %p49 = por %p47, %p48
    %p50 = scmp.ne.s32.totalorder %s36, %s37
    %p51 = scmp.eq.s32.totalorder %s15, 3
    %p52 = por %p50, %p51
    %p54 = scmp.ne.s32.totalorder %s37, %s53
    %p55 = scmp.eq.s32.totalorder %s15, 0
    %p56 = por %p54, %p55
    %s57 = ssub.s32 %s16, %s28
    %p58 = scmp.eq.s32.totalorder %s57, 0
    %s60 = sadd.s32 %s59, 1
    %s61 = scalar_select %p58, %s59, %s60
    %p64 = pneg %p58
    %p65 = scmp.eq.s32.totalorder %s9, 3
    %p66 = por %p64, %p65
    %p67 = scmp.ne.s32.totalorder %s59, %s62
    %p68 = scmp.eq.s32.totalorder %s9, 0
    %p69 = por %p67, %p68
    %p70 = scmp.ne.s32.totalorder %s59, %s62
    %p71 = scmp.eq.s32.totalorder %s14, 3
    %p72 = por %p70, %p71
    %p73 = scmp.ne.s32.totalorder %s62, %s63
    %p74 = scmp.eq.s32.totalorder %s14, 0
    %p75 = por %p73, %p74
    %p76 = scmp.ne.s32.totalorder %s62, %s63
    %p77 = scmp.eq.s32.totalorder %s15, 3
    %p78 = por %p76, %p77
    %p80 = scmp.ne.s32.totalorder %s63, %s79
    %p81 = scmp.eq.s32.totalorder %s15, 0
    %p82 = por %p80, %p81
    %s84 = sadd.s32 %s83, 1
    %p87 = scmp.eq.s32.totalorder %s9, 3
    %p88 = scmp.ne.s32.totalorder %s83, %s85
    %p89 = scmp.eq.s32.totalorder %s9, 0
    %p90 = por %p88, %p89
    %p91 = scmp.ne.s32.totalorder %s83, %s85
    %p92 = scmp.eq.s32.totalorder %s14, 3
    %p93 = por %p91, %p92
    %p94 = scmp.ne.s32.totalorder %s85, %s86
    %p95 = scmp.eq.s32.totalorder %s14, 0
    %p96 = por %p94, %p95
    %p97 = scmp.ne.s32.totalorder %s85, %s86
    %p98 = scmp.eq.s32.totalorder %s15, 3
    %p99 = por %p97, %p98
    %p101 = scmp.ne.s32.totalorder %s86, %s100
    %p102 = scmp.eq.s32.totalorder %s15, 0
    %p103 = por %p101, %p102
    %s104 = ssub.s32 %s16, %s28
    %s105 = ssub.s32 %s17, %s24
    %s106 = sor.u32 %s104, %s105
    %p107 = scmp.eq.s32.totalorder %s106, 0
    %s109 = sadd.s32 %s108, 1
    %s110 = scalar_select %p107, %s108, %s109
    %p113 = pneg %p107
    %p114 = scmp.eq.s32.totalorder %s9, 3
    %p115 = por %p113, %p114
    %p116 = scmp.ne.s32.totalorder %s108, %s111
    %p117 = scmp.eq.s32.totalorder %s9, 0
    %p118 = por %p116, %p117
    %p119 = scmp.ne.s32.totalorder %s108, %s111
    %p120 = scmp.eq.s32.totalorder %s14, 3
    %p121 = por %p119, %p120
    %p122 = scmp.ne.s32.totalorder %s111, %s112
    %p123 = scmp.eq.s32.totalorder %s14, 0
    %p124 = por %p122, %p123
    %p125 = scmp.ne.s32.totalorder %s111, %s112
    %p126 = scmp.eq.s32.totalorder %s15, 3
    %p127 = por %p125, %p126
    %p129 = scmp.ne.s32.totalorder %s112, %s128
    %p130 = scmp.eq.s32.totalorder %s15, 0
    %p131 = por %p129, %p130
    %p132 = scmp.le.s32.totalorder 1, %s9
    %p133 = scmp.lt.s32.totalorder %s9, 5
    %p134 = pnand %p132, %p133
    %p135 = pneg %p134
    // Predicated region
    $region9: #{generator_forward.13} parent=5 // pred_check
      _
    $region10: #{generator_forward.13} parent=5 // pred_check_branch
      %137 = sbr.rel (%p134) target = $region12
    $region11: #{generator_forward.13} parent=5 // pred_region
      %s138 = ssub.s32 %s9, 1
      // Predicated region
      $region13: #{generator_forward.13} parent=11 // pred_check
        %p139 = pneg %p96
      $region14: #{generator_forward.13} parent=11 // pred_check_branch
        %141 = sbr.rel (%p139) target = $region16
      $region15: #{generator_forward.13} parent=11 // pred_region
        _
      $region16: #{generator_forward.13} parent=11 // pred_fallthru
        _
    $region12: #{generator_forward.13} parent=5 // pred_fallthru
      _
    %p142 = scmp.lt.s32.totalorder %s9, 4
    // Predicated region
    $region17: #{generator_forward.13} parent=5 // pred_check
      %p143 = pneg %p142
    $region18: #{generator_forward.13} parent=5 // pred_check_branch
      %145 = sbr.rel (%p143) target = $region20
    $region19: #{generator_forward.13} parent=5 // pred_region
      // Predicated region
      $region21: #{generator_forward.13} parent=19 // pred_check
        %p146 = pneg %p43
      $region22: #{generator_forward.13} parent=19 // pred_check_branch
        %148 = sbr.rel (%p146) target = $region24
      $region23: #{generator_forward.13} parent=19 // pred_region
        %s149 = smul.u32 64, %s17
        %p150 = scmp.lt.s32.totalorder %s16, 3
        %s151 = scalar_select %p150, %s16, 3
        %p152 = scmp.lt.s32.totalorder %s149, 63
        %s153 = scalar_select %p152, %s149, 63
        %s154 = smul.addr %s151, 64
        %s155 = sadd.s32 %s153, %s154
        %s156 = smul.addr %s155, 4
        %s157 = scalar_lea.vmem %s0, %s156
        %s158 = smul.u32 64, %s17
      $region24: #{generator_forward.13} parent=19 // pred_fallthru
        _
      // Predicated region
      $region25: #{generator_forward.13} parent=19 // pred_check
        %p159 = pneg %p69
      $region26: #{generator_forward.13} parent=19 // pred_check_branch
        %161 = sbr.rel (%p159) target = $region28
      $region27: #{generator_forward.13} parent=19 // pred_region
        %p162 = scmp.lt.s32.totalorder %s16, 3
        %s163 = scalar_select %p162, %s16, 3
        %s164 = smul.addr %s163, 8
        %s165 = smul.addr %s164, 4
        %s166 = scalar_lea.vmem %s1, %s165
      $region28: #{generator_forward.13} parent=19 // pred_fallthru
        _
    $region20: #{generator_forward.13} parent=5 // pred_fallthru
      _
    %p167 = scmp.le.s32.totalorder 1, %s9
    %p168 = scmp.lt.s32.totalorder %s9, 5
    %p169 = pnand %p167, %p168
    %p170 = pneg %p169
    // Predicated region
    $region29: #{generator_forward.13} parent=5 // pred_check
      _
    $region30: #{generator_forward.13} parent=5 // pred_check_branch
      %172 = sbr.rel (%p169) target = $region32
    $region31: #{generator_forward.13} parent=5 // pred_region
      %s173 = ssub.s32 %s9, 1
      %s174 = smul.u32 64, %s19
      %p175 = scmp.lt.s32.totalorder %s18, 3
      %s176 = scalar_select %p175, %s18, 3
      %p177 = scmp.lt.s32.totalorder %s174, 63
      %s178 = scalar_select %p177, %s174, 63
      %s179 = smul.addr %s176, 64
      %s180 = sadd.s32 %s178, %s179
      %s181 = smul.addr %s180, 4
      %s182 = scalar_lea.vmem %s0, %s181
      %p183 = pneg %p49
      %p184 = pneg %p46
      %p185 = scmp.lt.s32.totalorder %s18, 3
      %s186 = scalar_select %p185, %s18, 3
      %s187 = smul.addr %s186, 8
      %s188 = smul.addr %s187, 4
      %s189 = scalar_lea.vmem %s1, %s188
      %p190 = pneg %p75
      %p191 = pneg %p72
      %p192 = pneg %p96
      %p193 = pneg %p93
      %p194 = pneg %p124
      %p195 = pneg %p121
      %s196 = smul.u32 64, %s19
      %p197 = scmp.lt.s32.totalorder %s18, 3
      %s198 = scalar_select %p197, %s18, 3
      %p199 = scmp.lt.s32.totalorder %s196, 63
      %s200 = scalar_select %p199, %s196, 63
      %s201 = smul.addr %s198, 64
      %s202 = sadd.s32 %s200, %s201
      %s203 = smul.addr %s202, 8
      %s204 = scalar_lea.vmem %s3, %s203
      %s205 = smul.u32 64, %s19
      %p206 = scmp.lt.s32.totalorder %s18, 3
      %s207 = scalar_select %p206, %s18, 3
      %p208 = scmp.lt.s32.totalorder %s205, 63
      %s209 = scalar_select %p208, %s205, 63
      %s210 = smul.addr %s207, 64
      %s211 = sadd.s32 %s209, %s210
      %s212 = smul.addr %s211, 4
      %s213 = scalar_lea.vmem %s0, %s212
      %s214 = smul.u32 64, %s19
      %p215 = scmp.lt.s32.totalorder %s18, 3
      %s216 = scalar_select %p215, %s18, 3
      %s217 = smul.addr %s216, 8
      %s218 = smul.addr %s217, 4
      %s219 = scalar_lea.vmem %s1, %s218
      %s220 = smul.u32 64, %s19
      %p221 = scmp.lt.s32.totalorder %s18, 3
      %s222 = scalar_select %p221, %s18, 3
      %p223 = scmp.lt.s32.totalorder %s220, 63
      %s224 = scalar_select %p223, %s220, 63
      %s225 = smul.addr %s222, 64
      %s226 = sadd.s32 %s224, %s225
      %s227 = smul.addr %s226, 8
      %s228 = scalar_lea.vmem %s3, %s227
      %s229 = smul.u32 64, %s19
      %v231 = vld [vmem:[%s213] sm:$0xf]
      %v232 = vld [vmem:[%s213 + $0x4] sm:$0xf]
      %v233 = vld [vmem:[%s213 + $0x8] sm:$0xf]
      %v234 = vld [vmem:[%s213 + $0xc] sm:$0xf]
      %v235 = vld [vmem:[%s213 + $0x10] sm:$0xf]
      %v236 = vld [vmem:[%s213 + $0x14] sm:$0xf]
      %v237 = vld [vmem:[%s213 + $0x18] sm:$0xf]
      %v238 = vld [vmem:[%s213 + $0x1c] sm:$0xf]
      %v239 = vld [vmem:[%s213 + $0x20] sm:$0xf]
      %v240 = vld [vmem:[%s213 + $0x24] sm:$0xf]
      %v241 = vld [vmem:[%s213 + $0x28] sm:$0xf]
      %v242 = vld [vmem:[%s213 + $0x2c] sm:$0xf]
      %v243 = vld [vmem:[%s213 + $0x30] sm:$0xf]
      %v244 = vld [vmem:[%s213 + $0x34] sm:$0xf]
      %v245 = vld [vmem:[%s213 + $0x38] sm:$0xf]
      %v246 = vld [vmem:[%s213 + $0x3c] sm:$0xf]
      %v247 = vld [vmem:[%s213 + $0x40] sm:$0xf]
      %v248 = vld [vmem:[%s213 + $0x44] sm:$0xf]
      %v249 = vld [vmem:[%s213 + $0x48] sm:$0xf]
      %v250 = vld [vmem:[%s213 + $0x4c] sm:$0xf]
      %v251 = vld [vmem:[%s213 + $0x50] sm:$0xf]
      %v252 = vld [vmem:[%s213 + $0x54] sm:$0xf]
      %v253 = vld [vmem:[%s213 + $0x58] sm:$0xf]
      %v254 = vld [vmem:[%s213 + $0x5c] sm:$0xf]
      %v255 = vld [vmem:[%s213 + $0x60] sm:$0xf]
      %v256 = vld [vmem:[%s213 + $0x64] sm:$0xf]
      %v257 = vld [vmem:[%s213 + $0x68] sm:$0xf]
      %v258 = vld [vmem:[%s213 + $0x6c] sm:$0xf]
      %v259 = vld [vmem:[%s213 + $0x70] sm:$0xf]
      %v260 = vld [vmem:[%s213 + $0x74] sm:$0xf]
      %v261 = vld [vmem:[%s213 + $0x78] sm:$0xf]
      %v262 = vld [vmem:[%s213 + $0x7c] sm:$0xf]
      %v263 = vld [vmem:[%s213 + $0x80] sm:$0xf]
      %v264 = vld [vmem:[%s213 + $0x84] sm:$0xf]
      %v265 = vld [vmem:[%s213 + $0x88] sm:$0xf]
      %v266 = vld [vmem:[%s213 + $0x8c] sm:$0xf]
      %v267 = vld [vmem:[%s213 + $0x90] sm:$0xf]
      %v268 = vld [vmem:[%s213 + $0x94] sm:$0xf]
      %v269 = vld [vmem:[%s213 + $0x98] sm:$0xf]
      %v270 = vld [vmem:[%s213 + $0x9c] sm:$0xf]
      %v271 = vld [vmem:[%s213 + $0xa0] sm:$0xf]
      %v272 = vld [vmem:[%s213 + $0xa4] sm:$0xf]
      %v273 = vld [vmem:[%s213 + $0xa8] sm:$0xf]
      %v274 = vld [vmem:[%s213 + $0xac] sm:$0xf]
      %v275 = vld [vmem:[%s213 + $0xb0] sm:$0xf]
      %v276 = vld [vmem:[%s213 + $0xb4] sm:$0xf]
      %v277 = vld [vmem:[%s213 + $0xb8] sm:$0xf]
      %v278 = vld [vmem:[%s213 + $0xbc] sm:$0xf]
      %v279 = vld [vmem:[%s213 + $0xc0] sm:$0xf]
      %v280 = vld [vmem:[%s213 + $0xc4] sm:$0xf]
      %v281 = vld [vmem:[%s213 + $0xc8] sm:$0xf]
      %v282 = vld [vmem:[%s213 + $0xcc] sm:$0xf]
      %v283 = vld [vmem:[%s213 + $0xd0] sm:$0xf]
      %v284 = vld [vmem:[%s213 + $0xd4] sm:$0xf]
      %v285 = vld [vmem:[%s213 + $0xd8] sm:$0xf]
      %v286 = vld [vmem:[%s213 + $0xdc] sm:$0xf]
      %v287 = vld [vmem:[%s213 + $0xe0] sm:$0xf]
      %v288 = vld [vmem:[%s213 + $0xe4] sm:$0xf]
      %v289 = vld [vmem:[%s213 + $0xe8] sm:$0xf]
      %v290 = vld [vmem:[%s213 + $0xec] sm:$0xf]
      %v291 = vld [vmem:[%s213 + $0xf0] sm:$0xf]
      %v292 = vld [vmem:[%s213 + $0xf4] sm:$0xf]
      %v293 = vld [vmem:[%s213 + $0xf8] sm:$0xf]
      %v294 = vld [vmem:[%s213 + $0xfc] sm:$0xf]
      %v295 = vld [vmem:[%s219] sm:$0xf]
      %v296 = vld [vmem:[%s219 + $0x4] sm:$0xf]
      %v297 = vld [vmem:[%s219 + $0x8] sm:$0xf]
      %v298 = vld [vmem:[%s219 + $0xc] sm:$0xf]
      %v299 = vld [vmem:[%s219 + $0x10] sm:$0xf]
      %v300 = vld [vmem:[%s219 + $0x14] sm:$0xf]
      %v301 = vld [vmem:[%s219 + $0x18] sm:$0xf]
      %v302 = vld [vmem:[%s219 + $0x1c] sm:$0xf]
      %v303 = vld [vmem:[%s2] sm:$0x1]
      %v305 = vlaneseq
      %v306 = vshrl.u32 %v305, 7
      %v307 = vsub.s32 0, %v306
      %v308 = vrot.slane %v303, %v307
      %v374 = vunpack.c.l.b16 %v231
      %v375 = vunpack.c.l.b16 %v232
      %v376 = vunpack.c.l.b16 %v233
      %v377 = vunpack.c.l.b16 %v234
      %v378 = vunpack.c.l.b16 %v235
      %v379 = vunpack.c.l.b16 %v236
      %v380 = vunpack.c.l.b16 %v237
      %v381 = vunpack.c.l.b16 %v238
      %v382 = vunpack.c.l.b16 %v239
      %v383 = vunpack.c.l.b16 %v240
      %v384 = vunpack.c.l.b16 %v241
      %v385 = vunpack.c.l.b16 %v242
      %v386 = vunpack.c.l.b16 %v243
      %v387 = vunpack.c.l.b16 %v244
      %v388 = vunpack.c.l.b16 %v245
      %v389 = vunpack.c.l.b16 %v246
      %v390 = vunpack.c.l.b16 %v247
      %v391 = vunpack.c.l.b16 %v248
      %v392 = vunpack.c.l.b16 %v249
      %v393 = vunpack.c.l.b16 %v250
      %v394 = vunpack.c.l.b16 %v251
      %v395 = vunpack.c.l.b16 %v252
      %v396 = vunpack.c.l.b16 %v253
      %v397 = vunpack.c.l.b16 %v254
      %v398 = vunpack.c.l.b16 %v255
      %v399 = vunpack.c.l.b16 %v256
      %v400 = vunpack.c.l.b16 %v257
      %v401 = vunpack.c.l.b16 %v258
      %v402 = vunpack.c.l.b16 %v259
      %v403 = vunpack.c.l.b16 %v260
      %v404 = vunpack.c.l.b16 %v261
      %v405 = vunpack.c.l.b16 %v262
      %v406 = vunpack.c.l.b16 %v263
      %v407 = vunpack.c.l.b16 %v264
      %v408 = vunpack.c.l.b16 %v265
      %v409 = vunpack.c.l.b16 %v266
      %v410 = vunpack.c.l.b16 %v267
      %v411 = vunpack.c.l.b16 %v268
      %v412 = vunpack.c.l.b16 %v269
      %v413 = vunpack.c.l.b16 %v270
      %v414 = vunpack.c.l.b16 %v271
      %v415 = vunpack.c.l.b16 %v272
      %v416 = vunpack.c.l.b16 %v273
      %v417 = vunpack.c.l.b16 %v274
      %v418 = vunpack.c.l.b16 %v275
      %v419 = vunpack.c.l.b16 %v276
      %v420 = vunpack.c.l.b16 %v277
      %v421 = vunpack.c.l.b16 %v278
      %v422 = vunpack.c.l.b16 %v279
      %v423 = vunpack.c.l.b16 %v280
      %v424 = vunpack.c.l.b16 %v281
      %v425 = vunpack.c.l.b16 %v282
      %v426 = vunpack.c.l.b16 %v283
      %v427 = vunpack.c.l.b16 %v284
      %v428 = vunpack.c.l.b16 %v285
      %v429 = vunpack.c.l.b16 %v286
      %v430 = vunpack.c.l.b16 %v287
      %v431 = vunpack.c.l.b16 %v288
      %v432 = vunpack.c.l.b16 %v289
      %v433 = vunpack.c.l.b16 %v290
      %v434 = vunpack.c.l.b16 %v291
      %v435 = vunpack.c.l.b16 %v292
      %v436 = vunpack.c.l.b16 %v293
      %v437 = vunpack.c.l.b16 %v294
      %v438 = vpack.c.b16 %v375, %v374
      %v439 = vpack.c.b16 %v377, %v376
      %v440 = vpack.c.b16 %v379, %v378
      %v441 = vpack.c.b16 %v381, %v380
      %v442 = vpack.c.b16 %v383, %v382
      %v443 = vpack.c.b16 %v385, %v384
      %v444 = vpack.c.b16 %v387, %v386
      %v445 = vpack.c.b16 %v389, %v388
      %v446 = vpack.c.b16 %v391, %v390
      %v447 = vpack.c.b16 %v393, %v392
      %v448 = vpack.c.b16 %v395, %v394
      %v449 = vpack.c.b16 %v397, %v396
      %v450 = vpack.c.b16 %v399, %v398
      %v451 = vpack.c.b16 %v401, %v400
      %v452 = vpack.c.b16 %v403, %v402
      %v453 = vpack.c.b16 %v405, %v404
      %v454 = vpack.c.b16 %v407, %v406
      %v455 = vpack.c.b16 %v409, %v408
      %v456 = vpack.c.b16 %v411, %v410
      %v457 = vpack.c.b16 %v413, %v412
      %v458 = vpack.c.b16 %v415, %v414
      %v459 = vpack.c.b16 %v417, %v416
      %v460 = vpack.c.b16 %v419, %v418
      %v461 = vpack.c.b16 %v421, %v420
      %v462 = vpack.c.b16 %v423, %v422
      %v463 = vpack.c.b16 %v425, %v424
      %v464 = vpack.c.b16 %v427, %v426
      %v465 = vpack.c.b16 %v429, %v428
      %v466 = vpack.c.b16 %v431, %v430
      %v467 = vpack.c.b16 %v433, %v432
      %v468 = vpack.c.b16 %v435, %v434
      %v469 = vpack.c.b16 %v437, %v436
      %v478 = vunpack.c.l.b16 %v295
      %v479 = vunpack.c.l.b16 %v296
      %v480 = vunpack.c.l.b16 %v297
      %v481 = vunpack.c.l.b16 %v298
      %v482 = vunpack.c.l.b16 %v299
      %v483 = vunpack.c.l.b16 %v300
      %v484 = vunpack.c.l.b16 %v301
      %v485 = vunpack.c.l.b16 %v302
      %v486 = vpack.c.b16 %v479, %v478
      %v487 = vpack.c.b16 %v481, %v480
      %v488 = vpack.c.b16 %v483, %v482
      %v489 = vpack.c.b16 %v485, %v484
      %vm494 = vcmask 523264
      %v496 = vsel %vm494, %v438, 0
      %v499 = vsel %vm494, %v439, 0
      %v502 = vsel %vm494, %v440, 0
      %v505 = vsel %vm494, %v441, 0
      %v508 = vsel %vm494, %v442, 0
      %v511 = vsel %vm494, %v443, 0
      %v514 = vsel %vm494, %v444, 0
      %v517 = vsel %vm494, %v445, 0
      %v520 = vsel %vm494, %v446, 0
      %v523 = vsel %vm494, %v447, 0
      %v526 = vsel %vm494, %v448, 0
      %v529 = vsel %vm494, %v449, 0
      %v532 = vsel %vm494, %v450, 0
      %v535 = vsel %vm494, %v451, 0
      %v538 = vsel %vm494, %v452, 0
      %v541 = vsel %vm494, %v453, 0
      %v544 = vsel %vm494, %v454, 0
      %v547 = vsel %vm494, %v455, 0
      %v550 = vsel %vm494, %v456, 0
      %v553 = vsel %vm494, %v457, 0
      %v556 = vsel %vm494, %v458, 0
      %v559 = vsel %vm494, %v459, 0
      %v562 = vsel %vm494, %v460, 0
      %v565 = vsel %vm494, %v461, 0
      %v568 = vsel %vm494, %v462, 0
      %v571 = vsel %vm494, %v463, 0
      %v574 = vsel %vm494, %v464, 0
      %v577 = vsel %vm494, %v465, 0
      %v580 = vsel %vm494, %v466, 0
      %v583 = vsel %vm494, %v467, 0
      %v586 = vsel %vm494, %v468, 0
      %v589 = vsel %vm494, %v469, 0
      %591 = vmatprep.subr.bf16.mxu0 0
      %592 = vmatpush1.bf16.msra.mxu0 0
      %593 = vmatprep.subr.bf16.mxu0 0
      %594 = vmatpush1.bf16.msra.mxu0 0
      %595 = vmatprep.subr.bf16.mxu0 0
      %596 = vmatpush1.bf16.msra.mxu0 0
      %597 = vmatprep.subr.bf16.mxu0 0
      %598 = vmatpush1.bf16.msra.mxu0 0
      %599 = vmatprep.subr.bf16.mxu0 0
      %600 = vmatpush1.bf16.msra.mxu0 %v489
      %601 = vmatprep.subr.bf16.mxu0 0
      %602 = vmatpush1.bf16.msra.mxu0 %v488
      %603 = vmatprep.subr.bf16.mxu0 0
      %604 = vmatpush1.bf16.msra.mxu0 %v487
      %605 = vmatprep.subr.bf16.mxu0 0
      %606 = vmatpush1.bf16.msra.mxu0 %v486
      %607 = vmatprep.subr.bf16.mxu0 0
      %608 = vmatpush2.bf16.msra.mxu0 0
      %609 = vmatprep.subr.bf16.mxu0 0
      %610 = vmatpush2.bf16.msra.mxu0 0
      %611 = vmatprep.subr.bf16.mxu0 0
      %612 = vmatpush2.bf16.msra.mxu0 0
      %613 = vmatprep.subr.bf16.mxu0 0
      %614 = vmatpush2.bf16.msra.mxu0 0
      %615 = vmatprep.subr.bf16.mxu0 0
      %616 = vmatpush2.bf16.msra.mxu0 0
      %617 = vmatprep.subr.bf16.mxu0 0
      %618 = vmatpush2.bf16.msra.mxu0 0
      %619 = vmatprep.subr.bf16.mxu0 0
      %620 = vmatpush2.bf16.msra.mxu0 0
      %621 = vmatprep.subr.bf16.mxu0 0
      %622 = vmatpush2.bf16.msra.mxu0 0
      %623 = vmatprep.mubr.bf16.mxu0 0
      %624 = vmatmul.mubr.bf16.gmra.mxu0 %v496
      %v625 = vpop.f32.mrf.mxu0
      %v626 = vadd.f32 %v308, %v625
      %v627 = vpop.f32.mrf.mxu0
      %v628 = vpop.f32.mrf.mxu0
      %v629 = vadd.f32 %v308, %v628
      %v630 = vpop.f32.mrf.mxu0
      %631 = vmatprep.mubr.bf16.mxu0 0
      %632 = vmatmul.mubr.bf16.gmra.mxu0 %v499
      %v633 = vpop.f32.mrf.mxu0
      %v634 = vadd.f32 %v308, %v633
      %v635 = vpop.f32.mrf.mxu0
      %v636 = vpop.f32.mrf.mxu0
      %v637 = vadd.f32 %v308, %v636
      %v638 = vpop.f32.mrf.mxu0
      %639 = vmatprep.mubr.bf16.mxu0 0
      %640 = vmatmul.mubr.bf16.gmra.mxu0 %v502
      %v641 = vpop.f32.mrf.mxu0
      %v642 = vadd.f32 %v308, %v641
      %v643 = vpop.f32.mrf.mxu0
      %v644 = vpop.f32.mrf.mxu0
      %v645 = vadd.f32 %v308, %v644
      %v646 = vpop.f32.mrf.mxu0
      %647 = vmatprep.mubr.bf16.mxu0 0
      %648 = vmatmul.mubr.bf16.gmra.mxu0 %v505
      %v649 = vpop.f32.mrf.mxu0
      %v650 = vadd.f32 %v308, %v649
      %v651 = vpop.f32.mrf.mxu0
      %v652 = vpop.f32.mrf.mxu0
      %v653 = vadd.f32 %v308, %v652
      %v654 = vpop.f32.mrf.mxu0
      %655 = vmatprep.mubr.bf16.mxu0 0
      %656 = vmatmul.mubr.bf16.gmra.mxu0 %v508
      %v657 = vpop.f32.mrf.mxu0
      %v658 = vadd.f32 %v308, %v657
      %v659 = vpop.f32.mrf.mxu0
      %v660 = vpop.f32.mrf.mxu0
      %v661 = vadd.f32 %v308, %v660
      %v662 = vpop.f32.mrf.mxu0
      %663 = vmatprep.mubr.bf16.mxu0 0
      %664 = vmatmul.mubr.bf16.gmra.mxu0 %v511
      %v665 = vpop.f32.mrf.mxu0
      %v666 = vadd.f32 %v308, %v665
      %v667 = vpop.f32.mrf.mxu0
      %v668 = vpop.f32.mrf.mxu0
      %v669 = vadd.f32 %v308, %v668
      %v670 = vpop.f32.mrf.mxu0
      %671 = vmatprep.mubr.bf16.mxu0 0
      %672 = vmatmul.mubr.bf16.gmra.mxu0 %v514
      %v673 = vpop.f32.mrf.mxu0
      %v674 = vadd.f32 %v308, %v673
      %v675 = vpop.f32.mrf.mxu0
      %v676 = vpop.f32.mrf.mxu0
      %v677 = vadd.f32 %v308, %v676
      %v678 = vpop.f32.mrf.mxu0
      %679 = vmatprep.mubr.bf16.mxu0 0
      %680 = vmatmul.mubr.bf16.gmra.mxu0 %v517
      %v681 = vpop.f32.mrf.mxu0
      %v682 = vadd.f32 %v308, %v681
      %v683 = vpop.f32.mrf.mxu0
      %v684 = vpop.f32.mrf.mxu0
      %v685 = vadd.f32 %v308, %v684
      %v686 = vpop.f32.mrf.mxu0
      %687 = vmatprep.mubr.bf16.mxu0 0
      %688 = vmatmul.mubr.bf16.gmra.mxu0 %v520
      %v689 = vpop.f32.mrf.mxu0
      %v690 = vadd.f32 %v308, %v689
      %v691 = vpop.f32.mrf.mxu0
      %v692 = vpop.f32.mrf.mxu0
      %v693 = vadd.f32 %v308, %v692
      %v694 = vpop.f32.mrf.mxu0
      %695 = vmatprep.mubr.bf16.mxu0 0
      %696 = vmatmul.mubr.bf16.gmra.mxu0 %v523
      %v697 = vpop.f32.mrf.mxu0
      %v698 = vadd.f32 %v308, %v697
      %v699 = vpop.f32.mrf.mxu0
      %v700 = vpop.f32.mrf.mxu0
      %v701 = vadd.f32 %v308, %v700
      %v702 = vpop.f32.mrf.mxu0
      %703 = vmatprep.mubr.bf16.mxu0 0
      %704 = vmatmul.mubr.bf16.gmra.mxu0 %v526
      %v705 = vpop.f32.mrf.mxu0
      %v706 = vadd.f32 %v308, %v705
      %v707 = vpop.f32.mrf.mxu0
      %v708 = vpop.f32.mrf.mxu0
      %v709 = vadd.f32 %v308, %v708
      %v710 = vpop.f32.mrf.mxu0
      %711 = vmatprep.mubr.bf16.mxu0 0
      %712 = vmatmul.mubr.bf16.gmra.mxu0 %v529
      %v713 = vpop.f32.mrf.mxu0
      %v714 = vadd.f32 %v308, %v713
      %v715 = vpop.f32.mrf.mxu0
      %v716 = vpop.f32.mrf.mxu0
      %v717 = vadd.f32 %v308, %v716
      %v718 = vpop.f32.mrf.mxu0
      %719 = vmatprep.mubr.bf16.mxu0 0
      %720 = vmatmul.mubr.bf16.gmra.mxu0 %v532
      %v721 = vpop.f32.mrf.mxu0
      %v722 = vadd.f32 %v308, %v721
      %v723 = vpop.f32.mrf.mxu0
      %v724 = vpop.f32.mrf.mxu0
      %v725 = vadd.f32 %v308, %v724
      %v726 = vpop.f32.mrf.mxu0
      %727 = vmatprep.mubr.bf16.mxu0 0
      %728 = vmatmul.mubr.bf16.gmra.mxu0 %v535
      %v729 = vpop.f32.mrf.mxu0
      %v730 = vadd.f32 %v308, %v729
      %v731 = vpop.f32.mrf.mxu0
      %v732 = vpop.f32.mrf.mxu0
      %v733 = vadd.f32 %v308, %v732
      %v734 = vpop.f32.mrf.mxu0
      %735 = vmatprep.mubr.bf16.mxu0 0
      %736 = vmatmul.mubr.bf16.gmra.mxu0 %v538
      %v737 = vpop.f32.mrf.mxu0
      %v738 = vadd.f32 %v308, %v737
      %v739 = vpop.f32.mrf.mxu0
      %v740 = vpop.f32.mrf.mxu0
      %v741 = vadd.f32 %v308, %v740
      %v742 = vpop.f32.mrf.mxu0
      %743 = vmatprep.mubr.bf16.mxu0 0
      %744 = vmatmul.mubr.bf16.gmra.mxu0 %v541
      %v745 = vpop.f32.mrf.mxu0
      %v746 = vadd.f32 %v308, %v745
      %v747 = vpop.f32.mrf.mxu0
      %v748 = vpop.f32.mrf.mxu0
      %v749 = vadd.f32 %v308, %v748
      %v750 = vpop.f32.mrf.mxu0
      %751 = vmatprep.mubr.bf16.mxu0 0
      %752 = vmatmul.mubr.bf16.gmra.mxu0 %v544
      %v753 = vpop.f32.mrf.mxu0
      %v754 = vadd.f32 %v308, %v753
      %v755 = vpop.f32.mrf.mxu0
      %v756 = vpop.f32.mrf.mxu0
      %v757 = vadd.f32 %v308, %v756
      %v758 = vpop.f32.mrf.mxu0
      %759 = vmatprep.mubr.bf16.mxu0 0
      %760 = vmatmul.mubr.bf16.gmra.mxu0 %v547
      %v761 = vpop.f32.mrf.mxu0
      %v762 = vadd.f32 %v308, %v761
      %v763 = vpop.f32.mrf.mxu0
      %v764 = vpop.f32.mrf.mxu0
      %v765 = vadd.f32 %v308, %v764
      %v766 = vpop.f32.mrf.mxu0
      %767 = vmatprep.mubr.bf16.mxu0 0
      %768 = vmatmul.mubr.bf16.gmra.mxu0 %v550
      %v769 = vpop.f32.mrf.mxu0
      %v770 = vadd.f32 %v308, %v769
      %v771 = vpop.f32.mrf.mxu0
      %v772 = vpop.f32.mrf.mxu0
      %v773 = vadd.f32 %v308, %v772
      %v774 = vpop.f32.mrf.mxu0
      %775 = vmatprep.mubr.bf16.mxu0 0
      %776 = vmatmul.mubr.bf16.gmra.mxu0 %v553
      %v777 = vpop.f32.mrf.mxu0
      %v778 = vadd.f32 %v308, %v777
      %v779 = vpop.f32.mrf.mxu0
      %v780 = vpop.f32.mrf.mxu0
      %v781 = vadd.f32 %v308, %v780
      %v782 = vpop.f32.mrf.mxu0
      %783 = vmatprep.mubr.bf16.mxu0 0
      %784 = vmatmul.mubr.bf16.gmra.mxu0 %v556
      %v785 = vpop.f32.mrf.mxu0
      %v786 = vadd.f32 %v308, %v785
      %v787 = vpop.f32.mrf.mxu0
      %v788 = vpop.f32.mrf.mxu0
      %v789 = vadd.f32 %v308, %v788
      %v790 = vpop.f32.mrf.mxu0
      %791 = vmatprep.mubr.bf16.mxu0 0
      %792 = vmatmul.mubr.bf16.gmra.mxu0 %v559
      %v793 = vpop.f32.mrf.mxu0
      %v794 = vadd.f32 %v308, %v793
      %v795 = vpop.f32.mrf.mxu0
      %v796 = vpop.f32.mrf.mxu0
      %v797 = vadd.f32 %v308, %v796
      %v798 = vpop.f32.mrf.mxu0
      %799 = vmatprep.mubr.bf16.mxu0 0
      %800 = vmatmul.mubr.bf16.gmra.mxu0 %v562
      %v801 = vpop.f32.mrf.mxu0
      %v802 = vadd.f32 %v308, %v801
      %v803 = vpop.f32.mrf.mxu0
      %v804 = vpop.f32.mrf.mxu0
      %v805 = vadd.f32 %v308, %v804
      %v806 = vpop.f32.mrf.mxu0
      %807 = vmatprep.mubr.bf16.mxu0 0
      %808 = vmatmul.mubr.bf16.gmra.mxu0 %v565
      %v809 = vpop.f32.mrf.mxu0
      %v810 = vadd.f32 %v308, %v809
      %v811 = vpop.f32.mrf.mxu0
      %v812 = vpop.f32.mrf.mxu0
      %v813 = vadd.f32 %v308, %v812
      %v814 = vpop.f32.mrf.mxu0
      %815 = vmatprep.mubr.bf16.mxu0 0
      %816 = vmatmul.mubr.bf16.gmra.mxu0 %v568
      %v817 = vpop.f32.mrf.mxu0
      %v818 = vadd.f32 %v308, %v817
      %v819 = vpop.f32.mrf.mxu0
      %v820 = vpop.f32.mrf.mxu0
      %v821 = vadd.f32 %v308, %v820
      %v822 = vpop.f32.mrf.mxu0
      %823 = vmatprep.mubr.bf16.mxu0 0
      %824 = vmatmul.mubr.bf16.gmra.mxu0 %v571
      %v825 = vpop.f32.mrf.mxu0
      %v826 = vadd.f32 %v308, %v825
      %v827 = vpop.f32.mrf.mxu0
      %v828 = vpop.f32.mrf.mxu0
      %v829 = vadd.f32 %v308, %v828
      %v830 = vpop.f32.mrf.mxu0
      %831 = vmatprep.mubr.bf16.mxu0 0
      %832 = vmatmul.mubr.bf16.gmra.mxu0 %v574
      %v833 = vpop.f32.mrf.mxu0
      %v834 = vadd.f32 %v308, %v833
      %v835 = vpop.f32.mrf.mxu0
      %v836 = vpop.f32.mrf.mxu0
      %v837 = vadd.f32 %v308, %v836
      %v838 = vpop.f32.mrf.mxu0
      %839 = vmatprep.mubr.bf16.mxu0 0
      %840 = vmatmul.mubr.bf16.gmra.mxu0 %v577
      %v841 = vpop.f32.mrf.mxu0
      %v842 = vadd.f32 %v308, %v841
      %v843 = vpop.f32.mrf.mxu0
      %v844 = vpop.f32.mrf.mxu0
      %v845 = vadd.f32 %v308, %v844
      %v846 = vpop.f32.mrf.mxu0
      %847 = vmatprep.mubr.bf16.mxu0 0
      %848 = vmatmul.mubr.bf16.gmra.mxu0 %v580
      %v849 = vpop.f32.mrf.mxu0
      %v850 = vadd.f32 %v308, %v849
      %v851 = vpop.f32.mrf.mxu0
      %v852 = vpop.f32.mrf.mxu0
      %v853 = vadd.f32 %v308, %v852
      %v854 = vpop.f32.mrf.mxu0
      %855 = vmatprep.mubr.bf16.mxu0 0
      %856 = vmatmul.mubr.bf16.gmra.mxu0 %v583
      %v857 = vpop.f32.mrf.mxu0
      %v858 = vadd.f32 %v308, %v857
      %v859 = vpop.f32.mrf.mxu0
      %v860 = vpop.f32.mrf.mxu0
      %v861 = vadd.f32 %v308, %v860
      %v862 = vpop.f32.mrf.mxu0
      %863 = vmatprep.mubr.bf16.mxu0 0
      %864 = vmatmul.mubr.bf16.gmra.mxu0 %v586
      %v865 = vpop.f32.mrf.mxu0
      %v866 = vadd.f32 %v308, %v865
      %v867 = vpop.f32.mrf.mxu0
      %v868 = vpop.f32.mrf.mxu0
      %v869 = vadd.f32 %v308, %v868
      %v870 = vpop.f32.mrf.mxu0
      %871 = vmatprep.mubr.bf16.mxu0 0
      %872 = vmatmul.mubr.bf16.gmra.mxu0 %v589
      %v873 = vpop.f32.mrf.mxu0
      %v874 = vadd.f32 %v308, %v873
      %v875 = vpop.f32.mrf.mxu0
      %v876 = vpop.f32.mrf.mxu0
      %v877 = vadd.f32 %v308, %v876
      %v878 = vpop.f32.mrf.mxu0
      %879 = vdwg.mxu0
      %v880 = vtanh.pop %v626
      %v881 = vtanh.pop %v629
      %v882 = vtanh.pop %v634
      %v883 = vtanh.pop %v637
      %v884 = vtanh.pop %v642
      %v885 = vtanh.pop %v645
      %v886 = vtanh.pop %v650
      %v887 = vtanh.pop %v653
      %v888 = vtanh.pop %v658
      %v889 = vtanh.pop %v661
      %v890 = vtanh.pop %v666
      %v891 = vtanh.pop %v669
      %v892 = vtanh.pop %v674
      %v893 = vtanh.pop %v677
      %v894 = vtanh.pop %v682
      %v895 = vtanh.pop %v685
      %v896 = vtanh.pop %v690
      %v897 = vtanh.pop %v693
      %v898 = vtanh.pop %v698
      %v899 = vtanh.pop %v701
      %v900 = vtanh.pop %v706
      %v901 = vtanh.pop %v709
      %v902 = vtanh.pop %v714
      %v903 = vtanh.pop %v717
      %v904 = vtanh.pop %v722
      %v905 = vtanh.pop %v725
      %v906 = vtanh.pop %v730
      %v907 = vtanh.pop %v733
      %v908 = vtanh.pop %v738
      %v909 = vtanh.pop %v741
      %v910 = vtanh.pop %v746
      %v911 = vtanh.pop %v749
      %v912 = vtanh.pop %v754
      %v913 = vtanh.pop %v757
      %v914 = vtanh.pop %v762
      %v915 = vtanh.pop %v765
      %v916 = vtanh.pop %v770
      %v917 = vtanh.pop %v773
      %v918 = vtanh.pop %v778
      %v919 = vtanh.pop %v781
      %v920 = vtanh.pop %v786
      %v921 = vtanh.pop %v789
      %v922 = vtanh.pop %v794
      %v923 = vtanh.pop %v797
      %v924 = vtanh.pop %v802
      %v925 = vtanh.pop %v805
      %v926 = vtanh.pop %v810
      %v927 = vtanh.pop %v813
      %v928 = vtanh.pop %v818
      %v929 = vtanh.pop %v821
      %v930 = vtanh.pop %v826
      %v931 = vtanh.pop %v829
      %v932 = vtanh.pop %v834
      %v933 = vtanh.pop %v837
      %v934 = vtanh.pop %v842
      %v935 = vtanh.pop %v845
      %v936 = vtanh.pop %v850
      %v937 = vtanh.pop %v853
      %v938 = vtanh.pop %v858
      %v939 = vtanh.pop %v861
      %v940 = vtanh.pop %v866
      %v941 = vtanh.pop %v869
      %v942 = vtanh.pop %v874
      %v943 = vtanh.pop %v877
      %v944 = vmul.f32 %v880, 0.5
      %v945 = vmul.f32 %v881, 0.5
      %v946 = vmul.f32 %v882, 0.5
      %v947 = vmul.f32 %v883, 0.5
      %v948 = vmul.f32 %v884, 0.5
      %v949 = vmul.f32 %v885, 0.5
      %v950 = vmul.f32 %v886, 0.5
      %v951 = vmul.f32 %v887, 0.5
      %v952 = vmul.f32 %v888, 0.5
      %v953 = vmul.f32 %v889, 0.5
      %v954 = vmul.f32 %v890, 0.5
      %v955 = vmul.f32 %v891, 0.5
      %v956 = vmul.f32 %v892, 0.5
      %v957 = vmul.f32 %v893, 0.5
      %v958 = vmul.f32 %v894, 0.5
      %v959 = vmul.f32 %v895, 0.5
      %v960 = vmul.f32 %v896, 0.5
      %v961 = vmul.f32 %v897, 0.5
      %v962 = vmul.f32 %v898, 0.5
      %v963 = vmul.f32 %v899, 0.5
      %v964 = vmul.f32 %v900, 0.5
      %v965 = vmul.f32 %v901, 0.5
      %v966 = vmul.f32 %v902, 0.5
      %v967 = vmul.f32 %v903, 0.5
      %v968 = vmul.f32 %v904, 0.5
      %v969 = vmul.f32 %v905, 0.5
      %v970 = vmul.f32 %v906, 0.5
      %v971 = vmul.f32 %v907, 0.5
      %v972 = vmul.f32 %v908, 0.5
      %v973 = vmul.f32 %v909, 0.5
      %v974 = vmul.f32 %v910, 0.5
      %v975 = vmul.f32 %v911, 0.5
      %v976 = vmul.f32 %v912, 0.5
      %v977 = vmul.f32 %v913, 0.5
      %v978 = vmul.f32 %v914, 0.5
      %v979 = vmul.f32 %v915, 0.5
      %v980 = vmul.f32 %v916, 0.5
      %v981 = vmul.f32 %v917, 0.5
      %v982 = vmul.f32 %v918, 0.5
      %v983 = vmul.f32 %v919, 0.5
      %v984 = vmul.f32 %v920, 0.5
      %v985 = vmul.f32 %v921, 0.5
      %v986 = vmul.f32 %v922, 0.5
      %v987 = vmul.f32 %v923, 0.5
      %v988 = vmul.f32 %v924, 0.5
      %v989 = vmul.f32 %v925, 0.5
      %v990 = vmul.f32 %v926, 0.5
      %v991 = vmul.f32 %v927, 0.5
      %v992 = vmul.f32 %v928, 0.5
      %v993 = vmul.f32 %v929, 0.5
      %v994 = vmul.f32 %v930, 0.5
      %v995 = vmul.f32 %v931, 0.5
      %v996 = vmul.f32 %v932, 0.5
      %v997 = vmul.f32 %v933, 0.5
      %v998 = vmul.f32 %v934, 0.5
      %v999 = vmul.f32 %v935, 0.5
      %v1000 = vmul.f32 %v936, 0.5
      %v1001 = vmul.f32 %v937, 0.5
      %v1002 = vmul.f32 %v938, 0.5
      %v1003 = vmul.f32 %v939, 0.5
      %v1004 = vmul.f32 %v940, 0.5
      %v1005 = vmul.f32 %v941, 0.5
      %v1006 = vmul.f32 %v942, 0.5
      %v1007 = vmul.f32 %v943, 0.5
      %v1008 = vadd.f32 %v944, 0.5
      %v1009 = vadd.f32 %v945, 0.5
      %v1010 = vadd.f32 %v946, 0.5
      %v1011 = vadd.f32 %v947, 0.5
      %v1012 = vadd.f32 %v948, 0.5
      %v1013 = vadd.f32 %v949, 0.5
      %v1014 = vadd.f32 %v950, 0.5
      %v1015 = vadd.f32 %v951, 0.5
      %v1016 = vadd.f32 %v952, 0.5
      %v1017 = vadd.f32 %v953, 0.5
      %v1018 = vadd.f32 %v954, 0.5
      %v1019 = vadd.f32 %v955, 0.5
      %v1020 = vadd.f32 %v956, 0.5
      %v1021 = vadd.f32 %v957, 0.5
      %v1022 = vadd.f32 %v958, 0.5
      %v1023 = vadd.f32 %v959, 0.5
      %v1024 = vadd.f32 %v960, 0.5
      %v1025 = vadd.f32 %v961, 0.5
      %v1026 = vadd.f32 %v962, 0.5
      %v1027 = vadd.f32 %v963, 0.5
      %v1028 = vadd.f32 %v964, 0.5
      %v1029 = vadd.f32 %v965, 0.5
      %v1030 = vadd.f32 %v966, 0.5
      %v1031 = vadd.f32 %v967, 0.5
      %v1032 = vadd.f32 %v968, 0.5
      %v1033 = vadd.f32 %v969, 0.5
      %v1034 = vadd.f32 %v970, 0.5
      %v1035 = vadd.f32 %v971, 0.5
      %v1036 = vadd.f32 %v972, 0.5
      %v1037 = vadd.f32 %v973, 0.5
      %v1038 = vadd.f32 %v974, 0.5
      %v1039 = vadd.f32 %v975, 0.5
      %v1040 = vadd.f32 %v976, 0.5
      %v1041 = vadd.f32 %v977, 0.5
      %v1042 = vadd.f32 %v978, 0.5
      %v1043 = vadd.f32 %v979, 0.5
      %v1044 = vadd.f32 %v980, 0.5
      %v1045 = vadd.f32 %v981, 0.5
      %v1046 = vadd.f32 %v982, 0.5
      %v1047 = vadd.f32 %v983, 0.5
      %v1048 = vadd.f32 %v984, 0.5
      %v1049 = vadd.f32 %v985, 0.5
      %v1050 = vadd.f32 %v986, 0.5
      %v1051 = vadd.f32 %v987, 0.5
      %v1052 = vadd.f32 %v988, 0.5
      %v1053 = vadd.f32 %v989, 0.5
      %v1054 = vadd.f32 %v990, 0.5
      %v1055 = vadd.f32 %v991, 0.5
      %v1056 = vadd.f32 %v992, 0.5
      %v1057 = vadd.f32 %v993, 0.5
      %v1058 = vadd.f32 %v994, 0.5
      %v1059 = vadd.f32 %v995, 0.5
      %v1060 = vadd.f32 %v996, 0.5
      %v1061 = vadd.f32 %v997, 0.5
      %v1062 = vadd.f32 %v998, 0.5
      %v1063 = vadd.f32 %v999, 0.5
      %v1064 = vadd.f32 %v1000, 0.5
      %v1065 = vadd.f32 %v1001, 0.5
      %v1066 = vadd.f32 %v1002, 0.5
      %v1067 = vadd.f32 %v1003, 0.5
      %v1068 = vadd.f32 %v1004, 0.5
      %v1069 = vadd.f32 %v1005, 0.5
      %v1070 = vadd.f32 %v1006, 0.5
      %v1071 = vadd.f32 %v1007, 0.5
      %1072 = vst [vmem:[%s228] sm:$0xff] %v1008
      %1073 = vst [vmem:[%s228 + $0x8] sm:$0xff] %v1009
      %1074 = vst [vmem:[%s228 + $0x10] sm:$0xff] %v1010
      %1075 = vst [vmem:[%s228 + $0x18] sm:$0xff] %v1011
      %1076 = vst [vmem:[%s228 + $0x20] sm:$0xff] %v1012
      %1077 = vst [vmem:[%s228 + $0x28] sm:$0xff] %v1013
      %1078 = vst [vmem:[%s228 + $0x30] sm:$0xff] %v1014
      %1079 = vst [vmem:[%s228 + $0x38] sm:$0xff] %v1015
      %1080 = vst [vmem:[%s228 + $0x40] sm:$0xff] %v1016
      %1081 = vst [vmem:[%s228 + $0x48] sm:$0xff] %v1017
      %1082 = vst [vmem:[%s228 + $0x50] sm:$0xff] %v1018
      %1083 = vst [vmem:[%s228 + $0x58] sm:$0xff] %v1019
      %1084 = vst [vmem:[%s228 + $0x60] sm:$0xff] %v1020
      %1085 = vst [vmem:[%s228 + $0x68] sm:$0xff] %v1021
      %1086 = vst [vmem:[%s228 + $0x70] sm:$0xff] %v1022
      %1087 = vst [vmem:[%s228 + $0x78] sm:$0xff] %v1023
      %1088 = vst [vmem:[%s228 + $0x80] sm:$0xff] %v1024
      %1089 = vst [vmem:[%s228 + $0x88] sm:$0xff] %v1025
      %1090 = vst [vmem:[%s228 + $0x90] sm:$0xff] %v1026
      %1091 = vst [vmem:[%s228 + $0x98] sm:$0xff] %v1027
      %1092 = vst [vmem:[%s228 + $0xa0] sm:$0xff] %v1028
      %1093 = vst [vmem:[%s228 + $0xa8] sm:$0xff] %v1029
      %1094 = vst [vmem:[%s228 + $0xb0] sm:$0xff] %v1030
      %1095 = vst [vmem:[%s228 + $0xb8] sm:$0xff] %v1031
      %1096 = vst [vmem:[%s228 + $0xc0] sm:$0xff] %v1032
      %1097 = vst [vmem:[%s228 + $0xc8] sm:$0xff] %v1033
      %1098 = vst [vmem:[%s228 + $0xd0] sm:$0xff] %v1034
      %1099 = vst [vmem:[%s228 + $0xd8] sm:$0xff] %v1035
      %1100 = vst [vmem:[%s228 + $0xe0] sm:$0xff] %v1036
      %1101 = vst [vmem:[%s228 + $0xe8] sm:$0xff] %v1037
      %1102 = vst [vmem:[%s228 + $0xf0] sm:$0xff] %v1038
      %1103 = vst [vmem:[%s228 + $0xf8] sm:$0xff] %v1039
      %1104 = vst [vmem:[%s228 + $0x100] sm:$0xff] %v1040
      %1105 = vst [vmem:[%s228 + $0x108] sm:$0xff] %v1041
      %1106 = vst [vmem:[%s228 + $0x110] sm:$0xff] %v1042
      %1107 = vst [vmem:[%s228 + $0x118] sm:$0xff] %v1043
      %1108 = vst [vmem:[%s228 + $0x120] sm:$0xff] %v1044
      %1109 = vst [vmem:[%s228 + $0x128] sm:$0xff] %v1045
      %1110 = vst [vmem:[%s228 + $0x130] sm:$0xff] %v1046
      %1111 = vst [vmem:[%s228 + $0x138] sm:$0xff] %v1047
      %1112 = vst [vmem:[%s228 + $0x140] sm:$0xff] %v1048
      %1113 = vst [vmem:[%s228 + $0x148] sm:$0xff] %v1049
      %1114 = vst [vmem:[%s228 + $0x150] sm:$0xff] %v1050
      %1115 = vst [vmem:[%s228 + $0x158] sm:$0xff] %v1051
      %1116 = vst [vmem:[%s228 + $0x160] sm:$0xff] %v1052
      %1117 = vst [vmem:[%s228 + $0x168] sm:$0xff] %v1053
      %1118 = vst [vmem:[%s228 + $0x170] sm:$0xff] %v1054
      %1119 = vst [vmem:[%s228 + $0x178] sm:$0xff] %v1055
      %1120 = vst [vmem:[%s228 + $0x180] sm:$0xff] %v1056
      %1121 = vst [vmem:[%s228 + $0x188] sm:$0xff] %v1057
      %1122 = vst [vmem:[%s228 + $0x190] sm:$0xff] %v1058
      %1123 = vst [vmem:[%s228 + $0x198] sm:$0xff] %v1059
      %1124 = vst [vmem:[%s228 + $0x1a0] sm:$0xff] %v1060
      %1125 = vst [vmem:[%s228 + $0x1a8] sm:$0xff] %v1061
      %1126 = vst [vmem:[%s228 + $0x1b0] sm:$0xff] %v1062
      %1127 = vst [vmem:[%s228 + $0x1b8] sm:$0xff] %v1063
      %1128 = vst [vmem:[%s228 + $0x1c0] sm:$0xff] %v1064
      %1129 = vst [vmem:[%s228 + $0x1c8] sm:$0xff] %v1065
      %1130 = vst [vmem:[%s228 + $0x1d0] sm:$0xff] %v1066
      %1131 = vst [vmem:[%s228 + $0x1d8] sm:$0xff] %v1067
      %1132 = vst [vmem:[%s228 + $0x1e0] sm:$0xff] %v1068
      %1133 = vst [vmem:[%s228 + $0x1e8] sm:$0xff] %v1069
      %1134 = vst [vmem:[%s228 + $0x1f0] sm:$0xff] %v1070
      %1135 = vst [vmem:[%s228 + $0x1f8] sm:$0xff] %v1071
      %s1136 = smul.u32 64, %s19
      %p1137 = scmp.lt.s32.totalorder %s18, 3
      %s1138 = scalar_select %p1137, %s18, 3
      %p1139 = scmp.lt.s32.totalorder %s1136, 63
      %s1140 = scalar_select %p1139, %s1136, 63
      %s1141 = smul.addr %s1138, 64
      %s1142 = sadd.s32 %s1140, %s1141
      %s1143 = smul.addr %s1142, 8
      %s1144 = scalar_lea.vmem %s3, %s1143
      // Predicated region
      $region33: #{generator_forward.13} parent=31 // pred_check
        %p1145 = pneg %p121
      $region34: #{generator_forward.13} parent=31 // pred_check_branch
        %1147 = sbr.rel (%p1145) target = $region36
      $region35: #{generator_forward.13} parent=31 // pred_region
        %s1148 = smul.u32 64, %s19
      $region36: #{generator_forward.13} parent=31 // pred_fallthru
        _
    $region32: #{generator_forward.13} parent=5 // pred_fallthru
      _
    %p1149 = scmp.le.s32.totalorder 2, %s9
    // Predicated region
    $region37: #{generator_forward.13} parent=5 // pred_check
      %p1150 = pneg %p1149
    $region38: #{generator_forward.13} parent=5 // pred_check_branch
      %1152 = sbr.rel (%p1150) target = $region40
    $region39: #{generator_forward.13} parent=5 // pred_region
      %s1153 = ssub.s32 %s9, 2
      // Predicated region
      $region41: #{generator_forward.13} parent=39 // pred_check
        %p1154 = pneg %p127
      $region42: #{generator_forward.13} parent=39 // pred_check_branch
        %1156 = sbr.rel (%p1154) target = $region44
      $region43: #{generator_forward.13} parent=39 // pred_region
        %s1157 = smul.u32 64, %s21
        %p1158 = scmp.lt.s32.totalorder %s20, 3
        %s1159 = scalar_select %p1158, %s20, 3
        %p1160 = scmp.lt.s32.totalorder %s1157, 63
        %s1161 = scalar_select %p1160, %s1157, 63
        %s1162 = smul.addr %s1159, 64
        %s1163 = sadd.s32 %s1161, %s1162
        %s1164 = smul.addr %s1163, 8
        %s1165 = scalar_lea.vmem %s3, %s1164
      $region44: #{generator_forward.13} parent=39 // pred_fallthru
        _
    $region40: #{generator_forward.13} parent=5 // pred_fallthru
      _
  $region6: #{generator_forward.13} parent=0 // loop_footer
    %s13 = sadd.s32 1, %s9
  $region7: #{generator_forward.13} parent=0 // loop_footer_branch
    %8 = sbr.rel target = $region3
  $region8: #{generator_forward.13} parent=0 // loop_exit
    _

</llo_original>
